<compile_context>
chip_gen: v7x
topology: tpu7x:2x2x1
jax: 0.10.0
libtpu: 0.0.40
codegen_flags: <defaults>
</compile_context>

<pallas_src>
import functools
import math

import jax
import jax.numpy as jnp
from jax.experimental import pallas as pl
from jax.experimental.pallas import tpu as pltpu


# ----------------------------------------------------------------------------
# In-kernel helpers (bf16 MXU matmul, f32 accumulate / epilogue)
# ----------------------------------------------------------------------------
def _mm(a, w_ref):
    return jnp.dot(a.astype(jnp.bfloat16), w_ref[...],
                   preferred_element_type=jnp.float32)


def _lin(a, w_ref, b_ref, relu=True):
    y = _mm(a, w_ref) + b_ref[...]
    return jnp.maximum(y, 0.0) if relu else y


def _lin_f32(a, w_ref, b_ref):
    """First-layer linear kept entirely in f32 (tiny K, precision-safe)."""
    y = jnp.dot(a, w_ref[...], preferred_element_type=jnp.float32) + b_ref[...]
    return jnp.maximum(y, 0.0)


# ----------------------------------------------------------------------------
# Fused instance-segmentation kernel, Bt frustums per grid step.
# ----------------------------------------------------------------------------
def _seg_kernel(feat_ref, oh_ref,
                w1a, b1a, w1b, b1b, w1c, b1c,              # convs1: Cin->32->32->64
                w2a, b2a, w2b, b2b,                        # convs2: 64->64->128
                w3pf, w3g, w3oh, b3a, w3b, b3b, w3c, b3c,  # convs3 (1st layer split)
                wh, bh,                                    # fused head1|head2: 64->4
                logits_ref, mean_ref):
    bt, n, cin = feat_ref.shape
    f = feat_ref[...]                              # (Bt, N, Cin) f32
    x = f.reshape(bt * n, cin)                     # (Bt*N, Cin)

    x = _lin_f32(x, w1a, b1a)                      # f32 first layer (raw coords)
    x = _lin(x, w1b, b1b)
    point_feat = _lin(x, w1c, b1c)                 # (Bt*N, 64)

    y = _lin(point_feat, w2a, b2a)
    y = _lin(y, w2b, b2b)                          # (Bt*N, 128)
    g = jnp.max(y.reshape(bt, n, y.shape[-1]), axis=1)      # (Bt, 128) per-frustum

    oh = oh_ref[...][:, 0, :]                      # (Bt, nc)

    # First convs3 layer as split matmuls: per-point part + per-frustum row
    # (global feature + one-hot + bias) broadcast over the N points.
    row = _mm(g, w3g) + _mm(oh, w3oh) + b3a[...]   # (Bt, 128)
    z = _mm(point_feat, w3pf).reshape(bt, n, -1) + row[:, None, :]
    z = jnp.maximum(z, 0.0).reshape(bt * n, -1)    # (Bt*N, 128)
    z = _lin(z, w3b, b3b)
    z = _lin(z, w3c, b3c)                          # (Bt*N, 64)

    logits = _lin(z, wh, bh, relu=False)           # (Bt*N, 4) == [head1 | head2]
    logits3 = logits.reshape(bt, n, 4)
    # Lane-dense output: (Bt, 4, N) — last dim = N avoids masked vst partial
    # stores and deletes the downstream XLA transpose.
    logits_ref[...] = jnp.transpose(logits3, (0, 2, 1))

    # Masked-mean epilogue of F.logits_mask: mean of foreground coords under
    # the argmax of (head1 + head2) / 2.
    avg = (logits3[..., 0:2] + logits3[..., 2:4]) * 0.5           # (Bt, N, 2)
    mask = (avg[..., 1:2] > avg[..., 0:1]).astype(jnp.float32)    # (Bt, N, 1)
    coords = f[..., 0:3]                                          # (Bt, N, 3)
    cnt = jnp.maximum(jnp.sum(mask, axis=1), 1.0)                 # (Bt, 1)
    s = jnp.sum(coords * mask, axis=1)                            # (Bt, 3)
    mean_ref[...] = (s / cnt)[:, None, :]                         # (Bt, 1, 3)


# ----------------------------------------------------------------------------
# Fused center-regression + box-estimation kernel (one launch for both nets).
# ----------------------------------------------------------------------------
def _reg_trunk(coords3, oh, p, i, n_conv, n_fc):
    """Point-MLP convs + per-frustum max-pool + fcs + fused twin heads."""
    bt, m, c0 = coords3.shape
    a = coords3.reshape(bt * m, c0)
    a = _lin_f32(a, p[i], p[i + 1]); i += 2            # first conv in f32
    for _ in range(n_conv - 1):
        a = _lin(a, p[i], p[i + 1]); i += 2
    g = jnp.max(a.reshape(bt, m, a.shape[-1]), axis=1)  # (Bt, C)
    # First fc layer: split matmuls for [global_feat | one_hot].
    h = jnp.maximum(_mm(g, p[i]) + _mm(oh, p[i + 1]) + p[i + 2][...], 0.0)
    i += 3
    for _ in range(n_fc - 1):
        h = _lin(h, p[i], p[i + 1]); i += 2
    out = _lin(h, p[i], p[i + 1], relu=False)           # (Bt, 2*out_w)
    return out


def _cb_kernel(coords_ref, oh_ref, *rest,
               n_center, n_conv_c, n_fc_c, n_conv_b, n_fc_b):
    d12_ref, e12_ref = rest[-2], rest[-1]
    p = rest[:-2]
    pc, pb = p[:n_center], p[n_center:]

    coords3 = coords_ref[...]                 # (Bt, M, 3) f32 (already centered)
    oh = oh_ref[...][:, 0, :]                 # (Bt, nc)

    # --- center regression ---
    d12 = _reg_trunk(coords3, oh, pc, 0, n_conv_c, n_fc_c)   # (Bt, 6)
    delta = (d12[:, 0:3] + d12[:, 3:6]) * 0.5
    coords_adj = coords3 - delta[:, None, :]                 # stays in VMEM

    # --- box estimation on the adjusted coords ---
    e12 = _reg_trunk(coords_adj, oh, pb, 0, n_conv_b, n_fc_b)  # (Bt, 2*est_dim)

    d12_ref[...] = d12[:, None, :]
    e12_ref[...] = e12[:, None, :]


# ----------------------------------------------------------------------------
# pallas_call wrappers
# ----------------------------------------------------------------------------
def _const_spec(arr):
    nd = arr.ndim
    return pl.BlockSpec(arr.shape, lambda b, _nd=nd: (0,) * _nd)


def _choose_row_batch(B):
    """Largest divisor of B that keeps >=2 grid steps (megacore on v7x)."""
    if B <= 1:
        return 1
    for bt in range(B // 2, 0, -1):
        if B % bt == 0:
            return bt
    return 1


def seg_forward(seg_flat, feat_nc, one_hot3, bt):
    B, N, Cin = feat_nc.shape
    nc = one_hot3.shape[-1]
    in_specs = ([pl.BlockSpec((bt, N, Cin), lambda b: (b, 0, 0)),
                 pl.BlockSpec((bt, 1, nc), lambda b: (b, 0, 0))]
                + [_const_spec(a) for a in seg_flat])
    logits, mean = pl.pallas_call(
        _seg_kernel,
        grid=(B // bt,),
        in_specs=in_specs,
        out_specs=(pl.BlockSpec((bt, 4, N), lambda b: (b, 0, 0)),
                   pl.BlockSpec((bt, 1, 3), lambda b: (b, 0, 0))),
        out_shape=(jax.ShapeDtypeStruct((B, 4, N), jnp.float32),
                   jax.ShapeDtypeStruct((B, 1, 3), jnp.float32)),
        compiler_params=pltpu.CompilerParams(dimension_semantics=("parallel",)),
    )(feat_nc, one_hot3, *seg_flat)
    return logits, mean[:, 0, :]


def center_box_forward(cb_flat, n_center, coords_nc, one_hot3, *,
                       out_c, out_b, n_conv_c, n_fc_c, n_conv_b, n_fc_b, bt):
    B, M, _ = coords_nc.shape
    nc = one_hot3.shape[-1]
    kernel = functools.partial(_cb_kernel, n_center=n_center,
                               n_conv_c=n_conv_c, n_fc_c=n_fc_c,
                               n_conv_b=n_conv_b, n_fc_b=n_fc_b)
    in_specs = ([pl.BlockSpec((bt, M, 3), lambda b: (b, 0, 0)),
                 pl.BlockSpec((bt, 1, nc), lambda b: (b, 0, 0))]
                + [_const_spec(a) for a in cb_flat])
    d12, e12 = pl.pallas_call(
        kernel,
        grid=(B // bt,),
        in_specs=in_specs,
        out_specs=(pl.BlockSpec((bt, 1, out_c), lambda b: (b, 0, 0)),
                   pl.BlockSpec((bt, 1, out_b), lambda b: (b, 0, 0))),
        out_shape=(jax.ShapeDtypeStruct((B, 1, out_c), jnp.float32),
                   jax.ShapeDtypeStruct((B, 1, out_b), jnp.float32)),
        compiler_params=pltpu.CompilerParams(dimension_semantics=("parallel",)),
    )(coords_nc, one_hot3, *cb_flat)
    return d12[:, 0, :], e12[:, 0, :]


# ----------------------------------------------------------------------------
# Parameter initialisation (deterministic, synthetic)
# ----------------------------------------------------------------------------
def _init_lin(key, c_in, c_out):
    kw, kb = jax.random.split(key)
    w = jax.random.normal(kw, (c_in, c_out), jnp.float32) * (1.0 / math.sqrt(c_in))
    b = jax.random.normal(kb, (c_out,), jnp.float32) * 0.01
    return w, b


def _init_stack(key, channels):
    keys = jax.random.split(key, len(channels) - 1)
    return [_init_lin(k, channels[i], channels[i + 1]) for i, k in enumerate(keys)]


def init_params(key, in_channels, num_classes, num_heading_angle_bins, num_size_templates):
    est_dim = 3 + 2 * num_heading_angle_bins + 4 * num_size_templates
    k = jax.random.split(key, 12)
    return {
        "seg": {
            "convs1": _init_stack(k[0], [in_channels, 32, 32, 64]),
            "convs2": _init_stack(k[1], [64, 64, 128]),
            "convs3": _init_stack(k[2], [64 + 128 + num_classes, 128, 64, 64]),
            "head1": _init_lin(k[3], 64, 2),
            "head2": _init_lin(k[4], 64, 2),
        },
        "center": {
            "convs": _init_stack(k[5], [3, 32, 64, 128]),
            "fcs": _init_stack(k[6], [128 + num_classes, 64]),
            "head1": _init_lin(k[7], 64, 3),
            "head2": _init_lin(k[8], 64, 3),
        },
        "box": {
            "convs": _init_stack(k[9], [3, 32, 64, 128, 128]),
            "fcs": _init_stack(k[10], [128 + num_classes, 128, 64]),
            "head1": _init_lin(k[11], 64, est_dim),
            "head2": _init_lin(jax.random.fold_in(key, 99), 64, est_dim),
        },
    }


# ----------------------------------------------------------------------------
# Kernel-ready packing — run ONCE at parameter-load time (outside jit).
# ----------------------------------------------------------------------------
def _wb(w, b, keep_f32=False):
    wt = w if keep_f32 else w.astype(jnp.bfloat16)
    return [wt, b.reshape(1, -1).astype(jnp.float32)]


def _fused_heads(p):
    wh = jnp.concatenate([p["head1"][0], p["head2"][0]], axis=1)
    bh = jnp.concatenate([p["head1"][1], p["head2"][1]])
    return _wb(wh, bh)


def _prep_seg(p):
    flat = []
    for li, (w, b) in enumerate(p["convs1"]):
        flat += _wb(w, b, keep_f32=(li == 0))       # f32 first layer (raw coords)
    for w, b in p["convs2"]:
        flat += _wb(w, b)
    pf_dim = p["convs1"][-1][0].shape[1]            # 64
    g_dim = p["convs2"][-1][0].shape[1]             # 128
    (w30, b30), (w31, b31), (w32, b32) = p["convs3"]
    flat += [w30[:pf_dim].astype(jnp.bfloat16),                   # point-feat part
             w30[pf_dim:pf_dim + g_dim].astype(jnp.bfloat16),     # global-feat part
             w30[pf_dim + g_dim:].astype(jnp.bfloat16),           # one-hot part
             b30.reshape(1, -1)]
    flat += _wb(w31, b31) + _wb(w32, b32)
    flat += _fused_heads(p)
    return flat


def _prep_reg(p):
    flat = []
    for li, (w, b) in enumerate(p["convs"]):
        flat += _wb(w, b, keep_f32=(li == 0))       # f32 first layer
    g_dim = p["convs"][-1][0].shape[1]
    w0, b0 = p["fcs"][0]
    flat += [w0[:g_dim].astype(jnp.bfloat16),       # global-feat part
             w0[g_dim:].astype(jnp.bfloat16),       # one-hot part
             b0.reshape(1, -1)]
    for w, b in p["fcs"][1:]:
        flat += _wb(w, b)
    flat += _fused_heads(p)
    return flat


def prepare_params(params):
    """Hoisted out of the jitted forward: bf16 casts / splits / concats run once."""
    return {
        "seg": tuple(_prep_seg(params["seg"])),
        "cb": tuple(_prep_reg(params["center"]) + _prep_reg(params["box"])),
    }


def _n_reg_refs(n_conv, n_fc):
    return 2 * n_conv + 3 + 2 * (n_fc - 1) + 2


# ----------------------------------------------------------------------------
# FrustumPointDanFull forward (default path: no adaptation_s / adaptation_t)
# ----------------------------------------------------------------------------
def frustum_point_dan_full_forward(prepped, features, one_hot, size_templates,
                                   num_heading_angle_bins, num_size_templates,
                                   num_points_per_object):
    assert one_hot.ndim == 2
    B, _, N = features.shape
    NH, NS = num_heading_angle_bins, num_size_templates
    est_dim = 3 + 2 * NH + 4 * NS

    feat_nc = jnp.transpose(features, (0, 2, 1))      # (B, N, Cin) channels-last
    oh3 = one_hot[:, None, :]                         # (B, 1, nc)
    bt = _choose_row_batch(B)

    # --- instance segmentation (fused kernel, lane-dense logits + fg mean) ---
    logits_bcn, fg_mean = seg_forward(prepped["seg"], feat_nc, oh3, bt)  # (B,4,N),(B,3)
    l1 = logits_bcn[:, 0:2, :]
    l2 = logits_bcn[:, 2:4, :]
    mask_logits = (l1 + l2) * 0.5                     # (B, 2, N) — already channels-first

    # --- F.logits_mask: foreground selection (JAX glue) ---
    coords_nc = feat_nc[:, :, 0:3]
    margin = mask_logits[:, 1, :] - mask_logits[:, 0, :]             # (B, N)
    _, idx = jax.lax.top_k(margin, num_points_per_object)            # (B, M)
    fg_coords = jnp.take_along_axis(coords_nc, idx[:, :, None], axis=1)
    fg_coords = fg_coords - fg_mean[:, None, :]                      # (B, M, 3)

    # --- fused center regression + box estimation (single kernel) ---
    n_center = _n_reg_refs(3, 1)
    d12, e12 = center_box_forward(
        prepped["cb"], n_center, fg_coords, oh3,
        out_c=6, out_b=2 * est_dim,
        n_conv_c=3, n_fc_c=1, n_conv_b=4, n_fc_b=2, bt=bt)
    d1, d2 = d12[:, 0:3], d12[:, 3:6]
    delta = (d1 + d2) * 0.5
    e1, e2 = e12[:, 0:est_dim], e12[:, est_dim:]
    est = (e1 + e2) * 0.5

    def split(e):
        c = e[:, 0:3]
        hs = e[:, 3:3 + NH]
        hr = e[:, 3 + NH:3 + 2 * NH]
        ss = e[:, 3 + 2 * NH:3 + 2 * NH + NS]
        sr = e[:, 3 + 2 * NH + NS:].reshape(-1, NS, 3)
        return c, hs, hr, ss, sr

    c, hs, hr, ss, srn = split(est)
    c1, hs1, hr1, ss1, srn1 = split(e1)
    c2, hs2, hr2, ss2, srn2 = split(e2)

    outputs = {}
    outputs["mask_logits"] = mask_logits
    outputs["mask_logits1"] = l1
    outputs["mask_logits2"] = l2
    outputs["center_reg"] = fg_mean + delta
    outputs["center_reg1"] = fg_mean + d1
    outputs["center_reg2"] = fg_mean + d2
    outputs["center"] = c + outputs["center_reg"]
    outputs["center1"] = c1 + outputs["center_reg1"]
    outputs["center2"] = c2 + outputs["center_reg2"]
    outputs["heading_scores"] = hs
    outputs["heading_residuals_normalized"] = hr
    outputs["heading_residuals"] = hr * (math.pi / NH)
    outputs["size_scores"] = ss
    outputs["heading_scores1"] = hs1
    outputs["heading_residuals_normalized1"] = hr1
    outputs["heading_residuals1"] = hr1 * (math.pi / NH)
    outputs["size_scores1"] = ss1
    outputs["heading_scores2"] = hs2
    outputs["heading_residuals_normalized2"] = hr2
    outputs["heading_residuals2"] = hr2 * (math.pi / NH)
    outputs["size_scores2"] = ss2
    outputs["size_residuals_normalized"] = srn
    outputs["size_residuals"] = srn * size_templates
    outputs["size_residuals_normalized1"] = srn1
    outputs["size_residuals1"] = srn1 * size_templates
    outputs["size_residuals_normalized2"] = srn2
    outputs["size_residuals2"] = srn2 * size_templates
    return outputs


# ----------------------------------------------------------------------------
if __name__ == "__main__":
    B, N = 2, 128                    # batch, points per frustum
    num_points_per_object = 64
    num_classes = 3
    num_heading_angle_bins = 4
    num_size_templates = 3
    extra_feature_channels = 1
    in_channels = 3 + extra_feature_channels

    key = jax.random.PRNGKey(0)
    k_feat, k_oh, k_params = jax.random.split(key, 3)

    features = jax.random.normal(k_feat, (B, in_channels, N), jnp.float32)
    oh_idx = jax.random.randint(k_oh, (B,), 0, num_classes)
    one_hot = jax.nn.one_hot(oh_idx, num_classes, dtype=jnp.float32)
    size_templates = jnp.array(
        [[3.9, 1.6, 1.56], [0.8, 0.6, 1.73], [1.76, 0.6, 1.73]],
        jnp.float32).reshape(1, num_size_templates, 3)

    params = init_params(k_params, in_channels, num_classes,
                         num_heading_angle_bins, num_size_templates)
    prepped = prepare_params(params)     # weight prep hoisted out of jit

    fwd = jax.jit(functools.partial(
        frustum_point_dan_full_forward,
        size_templates=size_templates,
        num_heading_angle_bins=num_heading_angle_bins,
        num_size_templates=num_size_templates,
        num_points_per_object=num_points_per_object))

    outputs = fwd(prepped, features, one_hot)
    outputs = jax.tree_util.tree_map(jax.block_until_ready, outputs)

    assert outputs["mask_logits"].shape == (B, 2, N)
    assert outputs["center"].shape == (B, 3)
    assert outputs["heading_scores"].shape == (B, num_heading_angle_bins)
    assert outputs["size_residuals"].shape == (B, num_size_templates, 3)
    assert all(bool(jnp.all(jnp.isfinite(v)))
               for v in jax.tree_util.tree_leaves(outputs))
    print("KERNEL_OK")
</pallas_src>

<mosaic_0001>
module attributes {stable_mosaic.version = 11 : i64} {
  func.func @_seg_kernel(%arg0: i32, %arg1: memref<1x128x4xf32, #tpu.memory_space<vmem>>, %arg2: memref<1x1x3xf32, #tpu.memory_space<vmem>>, %arg3: memref<4x32xf32, #tpu.memory_space<vmem>>, %arg4: memref<1x32xf32, #tpu.memory_space<vmem>>, %arg5: memref<32x32xbf16, #tpu.memory_space<vmem>>, %arg6: memref<1x32xf32, #tpu.memory_space<vmem>>, %arg7: memref<32x64xbf16, #tpu.memory_space<vmem>>, %arg8: memref<1x64xf32, #tpu.memory_space<vmem>>, %arg9: memref<64x64xbf16, #tpu.memory_space<vmem>>, %arg10: memref<1x64xf32, #tpu.memory_space<vmem>>, %arg11: memref<64x128xbf16, #tpu.memory_space<vmem>>, %arg12: memref<1x128xf32, #tpu.memory_space<vmem>>, %arg13: memref<64x128xbf16, #tpu.memory_space<vmem>>, %arg14: memref<128x128xbf16, #tpu.memory_space<vmem>>, %arg15: memref<3x128xbf16, #tpu.memory_space<vmem>>, %arg16: memref<1x128xf32, #tpu.memory_space<vmem>>, %arg17: memref<128x64xbf16, #tpu.memory_space<vmem>>, %arg18: memref<1x64xf32, #tpu.memory_space<vmem>>, %arg19: memref<64x64xbf16, #tpu.memory_space<vmem>>, %arg20: memref<1x64xf32, #tpu.memory_space<vmem>>, %arg21: memref<64x4xbf16, #tpu.memory_space<vmem>>, %arg22: memref<1x4xf32, #tpu.memory_space<vmem>>, %arg23: memref<1x4x128xf32, #tpu.memory_space<vmem>>, %arg24: memref<1x1x3xf32, #tpu.memory_space<vmem>>) attributes {dimension_semantics = [#tpu.dimension_semantics<parallel>], iteration_bounds = array<i64: 2>, scalar_prefetch = 0 : i64, scratch_operands = 0 : i64, tpu.core_type = #tpu.core_type<tc>, window_params = [{transform_indices = @transform_0, window_bounds = array<i64: 1, 128, 4>}, {transform_indices = @transform_1, window_bounds = array<i64: 1, 1, 3>}, {pipeline_mode = #tpu.pipeline_mode<synchronous>, transform_indices = @transform_2, window_bounds = array<i64: 4, 32>}, {pipeline_mode = #tpu.pipeline_mode<synchronous>, transform_indices = @transform_3, window_bounds = array<i64: 1, 32>}, {pipeline_mode = #tpu.pipeline_mode<synchronous>, transform_indices = @transform_4, window_bounds = array<i64: 32, 32>}, {pipeline_mode = #tpu.pipeline_mode<synchronous>, transform_indices = @transform_5, window_bounds = array<i64: 1, 32>}, {pipeline_mode = #tpu.pipeline_mode<synchronous>, transform_indices = @transform_6, window_bounds = array<i64: 32, 64>}, {pipeline_mode = #tpu.pipeline_mode<synchronous>, transform_indices = @transform_7, window_bounds = array<i64: 1, 64>}, {pipeline_mode = #tpu.pipeline_mode<synchronous>, transform_indices = @transform_8, window_bounds = array<i64: 64, 64>}, {pipeline_mode = #tpu.pipeline_mode<synchronous>, transform_indices = @transform_9, window_bounds = array<i64: 1, 64>}, {pipeline_mode = #tpu.pipeline_mode<synchronous>, transform_indices = @transform_10, window_bounds = array<i64: 64, 128>}, {pipeline_mode = #tpu.pipeline_mode<synchronous>, transform_indices = @transform_11, window_bounds = array<i64: 1, 128>}, {pipeline_mode = #tpu.pipeline_mode<synchronous>, transform_indices = @transform_12, window_bounds = array<i64: 64, 128>}, {pipeline_mode = #tpu.pipeline_mode<synchronous>, transform_indices = @transform_13, window_bounds = array<i64: 128, 128>}, {pipeline_mode = #tpu.pipeline_mode<synchronous>, transform_indices = @transform_14, window_bounds = array<i64: 3, 128>}, {pipeline_mode = #tpu.pipeline_mode<synchronous>, transform_indices = @transform_15, window_bounds = array<i64: 1, 128>}, {pipeline_mode = #tpu.pipeline_mode<synchronous>, transform_indices = @transform_16, window_bounds = array<i64: 128, 64>}, {pipeline_mode = #tpu.pipeline_mode<synchronous>, transform_indices = @transform_17, window_bounds = array<i64: 1, 64>}, {pipeline_mode = #tpu.pipeline_mode<synchronous>, transform_indices = @transform_18, window_bounds = array<i64: 64, 64>}, {pipeline_mode = #tpu.pipeline_mode<synchronous>, transform_indices = @transform_19, window_bounds = array<i64: 1, 64>}, {pipeline_mode = #tpu.pipeline_mode<synchronous>, transform_indices = @transform_20, window_bounds = array<i64: 64, 4>}, {pipeline_mode = #tpu.pipeline_mode<synchronous>, transform_indices = @transform_21, window_bounds = array<i64: 1, 4>}, {transform_indices = @transform_22, window_bounds = array<i64: 1, 4, 128>}, {transform_indices = @transform_23, window_bounds = array<i64: 1, 1, 3>}]} {
    %c0 = arith.constant 0 : index
    %c0_0 = arith.constant 0 : index
    %c0_1 = arith.constant 0 : index
    %0 = vector.load %arg1[%c0, %c0_0, %c0_1] : memref<1x128x4xf32, #tpu.memory_space<vmem>>, vector<1x128x4xf32>
    %1 = vector.shape_cast %0 : vector<1x128x4xf32> to vector<128x4xf32>
    %c0_2 = arith.constant 0 : index
    %c0_3 = arith.constant 0 : index
    %2 = vector.load %arg3[%c0_2, %c0_3] : memref<4x32xf32, #tpu.memory_space<vmem>>, vector<4x32xf32>
    %cst = arith.constant dense<0.000000e+00> : vector<128x32xf32>
    %3 = tpu.matmul %1, %2, %cst {dimension_numbers = #tpu.dot_dimension_numbers<[1], [0], [0], [1], [0, 0, 1, 1], [], []>} : vector<128x4xf32>, vector<4x32xf32>, vector<128x32xf32> -> vector<128x32xf32>
    %c0_4 = arith.constant 0 : index
    %c0_5 = arith.constant 0 : index
    %4 = vector.load %arg4[%c0_4, %c0_5] : memref<1x32xf32, #tpu.memory_space<vmem>>, vector<1x32xf32>
    %5 = vector.broadcast %4 : vector<1x32xf32> to vector<128x32xf32>
    %6 = arith.addf %3, %5 : vector<128x32xf32>
    %cst_6 = arith.constant 0.000000e+00 : f32
    %7 = vector.broadcast %cst_6 : f32 to vector<128x32xf32>
    %8 = arith.maximumf %6, %7 : vector<128x32xf32>
    %9 = arith.truncf %8 : vector<128x32xf32> to vector<128x32xbf16>
    %c0_7 = arith.constant 0 : index
    %c0_8 = arith.constant 0 : index
    %10 = vector.load %arg5[%c0_7, %c0_8] : memref<32x32xbf16, #tpu.memory_space<vmem>>, vector<32x32xbf16>
    %cst_9 = arith.constant dense<0.000000e+00> : vector<128x32xf32>
    %11 = tpu.matmul %9, %10, %cst_9 {dimension_numbers = #tpu.dot_dimension_numbers<[1], [0], [0], [1], [0, 0, 1, 1], [], []>} : vector<128x32xbf16>, vector<32x32xbf16>, vector<128x32xf32> -> vector<128x32xf32>
    %c0_10 = arith.constant 0 : index
    %c0_11 = arith.constant 0 : index
    %12 = vector.load %arg6[%c0_10, %c0_11] : memref<1x32xf32, #tpu.memory_space<vmem>>, vector<1x32xf32>
    %13 = vector.broadcast %12 : vector<1x32xf32> to vector<128x32xf32>
    %14 = arith.addf %11, %13 : vector<128x32xf32>
    %cst_12 = arith.constant 0.000000e+00 : f32
    %15 = vector.broadcast %cst_12 : f32 to vector<128x32xf32>
    %16 = arith.maximumf %14, %15 : vector<128x32xf32>
    %17 = arith.truncf %16 : vector<128x32xf32> to vector<128x32xbf16>
    %c0_13 = arith.constant 0 : index
    %c0_14 = arith.constant 0 : index
    %18 = vector.load %arg7[%c0_13, %c0_14] : memref<32x64xbf16, #tpu.memory_space<vmem>>, vector<32x64xbf16>
    %cst_15 = arith.constant dense<0.000000e+00> : vector<128x64xf32>
    %19 = tpu.matmul %17, %18, %cst_15 {dimension_numbers = #tpu.dot_dimension_numbers<[1], [0], [0], [1], [0, 0, 1, 1], [], []>} : vector<128x32xbf16>, vector<32x64xbf16>, vector<128x64xf32> -> vector<128x64xf32>
    %c0_16 = arith.constant 0 : index
    %c0_17 = arith.constant 0 : index
    %20 = vector.load %arg8[%c0_16, %c0_17] : memref<1x64xf32, #tpu.memory_space<vmem>>, vector<1x64xf32>
    %21 = vector.broadcast %20 : vector<1x64xf32> to vector<128x64xf32>
    %22 = arith.addf %19, %21 : vector<128x64xf32>
    %cst_18 = arith.constant 0.000000e+00 : f32
    %23 = vector.broadcast %cst_18 : f32 to vector<128x64xf32>
    %24 = arith.maximumf %22, %23 : vector<128x64xf32>
    %25 = arith.truncf %24 : vector<128x64xf32> to vector<128x64xbf16>
    %c0_19 = arith.constant 0 : index
    %c0_20 = arith.constant 0 : index
    %26 = vector.load %arg9[%c0_19, %c0_20] : memref<64x64xbf16, #tpu.memory_space<vmem>>, vector<64x64xbf16>
    %cst_21 = arith.constant dense<0.000000e+00> : vector<128x64xf32>
    %27 = tpu.matmul %25, %26, %cst_21 {dimension_numbers = #tpu.dot_dimension_numbers<[1], [0], [0], [1], [0, 0, 1, 1], [], []>} : vector<128x64xbf16>, vector<64x64xbf16>, vector<128x64xf32> -> vector<128x64xf32>
    %c0_22 = arith.constant 0 : index
    %c0_23 = arith.constant 0 : index
    %28 = vector.load %arg10[%c0_22, %c0_23] : memref<1x64xf32, #tpu.memory_space<vmem>>, vector<1x64xf32>
    %29 = vector.broadcast %28 : vector<1x64xf32> to vector<128x64xf32>
    %30 = arith.addf %27, %29 : vector<128x64xf32>
    %cst_24 = arith.constant 0.000000e+00 : f32
    %31 = vector.broadcast %cst_24 : f32 to vector<128x64xf32>
    %32 = arith.maximumf %30, %31 : vector<128x64xf32>
    %33 = arith.truncf %32 : vector<128x64xf32> to vector<128x64xbf16>
    %c0_25 = arith.constant 0 : index
    %c0_26 = arith.constant 0 : index
    %34 = vector.load %arg11[%c0_25, %c0_26] : memref<64x128xbf16, #tpu.memory_space<vmem>>, vector<64x128xbf16>
    %cst_27 = arith.constant dense<0.000000e+00> : vector<128x128xf32>
    %35 = tpu.matmul %33, %34, %cst_27 {dimension_numbers = #tpu.dot_dimension_numbers<[1], [0], [0], [1], [0, 0, 1, 1], [], []>} : vector<128x64xbf16>, vector<64x128xbf16>, vector<128x128xf32> -> vector<128x128xf32>
    %c0_28 = arith.constant 0 : index
    %c0_29 = arith.constant 0 : index
    %36 = vector.load %arg12[%c0_28, %c0_29] : memref<1x128xf32, #tpu.memory_space<vmem>>, vector<1x128xf32>
    %37 = vector.broadcast %36 : vector<1x128xf32> to vector<128x128xf32>
    %38 = arith.addf %35, %37 : vector<128x128xf32>
    %cst_30 = arith.constant 0.000000e+00 : f32
    %39 = vector.broadcast %cst_30 : f32 to vector<128x128xf32>
    %40 = arith.maximumf %38, %39 : vector<128x128xf32>
    %41 = vector.shape_cast %40 : vector<128x128xf32> to vector<1x128x128xf32>
    %cst_31 = arith.constant dense<0xFF800000> : vector<1x128xf32>
    %42 = vector.multi_reduction <maximumf>, %41, %cst_31 [1] : vector<1x128x128xf32> to vector<1x128xf32>
    %c0_32 = arith.constant 0 : index
    %c0_33 = arith.constant 0 : index
    %c0_34 = arith.constant 0 : index
    %43 = vector.load %arg2[%c0_32, %c0_33, %c0_34] : memref<1x1x3xf32, #tpu.memory_space<vmem>>, vector<1x1x3xf32>
    %44 = vector.shape_cast %43 : vector<1x1x3xf32> to vector<1x3xf32>
    %45 = arith.truncf %42 : vector<1x128xf32> to vector<1x128xbf16>
    %c0_35 = arith.constant 0 : index
    %c0_36 = arith.constant 0 : index
    %46 = vector.load %arg14[%c0_35, %c0_36] : memref<128x128xbf16, #tpu.memory_space<vmem>>, vector<128x128xbf16>
    %cst_37 = arith.constant dense<0.000000e+00> : vector<1x128xf32>
    %47 = tpu.matmul %45, %46, %cst_37 {dimension_numbers = #tpu.dot_dimension_numbers<[1], [0], [0], [1], [0, 0, 1, 1], [], []>} : vector<1x128xbf16>, vector<128x128xbf16>, vector<1x128xf32> -> vector<1x128xf32>
    %48 = arith.truncf %44 : vector<1x3xf32> to vector<1x3xbf16>
    %c0_38 = arith.constant 0 : index
    %c0_39 = arith.constant 0 : index
    %49 = vector.load %arg15[%c0_38, %c0_39] : memref<3x128xbf16, #tpu.memory_space<vmem>>, vector<3x128xbf16>
    %cst_40 = arith.constant dense<0.000000e+00> : vector<1x128xf32>
    %50 = tpu.matmul %48, %49, %cst_40 {dimension_numbers = #tpu.dot_dimension_numbers<[1], [0], [0], [1], [0, 0, 1, 1], [], []>} : vector<1x3xbf16>, vector<3x128xbf16>, vector<1x128xf32> -> vector<1x128xf32>
    %51 = arith.addf %47, %50 : vector<1x128xf32>
    %c0_41 = arith.constant 0 : index
    %c0_42 = arith.constant 0 : index
    %52 = vector.load %arg16[%c0_41, %c0_42] : memref<1x128xf32, #tpu.memory_space<vmem>>, vector<1x128xf32>
    %53 = arith.addf %51, %52 : vector<1x128xf32>
    %54 = arith.truncf %24 : vector<128x64xf32> to vector<128x64xbf16>
    %c0_43 = arith.constant 0 : index
    %c0_44 = arith.constant 0 : index
    %55 = vector.load %arg13[%c0_43, %c0_44] : memref<64x128xbf16, #tpu.memory_space<vmem>>, vector<64x128xbf16>
    %cst_45 = arith.constant dense<0.000000e+00> : vector<128x128xf32>
    %56 = tpu.matmul %54, %55, %cst_45 {dimension_numbers = #tpu.dot_dimension_numbers<[1], [0], [0], [1], [0, 0, 1, 1], [], []>} : vector<128x64xbf16>, vector<64x128xbf16>, vector<128x128xf32> -> vector<128x128xf32>
    %57 = vector.shape_cast %56 : vector<128x128xf32> to vector<1x128x128xf32>
    %58 = vector.shape_cast %53 : vector<1x128xf32> to vector<1x1x128xf32>
    %59 = vector.broadcast %58 : vector<1x1x128xf32> to vector<1x128x128xf32>
    %60 = arith.addf %57, %59 : vector<1x128x128xf32>
    %cst_46 = arith.constant 0.000000e+00 : f32
    %61 = vector.broadcast %cst_46 : f32 to vector<1x128x128xf32>
    %62 = arith.maximumf %60, %61 : vector<1x128x128xf32>
    %63 = vector.shape_cast %62 : vector<1x128x128xf32> to vector<128x128xf32>
    %64 = arith.truncf %63 : vector<128x128xf32> to vector<128x128xbf16>
    %c0_47 = arith.constant 0 : index
    %c0_48 = arith.constant 0 : index
    %65 = vector.load %arg17[%c0_47, %c0_48] : memref<128x64xbf16, #tpu.memory_space<vmem>>, vector<128x64xbf16>
    %cst_49 = arith.constant dense<0.000000e+00> : vector<128x64xf32>
    %66 = tpu.matmul %64, %65, %cst_49 {dimension_numbers = #tpu.dot_dimension_numbers<[1], [0], [0], [1], [0, 0, 1, 1], [], []>} : vector<128x128xbf16>, vector<128x64xbf16>, vector<128x64xf32> -> vector<128x64xf32>
    %c0_50 = arith.constant 0 : index
    %c0_51 = arith.constant 0 : index
    %67 = vector.load %arg18[%c0_50, %c0_51] : memref<1x64xf32, #tpu.memory_space<vmem>>, vector<1x64xf32>
    %68 = vector.broadcast %67 : vector<1x64xf32> to vector<128x64xf32>
    %69 = arith.addf %66, %68 : vector<128x64xf32>
    %cst_52 = arith.constant 0.000000e+00 : f32
    %70 = vector.broadcast %cst_52 : f32 to vector<128x64xf32>
    %71 = arith.maximumf %69, %70 : vector<128x64xf32>
    %72 = arith.truncf %71 : vector<128x64xf32> to vector<128x64xbf16>
    %c0_53 = arith.constant 0 : index
    %c0_54 = arith.constant 0 : index
    %73 = vector.load %arg19[%c0_53, %c0_54] : memref<64x64xbf16, #tpu.memory_space<vmem>>, vector<64x64xbf16>
    %cst_55 = arith.constant dense<0.000000e+00> : vector<128x64xf32>
    %74 = tpu.matmul %72, %73, %cst_55 {dimension_numbers = #tpu.dot_dimension_numbers<[1], [0], [0], [1], [0, 0, 1, 1], [], []>} : vector<128x64xbf16>, vector<64x64xbf16>, vector<128x64xf32> -> vector<128x64xf32>
    %c0_56 = arith.constant 0 : index
    %c0_57 = arith.constant 0 : index
    %75 = vector.load %arg20[%c0_56, %c0_57] : memref<1x64xf32, #tpu.memory_space<vmem>>, vector<1x64xf32>
    %76 = vector.broadcast %75 : vector<1x64xf32> to vector<128x64xf32>
    %77 = arith.addf %74, %76 : vector<128x64xf32>
    %cst_58 = arith.constant 0.000000e+00 : f32
    %78 = vector.broadcast %cst_58 : f32 to vector<128x64xf32>
    %79 = arith.maximumf %77, %78 : vector<128x64xf32>
    %80 = arith.truncf %79 : vector<128x64xf32> to vector<128x64xbf16>
    %c0_59 = arith.constant 0 : index
    %c0_60 = arith.constant 0 : index
    %81 = vector.load %arg21[%c0_59, %c0_60] : memref<64x4xbf16, #tpu.memory_space<vmem>>, vector<64x4xbf16>
    %cst_61 = arith.constant dense<0.000000e+00> : vector<128x4xf32>
    %82 = tpu.matmul %80, %81, %cst_61 {dimension_numbers = #tpu.dot_dimension_numbers<[1], [0], [0], [1], [0, 0, 1, 1], [], []>} : vector<128x64xbf16>, vector<64x4xbf16>, vector<128x4xf32> -> vector<128x4xf32>
    %c0_62 = arith.constant 0 : index
    %c0_63 = arith.constant 0 : index
    %83 = vector.load %arg22[%c0_62, %c0_63] : memref<1x4xf32, #tpu.memory_space<vmem>>, vector<1x4xf32>
    %84 = vector.broadcast %83 : vector<1x4xf32> to vector<128x4xf32>
    %85 = arith.addf %82, %84 : vector<128x4xf32>
    %86 = vector.shape_cast %85 : vector<128x4xf32> to vector<1x128x4xf32>
    %87 = tpu.transpose %86, [0, 2, 1] : vector<1x128x4xf32> -> vector<1x4x128xf32>
    %c0_64 = arith.constant 0 : index
    %c0_65 = arith.constant 0 : index
    %c0_66 = arith.constant 0 : index
    %88 = vector.load %arg23[%c0_64, %c0_65, %c0_66] : memref<1x4x128xf32, #tpu.memory_space<vmem>>, vector<1x4x128xf32>
    tpu.vector_store %arg23[%c0_64, %c0_65, %c0_66], %87 {strides = array<i32>} : memref<1x4x128xf32, #tpu.memory_space<vmem>>, vector<1x4x128xf32>,
    %89 = vector.extract_strided_slice %86 {offsets = [0, 0, 0], sizes = [1, 128, 2], strides = [1, 1, 1]} : vector<1x128x4xf32> to vector<1x128x2xf32>
    %90 = vector.extract_strided_slice %86 {offsets = [0, 0, 2], sizes = [1, 128, 2], strides = [1, 1, 1]} : vector<1x128x4xf32> to vector<1x128x2xf32>
    %91 = arith.addf %89, %90 : vector<1x128x2xf32>
    %cst_67 = arith.constant 5.000000e-01 : f32
    %92 = vector.broadcast %cst_67 : f32 to vector<1x128x2xf32>
    %93 = arith.mulf %91, %92 : vector<1x128x2xf32>
    %94 = vector.extract_strided_slice %93 {offsets = [0, 0, 1], sizes = [1, 128, 1], strides = [1, 1, 1]} : vector<1x128x2xf32> to vector<1x128x1xf32>
    %95 = vector.extract_strided_slice %93 {offsets = [0, 0, 0], sizes = [1, 128, 1], strides = [1, 1, 1]} : vector<1x128x2xf32> to vector<1x128x1xf32>
    %96 = arith.cmpf ogt, %94, %95 : vector<1x128x1xf32>
    %97 = arith.extui %96 : vector<1x128x1xi1> to vector<1x128x1xi32>
    %98 = arith.sitofp %97 : vector<1x128x1xi32> to vector<1x128x1xf32>
    %99 = vector.extract_strided_slice %0 {offsets = [0, 0, 0], sizes = [1, 128, 3], strides = [1, 1, 1]} : vector<1x128x4xf32> to vector<1x128x3xf32>
    %cst_68 = arith.constant dense<0.000000e+00> : vector<1x1xf32>
    %100 = vector.multi_reduction <add>, %98, %cst_68 [1] : vector<1x128x1xf32> to vector<1x1xf32>
    %cst_69 = arith.constant 1.000000e+00 : f32
    %101 = vector.broadcast %cst_69 : f32 to vector<1x1xf32>
    %102 = arith.maximumf %100, %101 : vector<1x1xf32>
    %103 = vector.broadcast %98 : vector<1x128x1xf32> to vector<1x128x3xf32>
    %104 = arith.mulf %99, %103 : vector<1x128x3xf32>
    %cst_70 = arith.constant dense<0.000000e+00> : vector<1x3xf32>
    %105 = vector.multi_reduction <add>, %104, %cst_70 [1] : vector<1x128x3xf32> to vector<1x3xf32>
    %106 = vector.broadcast %102 : vector<1x1xf32> to vector<1x3xf32>
    %107 = arith.divf %105, %106 : vector<1x3xf32>
    %108 = vector.shape_cast %107 : vector<1x3xf32> to vector<1x1x3xf32>
    %c0_71 = arith.constant 0 : index
    %c0_72 = arith.constant 0 : index
    %c0_73 = arith.constant 0 : index
    %109 = vector.load %arg24[%c0_71, %c0_72, %c0_73] : memref<1x1x3xf32, #tpu.memory_space<vmem>>, vector<1x1x3xf32>
    tpu.vector_store %arg24[%c0_71, %c0_72, %c0_73], %108 {strides = array<i32>} : memref<1x1x3xf32, #tpu.memory_space<vmem>>, vector<1x1x3xf32>,
    return
  }
  func.func @transform_0(%arg0: i32) -> (i32, i32, i32) {
    %c0_i32 = arith.constant 0 : i32
    %c0_i32_0 = arith.constant 0 : i32
    %c0_i32_1 = arith.constant 0 : i32
    return %arg0, %c0_i32, %c0_i32_0 : i32, i32, i32
  }
  func.func @transform_1(%arg0: i32) -> (i32, i32, i32) {
    %c0_i32 = arith.constant 0 : i32
    %c0_i32_0 = arith.constant 0 : i32
    %c0_i32_1 = arith.constant 0 : i32
    return %arg0, %c0_i32, %c0_i32_0 : i32, i32, i32
  }
  func.func @transform_2(%arg0: i32) -> (i32, i32) {
    %c0_i32 = arith.constant 0 : i32
    %c0_i32_0 = arith.constant 0 : i32
    %c0_i32_1 = arith.constant 0 : i32
    return %c0_i32, %c0_i32_0 : i32, i32
  }
  func.func @transform_3(%arg0: i32) -> (i32, i32) {
    %c0_i32 = arith.constant 0 : i32
    %c0_i32_0 = arith.constant 0 : i32
    %c0_i32_1 = arith.constant 0 : i32
    return %c0_i32, %c0_i32_0 : i32, i32
  }
  func.func @transform_4(%arg0: i32) -> (i32, i32) {
    %c0_i32 = arith.constant 0 : i32
    %c0_i32_0 = arith.constant 0 : i32
    %c0_i32_1 = arith.constant 0 : i32
    return %c0_i32, %c0_i32_0 : i32, i32
  }
  func.func @transform_5(%arg0: i32) -> (i32, i32) {
    %c0_i32 = arith.constant 0 : i32
    %c0_i32_0 = arith.constant 0 : i32
    %c0_i32_1 = arith.constant 0 : i32
    return %c0_i32, %c0_i32_0 : i32, i32
  }
  func.func @transform_6(%arg0: i32) -> (i32, i32) {
    %c0_i32 = arith.constant 0 : i32
    %c0_i32_0 = arith.constant 0 : i32
    %c0_i32_1 = arith.constant 0 : i32
    return %c0_i32, %c0_i32_0 : i32, i32
  }
  func.func @transform_7(%arg0: i32) -> (i32, i32) {
    %c0_i32 = arith.constant 0 : i32
    %c0_i32_0 = arith.constant 0 : i32
    %c0_i32_1 = arith.constant 0 : i32
    return %c0_i32, %c0_i32_0 : i32, i32
  }
  func.func @transform_8(%arg0: i32) -> (i32, i32) {
    %c0_i32 = arith.constant 0 : i32
    %c0_i32_0 = arith.constant 0 : i32
    %c0_i32_1 = arith.constant 0 : i32
    return %c0_i32, %c0_i32_0 : i32, i32
  }
  func.func @transform_9(%arg0: i32) -> (i32, i32) {
    %c0_i32 = arith.constant 0 : i32
    %c0_i32_0 = arith.constant 0 : i32
    %c0_i32_1 = arith.constant 0 : i32
    return %c0_i32, %c0_i32_0 : i32, i32
  }
  func.func @transform_10(%arg0: i32) -> (i32, i32) {
    %c0_i32 = arith.constant 0 : i32
    %c0_i32_0 = arith.constant 0 : i32
    %c0_i32_1 = arith.constant 0 : i32
    return %c0_i32, %c0_i32_0 : i32, i32
  }
  func.func @transform_11(%arg0: i32) -> (i32, i32) {
    %c0_i32 = arith.constant 0 : i32
    %c0_i32_0 = arith.constant 0 : i32
    %c0_i32_1 = arith.constant 0 : i32
    return %c0_i32, %c0_i32_0 : i32, i32
  }
  func.func @transform_12(%arg0: i32) -> (i32, i32) {
    %c0_i32 = arith.constant 0 : i32
    %c0_i32_0 = arith.constant 0 : i32
    %c0_i32_1 = arith.constant 0 : i32
    return %c0_i32, %c0_i32_0 : i32, i32
  }
  func.func @transform_13(%arg0: i32) -> (i32, i32) {
    %c0_i32 = arith.constant 0 : i32
    %c0_i32_0 = arith.constant 0 : i32
    %c0_i32_1 = arith.constant 0 : i32
    return %c0_i32, %c0_i32_0 : i32, i32
  }
  func.func @transform_14(%arg0: i32) -> (i32, i32) {
    %c0_i32 = arith.constant 0 : i32
    %c0_i32_0 = arith.constant 0 : i32
    %c0_i32_1 = arith.constant 0 : i32
    return %c0_i32, %c0_i32_0 : i32, i32
  }
  func.func @transform_15(%arg0: i32) -> (i32, i32) {
    %c0_i32 = arith.constant 0 : i32
    %c0_i32_0 = arith.constant 0 : i32
    %c0_i32_1 = arith.constant 0 : i32
    return %c0_i32, %c0_i32_0 : i32, i32
  }
  func.func @transform_16(%arg0: i32) -> (i32, i32) {
    %c0_i32 = arith.constant 0 : i32
    %c0_i32_0 = arith.constant 0 : i32
    %c0_i32_1 = arith.constant 0 : i32
    return %c0_i32, %c0_i32_0 : i32, i32
  }
  func.func @transform_17(%arg0: i32) -> (i32, i32) {
    %c0_i32 = arith.constant 0 : i32
    %c0_i32_0 = arith.constant 0 : i32
    %c0_i32_1 = arith.constant 0 : i32
    return %c0_i32, %c0_i32_0 : i32, i32
  }
  func.func @transform_18(%arg0: i32) -> (i32, i32) {
    %c0_i32 = arith.constant 0 : i32
    %c0_i32_0 = arith.constant 0 : i32
    %c0_i32_1 = arith.constant 0 : i32
    return %c0_i32, %c0_i32_0 : i32, i32
  }
  func.func @transform_19(%arg0: i32) -> (i32, i32) {
    %c0_i32 = arith.constant 0 : i32
    %c0_i32_0 = arith.constant 0 : i32
    %c0_i32_1 = arith.constant 0 : i32
    return %c0_i32, %c0_i32_0 : i32, i32
  }
  func.func @transform_20(%arg0: i32) -> (i32, i32) {
    %c0_i32 = arith.constant 0 : i32
    %c0_i32_0 = arith.constant 0 : i32
    %c0_i32_1 = arith.constant 0 : i32
    return %c0_i32, %c0_i32_0 : i32, i32
  }
  func.func @transform_21(%arg0: i32) -> (i32, i32) {
    %c0_i32 = arith.constant 0 : i32
    %c0_i32_0 = arith.constant 0 : i32
    %c0_i32_1 = arith.constant 0 : i32
    return %c0_i32, %c0_i32_0 : i32, i32
  }
  func.func @transform_22(%arg0: i32) -> (i32, i32, i32) {
    %c0_i32 = arith.constant 0 : i32
    %c0_i32_0 = arith.constant 0 : i32
    %c0_i32_1 = arith.constant 0 : i32
    return %arg0, %c0_i32, %c0_i32_0 : i32, i32, i32
  }
  func.func @transform_23(%arg0: i32) -> (i32, i32, i32) {
    %c0_i32 = arith.constant 0 : i32
    %c0_i32_0 = arith.constant 0 : i32
    %c0_i32_1 = arith.constant 0 : i32
    return %arg0, %c0_i32, %c0_i32_0 : i32, i32, i32
  }
}

module attributes {stable_mosaic.version = 11 : i64} {
  func.func @_cb_kernel(%arg0: i32, %arg1: memref<1x64x3xf32, #tpu.memory_space<vmem>>, %arg2: memref<1x1x3xf32, #tpu.memory_space<vmem>>, %arg3: memref<3x32xf32, #tpu.memory_space<vmem>>, %arg4: memref<1x32xf32, #tpu.memory_space<vmem>>, %arg5: memref<32x64xbf16, #tpu.memory_space<vmem>>, %arg6: memref<1x64xf32, #tpu.memory_space<vmem>>, %arg7: memref<64x128xbf16, #tpu.memory_space<vmem>>, %arg8: memref<1x128xf32, #tpu.memory_space<vmem>>, %arg9: memref<128x64xbf16, #tpu.memory_space<vmem>>, %arg10: memref<3x64xbf16, #tpu.memory_space<vmem>>, %arg11: memref<1x64xf32, #tpu.memory_space<vmem>>, %arg12: memref<64x6xbf16, #tpu.memory_space<vmem>>, %arg13: memref<1x6xf32, #tpu.memory_space<vmem>>, %arg14: memref<3x32xf32, #tpu.memory_space<vmem>>, %arg15: memref<1x32xf32, #tpu.memory_space<vmem>>, %arg16: memref<32x64xbf16, #tpu.memory_space<vmem>>, %arg17: memref<1x64xf32, #tpu.memory_space<vmem>>, %arg18: memref<64x128xbf16, #tpu.memory_space<vmem>>, %arg19: memref<1x128xf32, #tpu.memory_space<vmem>>, %arg20: memref<128x128xbf16, #tpu.memory_space<vmem>>, %arg21: memref<1x128xf32, #tpu.memory_space<vmem>>, %arg22: memref<128x128xbf16, #tpu.memory_space<vmem>>, %arg23: memref<3x128xbf16, #tpu.memory_space<vmem>>, %arg24: memref<1x128xf32, #tpu.memory_space<vmem>>, %arg25: memref<128x64xbf16, #tpu.memory_space<vmem>>, %arg26: memref<1x64xf32, #tpu.memory_space<vmem>>, %arg27: memref<64x46xbf16, #tpu.memory_space<vmem>>, %arg28: memref<1x46xf32, #tpu.memory_space<vmem>>, %arg29: memref<1x1x6xf32, #tpu.memory_space<vmem>>, %arg30: memref<1x1x46xf32, #tpu.memory_space<vmem>>) attributes {dimension_semantics = [#tpu.dimension_semantics<parallel>], iteration_bounds = array<i64: 2>, scalar_prefetch = 0 : i64, scratch_operands = 0 : i64, tpu.core_type = #tpu.core_type<tc>, window_params = [{transform_indices = @transform_0, window_bounds = array<i64: 1, 64, 3>}, {transform_indices = @transform_1, window_bounds = array<i64: 1, 1, 3>}, {pipeline_mode = #tpu.pipeline_mode<synchronous>, transform_indices = @transform_2, window_bounds = array<i64: 3, 32>}, {pipeline_mode = #tpu.pipeline_mode<synchronous>, transform_indices = @transform_3, window_bounds = array<i64: 1, 32>}, {pipeline_mode = #tpu.pipeline_mode<synchronous>, transform_indices = @transform_4, window_bounds = array<i64: 32, 64>}, {pipeline_mode = #tpu.pipeline_mode<synchronous>, transform_indices = @transform_5, window_bounds = array<i64: 1, 64>}, {pipeline_mode = #tpu.pipeline_mode<synchronous>, transform_indices = @transform_6, window_bounds = array<i64: 64, 128>}, {pipeline_mode = #tpu.pipeline_mode<synchronous>, transform_indices = @transform_7, window_bounds = array<i64: 1, 128>}, {pipeline_mode = #tpu.pipeline_mode<synchronous>, transform_indices = @transform_8, window_bounds = array<i64: 128, 64>}, {pipeline_mode = #tpu.pipeline_mode<synchronous>, transform_indices = @transform_9, window_bounds = array<i64: 3, 64>}, {pipeline_mode = #tpu.pipeline_mode<synchronous>, transform_indices = @transform_10, window_bounds = array<i64: 1, 64>}, {pipeline_mode = #tpu.pipeline_mode<synchronous>, transform_indices = @transform_11, window_bounds = array<i64: 64, 6>}, {pipeline_mode = #tpu.pipeline_mode<synchronous>, transform_indices = @transform_12, window_bounds = array<i64: 1, 6>}, {pipeline_mode = #tpu.pipeline_mode<synchronous>, transform_indices = @transform_13, window_bounds = array<i64: 3, 32>}, {pipeline_mode = #tpu.pipeline_mode<synchronous>, transform_indices = @transform_14, window_bounds = array<i64: 1, 32>}, {pipeline_mode = #tpu.pipeline_mode<synchronous>, transform_indices = @transform_15, window_bounds = array<i64: 32, 64>}, {pipeline_mode = #tpu.pipeline_mode<synchronous>, transform_indices = @transform_16, window_bounds = array<i64: 1, 64>}, {pipeline_mode = #tpu.pipeline_mode<synchronous>, transform_indices = @transform_17, window_bounds = array<i64: 64, 128>}, {pipeline_mode = #tpu.pipeline_mode<synchronous>, transform_indices = @transform_18, window_bounds = array<i64: 1, 128>}, {pipeline_mode = #tpu.pipeline_mode<synchronous>, transform_indices = @transform_19, window_bounds = array<i64: 128, 128>}, {pipeline_mode = #tpu.pipeline_mode<synchronous>, transform_indices = @transform_20, window_bounds = array<i64: 1, 128>}, {pipeline_mode = #tpu.pipeline_mode<synchronous>, transform_indices = @transform_21, window_bounds = array<i64: 128, 128>}, {pipeline_mode = #tpu.pipeline_mode<synchronous>, transform_indices = @transform_22, window_bounds = array<i64: 3, 128>}, {pipeline_mode = #tpu.pipeline_mode<synchronous>, transform_indices = @transform_23, window_bounds = array<i64: 1, 128>}, {pipeline_mode = #tpu.pipeline_mode<synchronous>, transform_indices = @transform_24, window_bounds = array<i64: 128, 64>}, {pipeline_mode = #tpu.pipeline_mode<synchronous>, transform_indices = @transform_25, window_bounds = array<i64: 1, 64>}, {pipeline_mode = #tpu.pipeline_mode<synchronous>, transform_indices = @transform_26, window_bounds = array<i64: 64, 46>}, {pipeline_mode = #tpu.pipeline_mode<synchronous>, transform_indices = @transform_27, window_bounds = array<i64: 1, 46>}, {transform_indices = @transform_28, window_bounds = array<i64: 1, 1, 6>}, {transform_indices = @transform_29, window_bounds = array<i64: 1, 1, 46>}]} {
    %c0 = arith.constant 0 : index
    %c0_0 = arith.constant 0 : index
    %c0_1 = arith.constant 0 : index
    %0 = vector.load %arg1[%c0, %c0_0, %c0_1] : memref<1x64x3xf32, #tpu.memory_space<vmem>>, vector<1x64x3xf32>
    %c0_2 = arith.constant 0 : index
    %c0_3 = arith.constant 0 : index
    %c0_4 = arith.constant 0 : index
    %1 = vector.load %arg2[%c0_2, %c0_3, %c0_4] : memref<1x1x3xf32, #tpu.memory_space<vmem>>, vector<1x1x3xf32>
    %2 = vector.shape_cast %1 : vector<1x1x3xf32> to vector<1x3xf32>
    %3 = vector.shape_cast %0 : vector<1x64x3xf32> to vector<64x3xf32>
    %c0_5 = arith.constant 0 : index
    %c0_6 = arith.constant 0 : index
    %4 = vector.load %arg3[%c0_5, %c0_6] : memref<3x32xf32, #tpu.memory_space<vmem>>, vector<3x32xf32>
    %cst = arith.constant dense<0.000000e+00> : vector<64x32xf32>
    %5 = tpu.matmul %3, %4, %cst {dimension_numbers = #tpu.dot_dimension_numbers<[1], [0], [0], [1], [0, 0, 1, 1], [], []>} : vector<64x3xf32>, vector<3x32xf32>, vector<64x32xf32> -> vector<64x32xf32>
    %c0_7 = arith.constant 0 : index
    %c0_8 = arith.constant 0 : index
    %6 = vector.load %arg4[%c0_7, %c0_8] : memref<1x32xf32, #tpu.memory_space<vmem>>, vector<1x32xf32>
    %7 = vector.broadcast %6 : vector<1x32xf32> to vector<64x32xf32>
    %8 = arith.addf %5, %7 : vector<64x32xf32>
    %cst_9 = arith.constant 0.000000e+00 : f32
    %9 = vector.broadcast %cst_9 : f32 to vector<64x32xf32>
    %10 = arith.maximumf %8, %9 : vector<64x32xf32>
    %11 = arith.truncf %10 : vector<64x32xf32> to vector<64x32xbf16>
    %c0_10 = arith.constant 0 : index
    %c0_11 = arith.constant 0 : index
    %12 = vector.load %arg5[%c0_10, %c0_11] : memref<32x64xbf16, #tpu.memory_space<vmem>>, vector<32x64xbf16>
    %cst_12 = arith.constant dense<0.000000e+00> : vector<64x64xf32>
    %13 = tpu.matmul %11, %12, %cst_12 {dimension_numbers = #tpu.dot_dimension_numbers<[1], [0], [0], [1], [0, 0, 1, 1], [], []>} : vector<64x32xbf16>, vector<32x64xbf16>, vector<64x64xf32> -> vector<64x64xf32>
    %c0_13 = arith.constant 0 : index
    %c0_14 = arith.constant 0 : index
    %14 = vector.load %arg6[%c0_13, %c0_14] : memref<1x64xf32, #tpu.memory_space<vmem>>, vector<1x64xf32>
    %15 = vector.broadcast %14 : vector<1x64xf32> to vector<64x64xf32>
    %16 = arith.addf %13, %15 : vector<64x64xf32>
    %cst_15 = arith.constant 0.000000e+00 : f32
    %17 = vector.broadcast %cst_15 : f32 to vector<64x64xf32>
    %18 = arith.maximumf %16, %17 : vector<64x64xf32>
    %19 = arith.truncf %18 : vector<64x64xf32> to vector<64x64xbf16>
    %c0_16 = arith.constant 0 : index
    %c0_17 = arith.constant 0 : index
    %20 = vector.load %arg7[%c0_16, %c0_17] : memref<64x128xbf16, #tpu.memory_space<vmem>>, vector<64x128xbf16>
    %cst_18 = arith.constant dense<0.000000e+00> : vector<64x128xf32>
    %21 = tpu.matmul %19, %20, %cst_18 {dimension_numbers = #tpu.dot_dimension_numbers<[1], [0], [0], [1], [0, 0, 1, 1], [], []>} : vector<64x64xbf16>, vector<64x128xbf16>, vector<64x128xf32> -> vector<64x128xf32>
    %c0_19 = arith.constant 0 : index
    %c0_20 = arith.constant 0 : index
    %22 = vector.load %arg8[%c0_19, %c0_20] : memref<1x128xf32, #tpu.memory_space<vmem>>, vector<1x128xf32>
    %23 = vector.broadcast %22 : vector<1x128xf32> to vector<64x128xf32>
    %24 = arith.addf %21, %23 : vector<64x128xf32>
    %cst_21 = arith.constant 0.000000e+00 : f32
    %25 = vector.broadcast %cst_21 : f32 to vector<64x128xf32>
    %26 = arith.maximumf %24, %25 : vector<64x128xf32>
    %27 = vector.shape_cast %26 : vector<64x128xf32> to vector<1x64x128xf32>
    %cst_22 = arith.constant dense<0xFF800000> : vector<1x128xf32>
    %28 = vector.multi_reduction <maximumf>, %27, %cst_22 [1] : vector<1x64x128xf32> to vector<1x128xf32>
    %29 = arith.truncf %28 : vector<1x128xf32> to vector<1x128xbf16>
    %c0_23 = arith.constant 0 : index
    %c0_24 = arith.constant 0 : index
    %30 = vector.load %arg9[%c0_23, %c0_24] : memref<128x64xbf16, #tpu.memory_space<vmem>>, vector<128x64xbf16>
    %cst_25 = arith.constant dense<0.000000e+00> : vector<1x64xf32>
    %31 = tpu.matmul %29, %30, %cst_25 {dimension_numbers = #tpu.dot_dimension_numbers<[1], [0], [0], [1], [0, 0, 1, 1], [], []>} : vector<1x128xbf16>, vector<128x64xbf16>, vector<1x64xf32> -> vector<1x64xf32>
    %32 = arith.truncf %2 : vector<1x3xf32> to vector<1x3xbf16>
    %c0_26 = arith.constant 0 : index
    %c0_27 = arith.constant 0 : index
    %33 = vector.load %arg10[%c0_26, %c0_27] : memref<3x64xbf16, #tpu.memory_space<vmem>>, vector<3x64xbf16>
    %cst_28 = arith.constant dense<0.000000e+00> : vector<1x64xf32>
    %34 = tpu.matmul %32, %33, %cst_28 {dimension_numbers = #tpu.dot_dimension_numbers<[1], [0], [0], [1], [0, 0, 1, 1], [], []>} : vector<1x3xbf16>, vector<3x64xbf16>, vector<1x64xf32> -> vector<1x64xf32>
    %35 = arith.addf %31, %34 : vector<1x64xf32>
    %c0_29 = arith.constant 0 : index
    %c0_30 = arith.constant 0 : index
    %36 = vector.load %arg11[%c0_29, %c0_30] : memref<1x64xf32, #tpu.memory_space<vmem>>, vector<1x64xf32>
    %37 = arith.addf %35, %36 : vector<1x64xf32>
    %cst_31 = arith.constant 0.000000e+00 : f32
    %38 = vector.broadcast %cst_31 : f32 to vector<1x64xf32>
    %39 = arith.maximumf %37, %38 : vector<1x64xf32>
    %40 = arith.truncf %39 : vector<1x64xf32> to vector<1x64xbf16>
    %c0_32 = arith.constant 0 : index
    %c0_33 = arith.constant 0 : index
    %41 = vector.load %arg12[%c0_32, %c0_33] : memref<64x6xbf16, #tpu.memory_space<vmem>>, vector<64x6xbf16>
    %cst_34 = arith.constant dense<0.000000e+00> : vector<1x6xf32>
    %42 = tpu.matmul %40, %41, %cst_34 {dimension_numbers = #tpu.dot_dimension_numbers<[1], [0], [0], [1], [0, 0, 1, 1], [], []>} : vector<1x64xbf16>, vector<64x6xbf16>, vector<1x6xf32> -> vector<1x6xf32>
    %c0_35 = arith.constant 0 : index
    %c0_36 = arith.constant 0 : index
    %43 = vector.load %arg13[%c0_35, %c0_36] : memref<1x6xf32, #tpu.memory_space<vmem>>, vector<1x6xf32>
    %44 = arith.addf %42, %43 : vector<1x6xf32>
    %45 = vector.extract_strided_slice %44 {offsets = [0, 0], sizes = [1, 3], strides = [1, 1]} : vector<1x6xf32> to vector<1x3xf32>
    %46 = vector.extract_strided_slice %44 {offsets = [0, 3], sizes = [1, 3], strides = [1, 1]} : vector<1x6xf32> to vector<1x3xf32>
    %47 = arith.addf %45, %46 : vector<1x3xf32>
    %cst_37 = arith.constant 5.000000e-01 : f32
    %48 = vector.broadcast %cst_37 : f32 to vector<1x3xf32>
    %49 = arith.mulf %47, %48 : vector<1x3xf32>
    %50 = vector.shape_cast %49 : vector<1x3xf32> to vector<1x1x3xf32>
    %51 = vector.broadcast %50 : vector<1x1x3xf32> to vector<1x64x3xf32>
    %52 = arith.subf %0, %51 : vector<1x64x3xf32>
    %53 = vector.shape_cast %52 : vector<1x64x3xf32> to vector<64x3xf32>
    %c0_38 = arith.constant 0 : index
    %c0_39 = arith.constant 0 : index
    %54 = vector.load %arg14[%c0_38, %c0_39] : memref<3x32xf32, #tpu.memory_space<vmem>>, vector<3x32xf32>
    %cst_40 = arith.constant dense<0.000000e+00> : vector<64x32xf32>
    %55 = tpu.matmul %53, %54, %cst_40 {dimension_numbers = #tpu.dot_dimension_numbers<[1], [0], [0], [1], [0, 0, 1, 1], [], []>} : vector<64x3xf32>, vector<3x32xf32>, vector<64x32xf32> -> vector<64x32xf32>
    %c0_41 = arith.constant 0 : index
    %c0_42 = arith.constant 0 : index
    %56 = vector.load %arg15[%c0_41, %c0_42] : memref<1x32xf32, #tpu.memory_space<vmem>>, vector<1x32xf32>
    %57 = vector.broadcast %56 : vector<1x32xf32> to vector<64x32xf32>
    %58 = arith.addf %55, %57 : vector<64x32xf32>
    %cst_43 = arith.constant 0.000000e+00 : f32
    %59 = vector.broadcast %cst_43 : f32 to vector<64x32xf32>
    %60 = arith.maximumf %58, %59 : vector<64x32xf32>
    %61 = arith.truncf %60 : vector<64x32xf32> to vector<64x32xbf16>
    %c0_44 = arith.constant 0 : index
    %c0_45 = arith.constant 0 : index
    %62 = vector.load %arg16[%c0_44, %c0_45] : memref<32x64xbf16, #tpu.memory_space<vmem>>, vector<32x64xbf16>
    %cst_46 = arith.constant dense<0.000000e+00> : vector<64x64xf32>
    %63 = tpu.matmul %61, %62, %cst_46 {dimension_numbers = #tpu.dot_dimension_numbers<[1], [0], [0], [1], [0, 0, 1, 1], [], []>} : vector<64x32xbf16>, vector<32x64xbf16>, vector<64x64xf32> -> vector<64x64xf32>
    %c0_47 = arith.constant 0 : index
    %c0_48 = arith.constant 0 : index
    %64 = vector.load %arg17[%c0_47, %c0_48] : memref<1x64xf32, #tpu.memory_space<vmem>>, vector<1x64xf32>
    %65 = vector.broadcast %64 : vector<1x64xf32> to vector<64x64xf32>
    %66 = arith.addf %63, %65 : vector<64x64xf32>
    %cst_49 = arith.constant 0.000000e+00 : f32
    %67 = vector.broadcast %cst_49 : f32 to vector<64x64xf32>
    %68 = arith.maximumf %66, %67 : vector<64x64xf32>
    %69 = arith.truncf %68 : vector<64x64xf32> to vector<64x64xbf16>
    %c0_50 = arith.constant 0 : index
    %c0_51 = arith.constant 0 : index
    %70 = vector.load %arg18[%c0_50, %c0_51] : memref<64x128xbf16, #tpu.memory_space<vmem>>, vector<64x128xbf16>
    %cst_52 = arith.constant dense<0.000000e+00> : vector<64x128xf32>
    %71 = tpu.matmul %69, %70, %cst_52 {dimension_numbers = #tpu.dot_dimension_numbers<[1], [0], [0], [1], [0, 0, 1, 1], [], []>} : vector<64x64xbf16>, vector<64x128xbf16>, vector<64x128xf32> -> vector<64x128xf32>
    %c0_53 = arith.constant 0 : index
    %c0_54 = arith.constant 0 : index
    %72 = vector.load %arg19[%c0_53, %c0_54] : memref<1x128xf32, #tpu.memory_space<vmem>>, vector<1x128xf32>
    %73 = vector.broadcast %72 : vector<1x128xf32> to vector<64x128xf32>
    %74 = arith.addf %71, %73 : vector<64x128xf32>
    %cst_55 = arith.constant 0.000000e+00 : f32
    %75 = vector.broadcast %cst_55 : f32 to vector<64x128xf32>
    %76 = arith.maximumf %74, %75 : vector<64x128xf32>
    %77 = arith.truncf %76 : vector<64x128xf32> to vector<64x128xbf16>
    %c0_56 = arith.constant 0 : index
    %c0_57 = arith.constant 0 : index
    %78 = vector.load %arg20[%c0_56, %c0_57] : memref<128x128xbf16, #tpu.memory_space<vmem>>, vector<128x128xbf16>
    %cst_58 = arith.constant dense<0.000000e+00> : vector<64x128xf32>
    %79 = tpu.matmul %77, %78, %cst_58 {dimension_numbers = #tpu.dot_dimension_numbers<[1], [0], [0], [1], [0, 0, 1, 1], [], []>} : vector<64x128xbf16>, vector<128x128xbf16>, vector<64x128xf32> -> vector<64x128xf32>
    %c0_59 = arith.constant 0 : index
    %c0_60 = arith.constant 0 : index
    %80 = vector.load %arg21[%c0_59, %c0_60] : memref<1x128xf32, #tpu.memory_space<vmem>>, vector<1x128xf32>
    %81 = vector.broadcast %80 : vector<1x128xf32> to vector<64x128xf32>
    %82 = arith.addf %79, %81 : vector<64x128xf32>
    %cst_61 = arith.constant 0.000000e+00 : f32
    %83 = vector.broadcast %cst_61 : f32 to vector<64x128xf32>
    %84 = arith.maximumf %82, %83 : vector<64x128xf32>
    %85 = vector.shape_cast %84 : vector<64x128xf32> to vector<1x64x128xf32>
    %cst_62 = arith.constant dense<0xFF800000> : vector<1x128xf32>
    %86 = vector.multi_reduction <maximumf>, %85, %cst_62 [1] : vector<1x64x128xf32> to vector<1x128xf32>
    %87 = arith.truncf %86 : vector<1x128xf32> to vector<1x128xbf16>
    %c0_63 = arith.constant 0 : index
    %c0_64 = arith.constant 0 : index
    %88 = vector.load %arg22[%c0_63, %c0_64] : memref<128x128xbf16, #tpu.memory_space<vmem>>, vector<128x128xbf16>
    %cst_65 = arith.constant dense<0.000000e+00> : vector<1x128xf32>
    %89 = tpu.matmul %87, %88, %cst_65 {dimension_numbers = #tpu.dot_dimension_numbers<[1], [0], [0], [1], [0, 0, 1, 1], [], []>} : vector<1x128xbf16>, vector<128x128xbf16>, vector<1x128xf32> -> vector<1x128xf32>
    %90 = arith.truncf %2 : vector<1x3xf32> to vector<1x3xbf16>
    %c0_66 = arith.constant 0 : index
    %c0_67 = arith.constant 0 : index
    %91 = vector.load %arg23[%c0_66, %c0_67] : memref<3x128xbf16, #tpu.memory_space<vmem>>, vector<3x128xbf16>
    %cst_68 = arith.constant dense<0.000000e+00> : vector<1x128xf32>
    %92 = tpu.matmul %90, %91, %cst_68 {dimension_numbers = #tpu.dot_dimension_numbers<[1], [0], [0], [1], [0, 0, 1, 1], [], []>} : vector<1x3xbf16>, vector<3x128xbf16>, vector<1x128xf32> -> vector<1x128xf32>
    %93 = arith.addf %89, %92 : vector<1x128xf32>
    %c0_69 = arith.constant 0 : index
    %c0_70 = arith.constant 0 : index
    %94 = vector.load %arg24[%c0_69, %c0_70] : memref<1x128xf32, #tpu.memory_space<vmem>>, vector<1x128xf32>
    %95 = arith.addf %93, %94 : vector<1x128xf32>
    %cst_71 = arith.constant 0.000000e+00 : f32
    %96 = vector.broadcast %cst_71 : f32 to vector<1x128xf32>
    %97 = arith.maximumf %95, %96 : vector<1x128xf32>
    %98 = arith.truncf %97 : vector<1x128xf32> to vector<1x128xbf16>
    %c0_72 = arith.constant 0 : index
    %c0_73 = arith.constant 0 : index
    %99 = vector.load %arg25[%c0_72, %c0_73] : memref<128x64xbf16, #tpu.memory_space<vmem>>, vector<128x64xbf16>
    %cst_74 = arith.constant dense<0.000000e+00> : vector<1x64xf32>
    %100 = tpu.matmul %98, %99, %cst_74 {dimension_numbers = #tpu.dot_dimension_numbers<[1], [0], [0], [1], [0, 0, 1, 1], [], []>} : vector<1x128xbf16>, vector<128x64xbf16>, vector<1x64xf32> -> vector<1x64xf32>
    %c0_75 = arith.constant 0 : index
    %c0_76 = arith.constant 0 : index
    %101 = vector.load %arg26[%c0_75, %c0_76] : memref<1x64xf32, #tpu.memory_space<vmem>>, vector<1x64xf32>
    %102 = arith.addf %100, %101 : vector<1x64xf32>
    %cst_77 = arith.constant 0.000000e+00 : f32
    %103 = vector.broadcast %cst_77 : f32 to vector<1x64xf32>
    %104 = arith.maximumf %102, %103 : vector<1x64xf32>
    %105 = arith.truncf %104 : vector<1x64xf32> to vector<1x64xbf16>
    %c0_78 = arith.constant 0 : index
    %c0_79 = arith.constant 0 : index
    %106 = vector.load %arg27[%c0_78, %c0_79] : memref<64x46xbf16, #tpu.memory_space<vmem>>, vector<64x46xbf16>
    %cst_80 = arith.constant dense<0.000000e+00> : vector<1x46xf32>
    %107 = tpu.matmul %105, %106, %cst_80 {dimension_numbers = #tpu.dot_dimension_numbers<[1], [0], [0], [1], [0, 0, 1, 1], [], []>} : vector<1x64xbf16>, vector<64x46xbf16>, vector<1x46xf32> -> vector<1x46xf32>
    %c0_81 = arith.constant 0 : index
    %c0_82 = arith.constant 0 : index
    %108 = vector.load %arg28[%c0_81, %c0_82] : memref<1x46xf32, #tpu.memory_space<vmem>>, vector<1x46xf32>
    %109 = arith.addf %107, %108 : vector<1x46xf32>
    %110 = vector.shape_cast %44 : vector<1x6xf32> to vector<1x1x6xf32>
    %c0_83 = arith.constant 0 : index
    %c0_84 = arith.constant 0 : index
    %c0_85 = arith.constant 0 : index
    %111 = vector.load %arg29[%c0_83, %c0_84, %c0_85] : memref<1x1x6xf32, #tpu.memory_space<vmem>>, vector<1x1x6xf32>
    tpu.vector_store %arg29[%c0_83, %c0_84, %c0_85], %110 {strides = array<i32>} : memref<1x1x6xf32, #tpu.memory_space<vmem>>, vector<1x1x6xf32>,
    %112 = vector.shape_cast %109 : vector<1x46xf32> to vector<1x1x46xf32>
    %c0_86 = arith.constant 0 : index
    %c0_87 = arith.constant 0 : index
    %c0_88 = arith.constant 0 : index
    %113 = vector.load %arg30[%c0_86, %c0_87, %c0_88] : memref<1x1x46xf32, #tpu.memory_space<vmem>>, vector<1x1x46xf32>
    tpu.vector_store %arg30[%c0_86, %c0_87, %c0_88], %112 {strides = array<i32>} : memref<1x1x46xf32, #tpu.memory_space<vmem>>, vector<1x1x46xf32>,
    return
  }
  func.func @transform_0(%arg0: i32) -> (i32, i32, i32) {
    %c0_i32 = arith.constant 0 : i32
    %c0_i32_0 = arith.constant 0 : i32
    %c0_i32_1 = arith.constant 0 : i32
    return %arg0, %c0_i32, %c0_i32_0 : i32, i32, i32
  }
  func.func @transform_1(%arg0: i32) -> (i32, i32, i32) {
    %c0_i32 = arith.constant 0 : i32
    %c0_i32_0 = arith.constant 0 : i32
    %c0_i32_1 = arith.constant 0 : i32
    return %arg0, %c0_i32, %c0_i32_0 : i32, i32, i32
  }
  func.func @transform_2(%arg0: i32) -> (i32, i32) {
    %c0_i32 = arith.constant 0 : i32
    %c0_i32_0 = arith.constant 0 : i32
    %c0_i32_1 = arith.constant 0 : i32
    return %c0_i32, %c0_i32_0 : i32, i32
  }
  func.func @transform_3(%arg0: i32) -> (i32, i32) {
    %c0_i32 = arith.constant 0 : i32
    %c0_i32_0 = arith.constant 0 : i32
    %c0_i32_1 = arith.constant 0 : i32
    return %c0_i32, %c0_i32_0 : i32, i32
  }
  func.func @transform_4(%arg0: i32) -> (i32, i32) {
    %c0_i32 = arith.constant 0 : i32
    %c0_i32_0 = arith.constant 0 : i32
    %c0_i32_1 = arith.constant 0 : i32
    return %c0_i32, %c0_i32_0 : i32, i32
  }
  func.func @transform_5(%arg0: i32) -> (i32, i32) {
    %c0_i32 = arith.constant 0 : i32
    %c0_i32_0 = arith.constant 0 : i32
    %c0_i32_1 = arith.constant 0 : i32
    return %c0_i32, %c0_i32_0 : i32, i32
  }
  func.func @transform_6(%arg0: i32) -> (i32, i32) {
    %c0_i32 = arith.constant 0 : i32
    %c0_i32_0 = arith.constant 0 : i32
    %c0_i32_1 = arith.constant 0 : i32
    return %c0_i32, %c0_i32_0 : i32, i32
  }
  func.func @transform_7(%arg0: i32) -> (i32, i32) {
    %c0_i32 = arith.constant 0 : i32
    %c0_i32_0 = arith.constant 0 : i32
    %c0_i32_1 = arith.constant 0 : i32
    return %c0_i32, %c0_i32_0 : i32, i32
  }
  func.func @transform_8(%arg0: i32) -> (i32, i32) {
    %c0_i32 = arith.constant 0 : i32
    %c0_i32_0 = arith.constant 0 : i32
    %c0_i32_1 = arith.constant 0 : i32
    return %c0_i32, %c0_i32_0 : i32, i32
  }
  func.func @transform_9(%arg0: i32) -> (i32, i32) {
    %c0_i32 = arith.constant 0 : i32
    %c0_i32_0 = arith.constant 0 : i32
    %c0_i32_1 = arith.constant 0 : i32
    return %c0_i32, %c0_i32_0 : i32, i32
  }
  func.func @transform_10(%arg0: i32) -> (i32, i32) {
    %c0_i32 = arith.constant 0 : i32
    %c0_i32_0 = arith.constant 0 : i32
    %c0_i32_1 = arith.constant 0 : i32
    return %c0_i32, %c0_i32_0 : i32, i32
  }
  func.func @transform_11(%arg0: i32) -> (i32, i32) {
    %c0_i32 = arith.constant 0 : i32
    %c0_i32_0 = arith.constant 0 : i32
    %c0_i32_1 = arith.constant 0 : i32
    return %c0_i32, %c0_i32_0 : i32, i32
  }
  func.func @transform_12(%arg0: i32) -> (i32, i32) {
    %c0_i32 = arith.constant 0 : i32
    %c0_i32_0 = arith.constant 0 : i32
    %c0_i32_1 = arith.constant 0 : i32
    return %c0_i32, %c0_i32_0 : i32, i32
  }
  func.func @transform_13(%arg0: i32) -> (i32, i32) {
    %c0_i32 = arith.constant 0 : i32
    %c0_i32_0 = arith.constant 0 : i32
    %c0_i32_1 = arith.constant 0 : i32
    return %c0_i32, %c0_i32_0 : i32, i32
  }
  func.func @transform_14(%arg0: i32) -> (i32, i32) {
    %c0_i32 = arith.constant 0 : i32
    %c0_i32_0 = arith.constant 0 : i32
    %c0_i32_1 = arith.constant 0 : i32
    return %c0_i32, %c0_i32_0 : i32, i32
  }
  func.func @transform_15(%arg0: i32) -> (i32, i32) {
    %c0_i32 = arith.constant 0 : i32
    %c0_i32_0 = arith.constant 0 : i32
    %c0_i32_1 = arith.constant 0 : i32
    return %c0_i32, %c0_i32_0 : i32, i32
  }
  func.func @transform_16(%arg0: i32) -> (i32, i32) {
    %c0_i32 = arith.constant 0 : i32
    %c0_i32_0 = arith.constant 0 : i32
    %c0_i32_1 = arith.constant 0 : i32
    return %c0_i32, %c0_i32_0 : i32, i32
  }
  func.func @transform_17(%arg0: i32) -> (i32, i32) {
    %c0_i32 = arith.constant 0 : i32
    %c0_i32_0 = arith.constant 0 : i32
    %c0_i32_1 = arith.constant 0 : i32
    return %c0_i32, %c0_i32_0 : i32, i32
  }
  func.func @transform_18(%arg0: i32) -> (i32, i32) {
    %c0_i32 = arith.constant 0 : i32
    %c0_i32_0 = arith.constant 0 : i32
    %c0_i32_1 = arith.constant 0 : i32
    return %c0_i32, %c0_i32_0 : i32, i32
  }
  func.func @transform_19(%arg0: i32) -> (i32, i32) {
    %c0_i32 = arith.constant 0 : i32
    %c0_i32_0 = arith.constant 0 : i32
    %c0_i32_1 = arith.constant 0 : i32
    return %c0_i32, %c0_i32_0 : i32, i32
  }
  func.func @transform_20(%arg0: i32) -> (i32, i32) {
    %c0_i32 = arith.constant 0 : i32
    %c0_i32_0 = arith.constant 0 : i32
    %c0_i32_1 = arith.constant 0 : i32
    return %c0_i32, %c0_i32_0 : i32, i32
  }
  func.func @transform_21(%arg0: i32) -> (i32, i32) {
    %c0_i32 = arith.constant 0 : i32
    %c0_i32_0 = arith.constant 0 : i32
    %c0_i32_1 = arith.constant 0 : i32
    return %c0_i32, %c0_i32_0 : i32, i32
  }
  func.func @transform_22(%arg0: i32) -> (i32, i32) {
    %c0_i32 = arith.constant 0 : i32
    %c0_i32_0 = arith.constant 0 : i32
    %c0_i32_1 = arith.constant 0 : i32
    return %c0_i32, %c0_i32_0 : i32, i32
  }
  func.func @transform_23(%arg0: i32) -> (i32, i32) {
    %c0_i32 = arith.constant 0 : i32
    %c0_i32_0 = arith.constant 0 : i32
    %c0_i32_1 = arith.constant 0 : i32
    return %c0_i32, %c0_i32_0 : i32, i32
  }
  func.func @transform_24(%arg0: i32) -> (i32, i32) {
    %c0_i32 = arith.constant 0 : i32
    %c0_i32_0 = arith.constant 0 : i32
    %c0_i32_1 = arith.constant 0 : i32
    return %c0_i32, %c0_i32_0 : i32, i32
  }
  func.func @transform_25(%arg0: i32) -> (i32, i32) {
    %c0_i32 = arith.constant 0 : i32
    %c0_i32_0 = arith.constant 0 : i32
    %c0_i32_1 = arith.constant 0 : i32
    return %c0_i32, %c0_i32_0 : i32, i32
  }
  func.func @transform_26(%arg0: i32) -> (i32, i32) {
    %c0_i32 = arith.constant 0 : i32
    %c0_i32_0 = arith.constant 0 : i32
    %c0_i32_1 = arith.constant 0 : i32
    return %c0_i32, %c0_i32_0 : i32, i32
  }
  func.func @transform_27(%arg0: i32) -> (i32, i32) {
    %c0_i32 = arith.constant 0 : i32
    %c0_i32_0 = arith.constant 0 : i32
    %c0_i32_1 = arith.constant 0 : i32
    return %c0_i32, %c0_i32_0 : i32, i32
  }
  func.func @transform_28(%arg0: i32) -> (i32, i32, i32) {
    %c0_i32 = arith.constant 0 : i32
    %c0_i32_0 = arith.constant 0 : i32
    %c0_i32_1 = arith.constant 0 : i32
    return %arg0, %c0_i32, %c0_i32_0 : i32, i32, i32
  }
  func.func @transform_29(%arg0: i32) -> (i32, i32, i32) {
    %c0_i32 = arith.constant 0 : i32
    %c0_i32_0 = arith.constant 0 : i32
    %c0_i32_1 = arith.constant 0 : i32
    return %arg0, %c0_i32, %c0_i32_0 : i32, i32, i32
  }
}

</mosaic_0001>

<llo_original>
// kernel: frustum_point_dan_full_forward.2
$region0: #{frustum_point_dan_full_forward.2}
  #allocation0 [shape = 'u32[]', space=smem, size = 0x4, offset = 0x4, fixed_abs, tag = 'smem constant byte address 0x4 - core index']
  #allocation1 [shape = 'u32[144,128]{1,0:T(1,128)}', space=vmem, size = 0x12000, scoped, tag = 'internal scratch']
  %s0 = inlined_call_operand.vmem [shape: f32[2,128,4], index: 0, kind: input, shape index: {}]
  %s1 = inlined_call_operand.vmem [shape: f32[2,1,3], index: 1, kind: input, shape index: {}]
  %s2 = inlined_call_operand.vmem [shape: f32[4,32], index: 2, kind: input, shape index: {}]
  %s3 = inlined_call_operand.vmem [shape: f32[1,32], index: 3, kind: input, shape index: {}]
  %s4 = inlined_call_operand.vmem [shape: bf16[32,32], index: 4, kind: input, shape index: {}]
  %s5 = inlined_call_operand.vmem [shape: f32[1,32], index: 5, kind: input, shape index: {}]
  %s6 = inlined_call_operand.vmem [shape: bf16[32,64], index: 6, kind: input, shape index: {}]
  %s7 = inlined_call_operand.vmem [shape: f32[1,64], index: 7, kind: input, shape index: {}]
  %s8 = inlined_call_operand.vmem [shape: bf16[64,64], index: 8, kind: input, shape index: {}]
  %s9 = inlined_call_operand.vmem [shape: f32[1,64], index: 9, kind: input, shape index: {}]
  %s10 = inlined_call_operand.vmem [shape: bf16[64,128], index: 10, kind: input, shape index: {}]
  %s11 = inlined_call_operand.vmem [shape: f32[1,128], index: 11, kind: input, shape index: {}]
  %s12 = inlined_call_operand.vmem [shape: bf16[64,128], index: 12, kind: input, shape index: {}]
  %s13 = inlined_call_operand.vmem [shape: bf16[128,128], index: 13, kind: input, shape index: {}]
  %s14 = inlined_call_operand.vmem [shape: bf16[3,128], index: 14, kind: input, shape index: {}]
  %s15 = inlined_call_operand.vmem [shape: f32[1,128], index: 15, kind: input, shape index: {}]
  %s16 = inlined_call_operand.vmem [shape: bf16[128,64], index: 16, kind: input, shape index: {}]
  %s17 = inlined_call_operand.vmem [shape: f32[1,64], index: 17, kind: input, shape index: {}]
  %s18 = inlined_call_operand.vmem [shape: bf16[64,64], index: 18, kind: input, shape index: {}]
  %s19 = inlined_call_operand.vmem [shape: f32[1,64], index: 19, kind: input, shape index: {}]
  %s20 = inlined_call_operand.vmem [shape: bf16[64,4], index: 20, kind: input, shape index: {}]
  %s21 = inlined_call_operand.vmem [shape: f32[1,4], index: 21, kind: input, shape index: {}]
  %s22 = inlined_call_operand.vmem [shape: f32[2,4,128], index: 22, kind: output, shape index: {0}]
  %s23 = inlined_call_operand.vmem [shape: f32[2,1,3], index: 23, kind: output, shape index: {1}]
  %24 = xla_tuple %s22, %s23
  %s25 = sld [smem:[#allocation0]]
  $region129: #{frustum_point_dan_full_forward.2} parent=0
    _
  %s27 = ssub.s32 1, %s25
  %s28 = scalar_select 0, %s27, %s25
  loop: start=0, step=1, limit=4
  $region2: #{frustum_point_dan_full_forward.2} parent=0 // loop_pre_header
    _
  $region3: #{frustum_point_dan_full_forward.2} parent=0 // loop_header
    %s30 = sphi 0, %s34
    %p31 = scmp.ge.s32.totalorder %s30, 4
    %s40 = sphi 0, %s42
    %s43 = sphi 0, %s40
    %s44 = sphi 0, %s43
    %s60 = sphi 0, %s44
    %s66 = sphi 0, %s68
    %s69 = sphi 0, %s66
    %s70 = sphi 0, %s69
    %s86 = sphi 0, %s70
    %s90 = sphi 0, %s90
    %s92 = sphi 0, %s90
    %s93 = sphi 0, %s92
    %s107 = sphi 0, %s93
    %s111 = sphi 0, %s111
    %s113 = sphi 0, %s111
    %s114 = sphi 0, %s113
    %s128 = sphi 0, %s114
    %s132 = sphi 0, %s132
    %s134 = sphi 0, %s132
    %s135 = sphi 0, %s134
    %s149 = sphi 0, %s135
    %s153 = sphi 0, %s153
    %s155 = sphi 0, %s153
    %s156 = sphi 0, %s155
    %s170 = sphi 0, %s156
    %s174 = sphi 0, %s174
    %s176 = sphi 0, %s174
    %s177 = sphi 0, %s176
    %s191 = sphi 0, %s177
    %s195 = sphi 0, %s195
    %s197 = sphi 0, %s195
    %s198 = sphi 0, %s197
    %s212 = sphi 0, %s198
    %s216 = sphi 0, %s216
    %s218 = sphi 0, %s216
    %s219 = sphi 0, %s218
    %s233 = sphi 0, %s219
    %s237 = sphi 0, %s237
    %s239 = sphi 0, %s237
    %s240 = sphi 0, %s239
    %s254 = sphi 0, %s240
    %s258 = sphi 0, %s258
    %s260 = sphi 0, %s258
    %s261 = sphi 0, %s260
    %s275 = sphi 0, %s261
    %s279 = sphi 0, %s279
    %s281 = sphi 0, %s279
    %s282 = sphi 0, %s281
    %s296 = sphi 0, %s282
    %s300 = sphi 0, %s300
    %s302 = sphi 0, %s300
    %s303 = sphi 0, %s302
    %s317 = sphi 0, %s303
    %s321 = sphi 0, %s321
    %s323 = sphi 0, %s321
    %s324 = sphi 0, %s323
    %s338 = sphi 0, %s324
    %s342 = sphi 0, %s342
    %s344 = sphi 0, %s342
    %s345 = sphi 0, %s344
    %s359 = sphi 0, %s345
    %s363 = sphi 0, %s363
    %s365 = sphi 0, %s363
    %s366 = sphi 0, %s365
    %s380 = sphi 0, %s366
    %s384 = sphi 0, %s384
    %s386 = sphi 0, %s384
    %s387 = sphi 0, %s386
    %s401 = sphi 0, %s387
    %s405 = sphi 0, %s405
    %s407 = sphi 0, %s405
    %s408 = sphi 0, %s407
    %s422 = sphi 0, %s408
    %s426 = sphi 0, %s426
    %s428 = sphi 0, %s426
    %s429 = sphi 0, %s428
    %s443 = sphi 0, %s429
    %s447 = sphi 0, %s447
    %s449 = sphi 0, %s447
    %s450 = sphi 0, %s449
    %s464 = sphi 0, %s450
    %s468 = sphi 0, %s468
    %s470 = sphi 0, %s468
    %s471 = sphi 0, %s470
    %s485 = sphi 0, %s471
    %s489 = sphi 0, %s489
    %s491 = sphi 0, %s489
    %s492 = sphi 0, %s491
    %s506 = sphi 0, %s492
    %s512 = sphi 0, %s514
    %s515 = sphi 0, %s512
    %s516 = sphi 0, %s515
    %s532 = sphi 0, %s516
    %s538 = sphi 0, %s540
    %s541 = sphi 0, %s538
    %s542 = sphi 0, %s541
    %s558 = sphi 0, %s542
  $region4: #{frustum_point_dan_full_forward.2} parent=0 // loop_header_branch
    %33 = sbr.rel (%p31) target = $region8
  $region5: #{frustum_point_dan_full_forward.2} parent=0 // loop_body
    %s35 = ssub.s32 %s30, 1
    %s36 = ssub.s32 %s30, 2
    %s37 = sadd.s32 %s30, 1
    %s38 = ssub.s32 %s30, %s37
    %p39 = scmp.eq.s32.totalorder %s38, 0
    %s41 = sadd.s32 %s40, 1
    %s42 = scalar_select %p39, %s40, %s41
    %p45 = pneg %p39
    %p46 = scmp.eq.s32.totalorder %s30, 1
    %p47 = por %p45, %p46
    %p48 = scmp.ne.s32.totalorder %s40, %s43
    %p49 = scmp.eq.s32.totalorder %s30, 0
    %p50 = por %p48, %p49
    %p51 = scmp.ne.s32.totalorder %s40, %s43
    %p52 = scmp.eq.s32.totalorder %s35, 1
    %p53 = por %p51, %p52
    %p54 = scmp.ne.s32.totalorder %s43, %s44
    %p55 = scmp.eq.s32.totalorder %s35, 0
    %p56 = por %p54, %p55
    %p57 = scmp.ne.s32.totalorder %s43, %s44
    %p58 = scmp.eq.s32.totalorder %s36, 1
    %p59 = por %p57, %p58
    %p61 = scmp.ne.s32.totalorder %s44, %s60
    %p62 = scmp.eq.s32.totalorder %s36, 0
    %p63 = por %p61, %p62
    %s64 = ssub.s32 %s30, %s37
    %p65 = scmp.eq.s32.totalorder %s64, 0
    %s67 = sadd.s32 %s66, 1
    %s68 = scalar_select %p65, %s66, %s67
    %p71 = pneg %p65
    %p72 = scmp.eq.s32.totalorder %s30, 1
    %p73 = por %p71, %p72
    %p74 = scmp.ne.s32.totalorder %s66, %s69
    %p75 = scmp.eq.s32.totalorder %s30, 0
    %p76 = por %p74, %p75
    %p77 = scmp.ne.s32.totalorder %s66, %s69
    %p78 = scmp.eq.s32.totalorder %s35, 1
    %p79 = por %p77, %p78
    %p80 = scmp.ne.s32.totalorder %s69, %s70
    %p81 = scmp.eq.s32.totalorder %s35, 0
    %p82 = por %p80, %p81
    %p83 = scmp.ne.s32.totalorder %s69, %s70
    %p84 = scmp.eq.s32.totalorder %s36, 1
    %p85 = por %p83, %p84
    %p87 = scmp.ne.s32.totalorder %s70, %s86
    %p88 = scmp.eq.s32.totalorder %s36, 0
    %p89 = por %p87, %p88
    %s91 = sadd.s32 %s90, 1
    %p94 = scmp.eq.s32.totalorder %s30, 1
    %p95 = scmp.ne.s32.totalorder %s90, %s92
    %p96 = scmp.eq.s32.totalorder %s30, 0
    %p97 = por %p95, %p96
    %p98 = scmp.ne.s32.totalorder %s90, %s92
    %p99 = scmp.eq.s32.totalorder %s35, 1
    %p100 = por %p98, %p99
    %p101 = scmp.ne.s32.totalorder %s92, %s93
    %p102 = scmp.eq.s32.totalorder %s35, 0
    %p103 = por %p101, %p102
    %p104 = scmp.ne.s32.totalorder %s92, %s93
    %p105 = scmp.eq.s32.totalorder %s36, 1
    %p106 = por %p104, %p105
    %p108 = scmp.ne.s32.totalorder %s93, %s107
    %p109 = scmp.eq.s32.totalorder %s36, 0
    %p110 = por %p108, %p109
    %s112 = sadd.s32 %s111, 1
    %p115 = scmp.eq.s32.totalorder %s30, 1
    %p116 = scmp.ne.s32.totalorder %s111, %s113
    %p117 = scmp.eq.s32.totalorder %s30, 0
    %p118 = por %p116, %p117
    %p119 = scmp.ne.s32.totalorder %s111, %s113
    %p120 = scmp.eq.s32.totalorder %s35, 1
    %p121 = por %p119, %p120
    %p122 = scmp.ne.s32.totalorder %s113, %s114
    %p123 = scmp.eq.s32.totalorder %s35, 0
    %p124 = por %p122, %p123
    %p125 = scmp.ne.s32.totalorder %s113, %s114
    %p126 = scmp.eq.s32.totalorder %s36, 1
    %p127 = por %p125, %p126
    %p129 = scmp.ne.s32.totalorder %s114, %s128
    %p130 = scmp.eq.s32.totalorder %s36, 0
    %p131 = por %p129, %p130
    %s133 = sadd.s32 %s132, 1
    %p136 = scmp.eq.s32.totalorder %s30, 1
    %p137 = scmp.ne.s32.totalorder %s132, %s134
    %p138 = scmp.eq.s32.totalorder %s30, 0
    %p139 = por %p137, %p138
    %p140 = scmp.ne.s32.totalorder %s132, %s134
    %p141 = scmp.eq.s32.totalorder %s35, 1
    %p142 = por %p140, %p141
    %p143 = scmp.ne.s32.totalorder %s134, %s135
    %p144 = scmp.eq.s32.totalorder %s35, 0
    %p145 = por %p143, %p144
    %p146 = scmp.ne.s32.totalorder %s134, %s135
    %p147 = scmp.eq.s32.totalorder %s36, 1
    %p148 = por %p146, %p147
    %p150 = scmp.ne.s32.totalorder %s135, %s149
    %p151 = scmp.eq.s32.totalorder %s36, 0
    %p152 = por %p150, %p151
    %s154 = sadd.s32 %s153, 1
    %p157 = scmp.eq.s32.totalorder %s30, 1
    %p158 = scmp.ne.s32.totalorder %s153, %s155
    %p159 = scmp.eq.s32.totalorder %s30, 0
    %p160 = por %p158, %p159
    %p161 = scmp.ne.s32.totalorder %s153, %s155
    %p162 = scmp.eq.s32.totalorder %s35, 1
    %p163 = por %p161, %p162
    %p164 = scmp.ne.s32.totalorder %s155, %s156
    %p165 = scmp.eq.s32.totalorder %s35, 0
    %p166 = por %p164, %p165
    %p167 = scmp.ne.s32.totalorder %s155, %s156
    %p168 = scmp.eq.s32.totalorder %s36, 1
    %p169 = por %p167, %p168
    %p171 = scmp.ne.s32.totalorder %s156, %s170
    %p172 = scmp.eq.s32.totalorder %s36, 0
    %p173 = por %p171, %p172
    %s175 = sadd.s32 %s174, 1
    %p178 = scmp.eq.s32.totalorder %s30, 1
    %p179 = scmp.ne.s32.totalorder %s174, %s176
    %p180 = scmp.eq.s32.totalorder %s30, 0
    %p181 = por %p179, %p180
    %p182 = scmp.ne.s32.totalorder %s174, %s176
    %p183 = scmp.eq.s32.totalorder %s35, 1
    %p184 = por %p182, %p183
    %p185 = scmp.ne.s32.totalorder %s176, %s177
    %p186 = scmp.eq.s32.totalorder %s35, 0
    %p187 = por %p185, %p186
    %p188 = scmp.ne.s32.totalorder %s176, %s177
    %p189 = scmp.eq.s32.totalorder %s36, 1
    %p190 = por %p188, %p189
    %p192 = scmp.ne.s32.totalorder %s177, %s191
    %p193 = scmp.eq.s32.totalorder %s36, 0
    %p194 = por %p192, %p193
    %s196 = sadd.s32 %s195, 1
    %p199 = scmp.eq.s32.totalorder %s30, 1
    %p200 = scmp.ne.s32.totalorder %s195, %s197
    %p201 = scmp.eq.s32.totalorder %s30, 0
    %p202 = por %p200, %p201
    %p203 = scmp.ne.s32.totalorder %s195, %s197
    %p204 = scmp.eq.s32.totalorder %s35, 1
    %p205 = por %p203, %p204
    %p206 = scmp.ne.s32.totalorder %s197, %s198
    %p207 = scmp.eq.s32.totalorder %s35, 0
    %p208 = por %p206, %p207
    %p209 = scmp.ne.s32.totalorder %s197, %s198
    %p210 = scmp.eq.s32.totalorder %s36, 1
    %p211 = por %p209, %p210
    %p213 = scmp.ne.s32.totalorder %s198, %s212
    %p214 = scmp.eq.s32.totalorder %s36, 0
    %p215 = por %p213, %p214
    %s217 = sadd.s32 %s216, 1
    %p220 = scmp.eq.s32.totalorder %s30, 1
    %p221 = scmp.ne.s32.totalorder %s216, %s218
    %p222 = scmp.eq.s32.totalorder %s30, 0
    %p223 = por %p221, %p222
    %p224 = scmp.ne.s32.totalorder %s216, %s218
    %p225 = scmp.eq.s32.totalorder %s35, 1
    %p226 = por %p224, %p225
    %p227 = scmp.ne.s32.totalorder %s218, %s219
    %p228 = scmp.eq.s32.totalorder %s35, 0
    %p229 = por %p227, %p228
    %p230 = scmp.ne.s32.totalorder %s218, %s219
    %p231 = scmp.eq.s32.totalorder %s36, 1
    %p232 = por %p230, %p231
    %p234 = scmp.ne.s32.totalorder %s219, %s233
    %p235 = scmp.eq.s32.totalorder %s36, 0
    %p236 = por %p234, %p235
    %s238 = sadd.s32 %s237, 1
    %p241 = scmp.eq.s32.totalorder %s30, 1
    %p242 = scmp.ne.s32.totalorder %s237, %s239
    %p243 = scmp.eq.s32.totalorder %s30, 0
    %p244 = por %p242, %p243
    %p245 = scmp.ne.s32.totalorder %s237, %s239
    %p246 = scmp.eq.s32.totalorder %s35, 1
    %p247 = por %p245, %p246
    %p248 = scmp.ne.s32.totalorder %s239, %s240
    %p249 = scmp.eq.s32.totalorder %s35, 0
    %p250 = por %p248, %p249
    %p251 = scmp.ne.s32.totalorder %s239, %s240
    %p252 = scmp.eq.s32.totalorder %s36, 1
    %p253 = por %p251, %p252
    %p255 = scmp.ne.s32.totalorder %s240, %s254
    %p256 = scmp.eq.s32.totalorder %s36, 0
    %p257 = por %p255, %p256
    %s259 = sadd.s32 %s258, 1
    %p262 = scmp.eq.s32.totalorder %s30, 1
    %p263 = scmp.ne.s32.totalorder %s258, %s260
    %p264 = scmp.eq.s32.totalorder %s30, 0
    %p265 = por %p263, %p264
    %p266 = scmp.ne.s32.totalorder %s258, %s260
    %p267 = scmp.eq.s32.totalorder %s35, 1
    %p268 = por %p266, %p267
    %p269 = scmp.ne.s32.totalorder %s260, %s261
    %p270 = scmp.eq.s32.totalorder %s35, 0
    %p271 = por %p269, %p270
    %p272 = scmp.ne.s32.totalorder %s260, %s261
    %p273 = scmp.eq.s32.totalorder %s36, 1
    %p274 = por %p272, %p273
    %p276 = scmp.ne.s32.totalorder %s261, %s275
    %p277 = scmp.eq.s32.totalorder %s36, 0
    %p278 = por %p276, %p277
    %s280 = sadd.s32 %s279, 1
    %p283 = scmp.eq.s32.totalorder %s30, 1
    %p284 = scmp.ne.s32.totalorder %s279, %s281
    %p285 = scmp.eq.s32.totalorder %s30, 0
    %p286 = por %p284, %p285
    %p287 = scmp.ne.s32.totalorder %s279, %s281
    %p288 = scmp.eq.s32.totalorder %s35, 1
    %p289 = por %p287, %p288
    %p290 = scmp.ne.s32.totalorder %s281, %s282
    %p291 = scmp.eq.s32.totalorder %s35, 0
    %p292 = por %p290, %p291
    %p293 = scmp.ne.s32.totalorder %s281, %s282
    %p294 = scmp.eq.s32.totalorder %s36, 1
    %p295 = por %p293, %p294
    %p297 = scmp.ne.s32.totalorder %s282, %s296
    %p298 = scmp.eq.s32.totalorder %s36, 0
    %p299 = por %p297, %p298
    %s301 = sadd.s32 %s300, 1
    %p304 = scmp.eq.s32.totalorder %s30, 1
    %p305 = scmp.ne.s32.totalorder %s300, %s302
    %p306 = scmp.eq.s32.totalorder %s30, 0
    %p307 = por %p305, %p306
    %p308 = scmp.ne.s32.totalorder %s300, %s302
    %p309 = scmp.eq.s32.totalorder %s35, 1
    %p310 = por %p308, %p309
    %p311 = scmp.ne.s32.totalorder %s302, %s303
    %p312 = scmp.eq.s32.totalorder %s35, 0
    %p313 = por %p311, %p312
    %p314 = scmp.ne.s32.totalorder %s302, %s303
    %p315 = scmp.eq.s32.totalorder %s36, 1
    %p316 = por %p314, %p315
    %p318 = scmp.ne.s32.totalorder %s303, %s317
    %p319 = scmp.eq.s32.totalorder %s36, 0
    %p320 = por %p318, %p319
    %s322 = sadd.s32 %s321, 1
    %p325 = scmp.eq.s32.totalorder %s30, 1
    %p326 = scmp.ne.s32.totalorder %s321, %s323
    %p327 = scmp.eq.s32.totalorder %s30, 0
    %p328 = por %p326, %p327
    %p329 = scmp.ne.s32.totalorder %s321, %s323
    %p330 = scmp.eq.s32.totalorder %s35, 1
    %p331 = por %p329, %p330
    %p332 = scmp.ne.s32.totalorder %s323, %s324
    %p333 = scmp.eq.s32.totalorder %s35, 0
    %p334 = por %p332, %p333
    %p335 = scmp.ne.s32.totalorder %s323, %s324
    %p336 = scmp.eq.s32.totalorder %s36, 1
    %p337 = por %p335, %p336
    %p339 = scmp.ne.s32.totalorder %s324, %s338
    %p340 = scmp.eq.s32.totalorder %s36, 0
    %p341 = por %p339, %p340
    %s343 = sadd.s32 %s342, 1
    %p346 = scmp.eq.s32.totalorder %s30, 1
    %p347 = scmp.ne.s32.totalorder %s342, %s344
    %p348 = scmp.eq.s32.totalorder %s30, 0
    %p349 = por %p347, %p348
    %p350 = scmp.ne.s32.totalorder %s342, %s344
    %p351 = scmp.eq.s32.totalorder %s35, 1
    %p352 = por %p350, %p351
    %p353 = scmp.ne.s32.totalorder %s344, %s345
    %p354 = scmp.eq.s32.totalorder %s35, 0
    %p355 = por %p353, %p354
    %p356 = scmp.ne.s32.totalorder %s344, %s345
    %p357 = scmp.eq.s32.totalorder %s36, 1
    %p358 = por %p356, %p357
    %p360 = scmp.ne.s32.totalorder %s345, %s359
    %p361 = scmp.eq.s32.totalorder %s36, 0
    %p362 = por %p360, %p361
    %s364 = sadd.s32 %s363, 1
    %p367 = scmp.eq.s32.totalorder %s30, 1
    %p368 = scmp.ne.s32.totalorder %s363, %s365
    %p369 = scmp.eq.s32.totalorder %s30, 0
    %p370 = por %p368, %p369
    %p371 = scmp.ne.s32.totalorder %s363, %s365
    %p372 = scmp.eq.s32.totalorder %s35, 1
    %p373 = por %p371, %p372
    %p374 = scmp.ne.s32.totalorder %s365, %s366
    %p375 = scmp.eq.s32.totalorder %s35, 0
    %p376 = por %p374, %p375
    %p377 = scmp.ne.s32.totalorder %s365, %s366
    %p378 = scmp.eq.s32.totalorder %s36, 1
    %p379 = por %p377, %p378
    %p381 = scmp.ne.s32.totalorder %s366, %s380
    %p382 = scmp.eq.s32.totalorder %s36, 0
    %p383 = por %p381, %p382
    %s385 = sadd.s32 %s384, 1
    %p388 = scmp.eq.s32.totalorder %s30, 1
    %p389 = scmp.ne.s32.totalorder %s384, %s386
    %p390 = scmp.eq.s32.totalorder %s30, 0
    %p391 = por %p389, %p390
    %p392 = scmp.ne.s32.totalorder %s384, %s386
    %p393 = scmp.eq.s32.totalorder %s35, 1
    %p394 = por %p392, %p393
    %p395 = scmp.ne.s32.totalorder %s386, %s387
    %p396 = scmp.eq.s32.totalorder %s35, 0
    %p397 = por %p395, %p396
    %p398 = scmp.ne.s32.totalorder %s386, %s387
    %p399 = scmp.eq.s32.totalorder %s36, 1
    %p400 = por %p398, %p399
    %p402 = scmp.ne.s32.totalorder %s387, %s401
    %p403 = scmp.eq.s32.totalorder %s36, 0
    %p404 = por %p402, %p403
    %s406 = sadd.s32 %s405, 1
    %p409 = scmp.eq.s32.totalorder %s30, 1
    %p410 = scmp.ne.s32.totalorder %s405, %s407
    %p411 = scmp.eq.s32.totalorder %s30, 0
    %p412 = por %p410, %p411
    %p413 = scmp.ne.s32.totalorder %s405, %s407
    %p414 = scmp.eq.s32.totalorder %s35, 1
    %p415 = por %p413, %p414
    %p416 = scmp.ne.s32.totalorder %s407, %s408
    %p417 = scmp.eq.s32.totalorder %s35, 0
    %p418 = por %p416, %p417
    %p419 = scmp.ne.s32.totalorder %s407, %s408
    %p420 = scmp.eq.s32.totalorder %s36, 1
    %p421 = por %p419, %p420
    %p423 = scmp.ne.s32.totalorder %s408, %s422
    %p424 = scmp.eq.s32.totalorder %s36, 0
    %p425 = por %p423, %p424
    %s427 = sadd.s32 %s426, 1
    %p430 = scmp.eq.s32.totalorder %s30, 1
    %p431 = scmp.ne.s32.totalorder %s426, %s428
    %p432 = scmp.eq.s32.totalorder %s30, 0
    %p433 = por %p431, %p432
    %p434 = scmp.ne.s32.totalorder %s426, %s428
    %p435 = scmp.eq.s32.totalorder %s35, 1
    %p436 = por %p434, %p435
    %p437 = scmp.ne.s32.totalorder %s428, %s429
    %p438 = scmp.eq.s32.totalorder %s35, 0
    %p439 = por %p437, %p438
    %p440 = scmp.ne.s32.totalorder %s428, %s429
    %p441 = scmp.eq.s32.totalorder %s36, 1
    %p442 = por %p440, %p441
    %p444 = scmp.ne.s32.totalorder %s429, %s443
    %p445 = scmp.eq.s32.totalorder %s36, 0
    %p446 = por %p444, %p445
    %s448 = sadd.s32 %s447, 1
    %p451 = scmp.eq.s32.totalorder %s30, 1
    %p452 = scmp.ne.s32.totalorder %s447, %s449
    %p453 = scmp.eq.s32.totalorder %s30, 0
    %p454 = por %p452, %p453
    %p455 = scmp.ne.s32.totalorder %s447, %s449
    %p456 = scmp.eq.s32.totalorder %s35, 1
    %p457 = por %p455, %p456
    %p458 = scmp.ne.s32.totalorder %s449, %s450
    %p459 = scmp.eq.s32.totalorder %s35, 0
    %p460 = por %p458, %p459
    %p461 = scmp.ne.s32.totalorder %s449, %s450
    %p462 = scmp.eq.s32.totalorder %s36, 1
    %p463 = por %p461, %p462
    %p465 = scmp.ne.s32.totalorder %s450, %s464
    %p466 = scmp.eq.s32.totalorder %s36, 0
    %p467 = por %p465, %p466
    %s469 = sadd.s32 %s468, 1
    %p472 = scmp.eq.s32.totalorder %s30, 1
    %p473 = scmp.ne.s32.totalorder %s468, %s470
    %p474 = scmp.eq.s32.totalorder %s30, 0
    %p475 = por %p473, %p474
    %p476 = scmp.ne.s32.totalorder %s468, %s470
    %p477 = scmp.eq.s32.totalorder %s35, 1
    %p478 = por %p476, %p477
    %p479 = scmp.ne.s32.totalorder %s470, %s471
    %p480 = scmp.eq.s32.totalorder %s35, 0
    %p481 = por %p479, %p480
    %p482 = scmp.ne.s32.totalorder %s470, %s471
    %p483 = scmp.eq.s32.totalorder %s36, 1
    %p484 = por %p482, %p483
    %p486 = scmp.ne.s32.totalorder %s471, %s485
    %p487 = scmp.eq.s32.totalorder %s36, 0
    %p488 = por %p486, %p487
    %s490 = sadd.s32 %s489, 1
    %p493 = scmp.eq.s32.totalorder %s30, 1
    %p494 = scmp.ne.s32.totalorder %s489, %s491
    %p495 = scmp.eq.s32.totalorder %s30, 0
    %p496 = por %p494, %p495
    %p497 = scmp.ne.s32.totalorder %s489, %s491
    %p498 = scmp.eq.s32.totalorder %s35, 1
    %p499 = por %p497, %p498
    %p500 = scmp.ne.s32.totalorder %s491, %s492
    %p501 = scmp.eq.s32.totalorder %s35, 0
    %p502 = por %p500, %p501
    %p503 = scmp.ne.s32.totalorder %s491, %s492
    %p504 = scmp.eq.s32.totalorder %s36, 1
    %p505 = por %p503, %p504
    %p507 = scmp.ne.s32.totalorder %s492, %s506
    %p508 = scmp.eq.s32.totalorder %s36, 0
    %p509 = por %p507, %p508
    %s510 = ssub.s32 %s30, %s37
    %p511 = scmp.eq.s32.totalorder %s510, 0
    %s513 = sadd.s32 %s512, 1
    %s514 = scalar_select %p511, %s512, %s513
    %p517 = pneg %p511
    %p518 = scmp.eq.s32.totalorder %s30, 1
    %p519 = por %p517, %p518
    %p520 = scmp.ne.s32.totalorder %s512, %s515
    %p521 = scmp.eq.s32.totalorder %s30, 0
    %p522 = por %p520, %p521
    %p523 = scmp.ne.s32.totalorder %s512, %s515
    %p524 = scmp.eq.s32.totalorder %s35, 1
    %p525 = por %p523, %p524
    %p526 = scmp.ne.s32.totalorder %s515, %s516
    %p527 = scmp.eq.s32.totalorder %s35, 0
    %p528 = por %p526, %p527
    %p529 = scmp.ne.s32.totalorder %s515, %s516
    %p530 = scmp.eq.s32.totalorder %s36, 1
    %p531 = por %p529, %p530
    %p533 = scmp.ne.s32.totalorder %s516, %s532
    %p534 = scmp.eq.s32.totalorder %s36, 0
    %p535 = por %p533, %p534
    %s536 = ssub.s32 %s30, %s37
    %p537 = scmp.eq.s32.totalorder %s536, 0
    %s539 = sadd.s32 %s538, 1
    %s540 = scalar_select %p537, %s538, %s539
    %p543 = pneg %p537
    %p544 = scmp.eq.s32.totalorder %s30, 1
    %p545 = por %p543, %p544
    %p546 = scmp.ne.s32.totalorder %s538, %s541
    %p547 = scmp.eq.s32.totalorder %s30, 0
    %p548 = por %p546, %p547
    %p549 = scmp.ne.s32.totalorder %s538, %s541
    %p550 = scmp.eq.s32.totalorder %s35, 1
    %p551 = por %p549, %p550
    %p552 = scmp.ne.s32.totalorder %s541, %s542
    %p553 = scmp.eq.s32.totalorder %s35, 0
    %p554 = por %p552, %p553
    %p555 = scmp.ne.s32.totalorder %s541, %s542
    %p556 = scmp.eq.s32.totalorder %s36, 1
    %p557 = por %p555, %p556
    %p559 = scmp.ne.s32.totalorder %s542, %s558
    %p560 = scmp.eq.s32.totalorder %s36, 0
    %p561 = por %p559, %p560
    %p562 = scmp.le.s32.totalorder 1, %s30
    %p563 = scmp.lt.s32.totalorder %s30, 3
    %p564 = pnand %p562, %p563
    %p565 = pneg %p564
    // Predicated region
    $region9: #{frustum_point_dan_full_forward.2} parent=5 // pred_check
      _
    $region10: #{frustum_point_dan_full_forward.2} parent=5 // pred_check_branch
      %567 = sbr.rel (%p564) target = $region12
    $region11: #{frustum_point_dan_full_forward.2} parent=5 // pred_region
      %s568 = ssub.s32 %s30, 1
      // Predicated region
      $region13: #{frustum_point_dan_full_forward.2} parent=11 // pred_check
        %p569 = pneg %p103
      $region14: #{frustum_point_dan_full_forward.2} parent=11 // pred_check_branch
        %571 = sbr.rel (%p569) target = $region16
      $region15: #{frustum_point_dan_full_forward.2} parent=11 // pred_region
        _
      $region16: #{frustum_point_dan_full_forward.2} parent=11 // pred_fallthru
        _
      // Predicated region
      $region17: #{frustum_point_dan_full_forward.2} parent=11 // pred_check
        %p572 = pneg %p124
      $region18: #{frustum_point_dan_full_forward.2} parent=11 // pred_check_branch
        %574 = sbr.rel (%p572) target = $region20
      $region19: #{frustum_point_dan_full_forward.2} parent=11 // pred_region
        _
      $region20: #{frustum_point_dan_full_forward.2} parent=11 // pred_fallthru
        _
      // Predicated region
      $region21: #{frustum_point_dan_full_forward.2} parent=11 // pred_check
        %p575 = pneg %p145
      $region22: #{frustum_point_dan_full_forward.2} parent=11 // pred_check_branch
        %577 = sbr.rel (%p575) target = $region24
      $region23: #{frustum_point_dan_full_forward.2} parent=11 // pred_region
        _
      $region24: #{frustum_point_dan_full_forward.2} parent=11 // pred_fallthru
        _
      // Predicated region
      $region25: #{frustum_point_dan_full_forward.2} parent=11 // pred_check
        %p578 = pneg %p166
      $region26: #{frustum_point_dan_full_forward.2} parent=11 // pred_check_branch
        %580 = sbr.rel (%p578) target = $region28
      $region27: #{frustum_point_dan_full_forward.2} parent=11 // pred_region
        _
      $region28: #{frustum_point_dan_full_forward.2} parent=11 // pred_fallthru
        _
      // Predicated region
      $region29: #{frustum_point_dan_full_forward.2} parent=11 // pred_check
        %p581 = pneg %p187
      $region30: #{frustum_point_dan_full_forward.2} parent=11 // pred_check_branch
        %583 = sbr.rel (%p581) target = $region32
      $region31: #{frustum_point_dan_full_forward.2} parent=11 // pred_region
        _
      $region32: #{frustum_point_dan_full_forward.2} parent=11 // pred_fallthru
        _
      // Predicated region
      $region33: #{frustum_point_dan_full_forward.2} parent=11 // pred_check
        %p584 = pneg %p208
      $region34: #{frustum_point_dan_full_forward.2} parent=11 // pred_check_branch
        %586 = sbr.rel (%p584) target = $region36
      $region35: #{frustum_point_dan_full_forward.2} parent=11 // pred_region
        _
      $region36: #{frustum_point_dan_full_forward.2} parent=11 // pred_fallthru
        _
      // Predicated region
      $region37: #{frustum_point_dan_full_forward.2} parent=11 // pred_check
        %p587 = pneg %p229
      $region38: #{frustum_point_dan_full_forward.2} parent=11 // pred_check_branch
        %589 = sbr.rel (%p587) target = $region40
      $region39: #{frustum_point_dan_full_forward.2} parent=11 // pred_region
        _
      $region40: #{frustum_point_dan_full_forward.2} parent=11 // pred_fallthru
        _
      // Predicated region
      $region41: #{frustum_point_dan_full_forward.2} parent=11 // pred_check
        %p590 = pneg %p250
      $region42: #{frustum_point_dan_full_forward.2} parent=11 // pred_check_branch
        %592 = sbr.rel (%p590) target = $region44
      $region43: #{frustum_point_dan_full_forward.2} parent=11 // pred_region
        _
      $region44: #{frustum_point_dan_full_forward.2} parent=11 // pred_fallthru
        _
      // Predicated region
      $region45: #{frustum_point_dan_full_forward.2} parent=11 // pred_check
        %p593 = pneg %p271
      $region46: #{frustum_point_dan_full_forward.2} parent=11 // pred_check_branch
        %595 = sbr.rel (%p593) target = $region48
      $region47: #{frustum_point_dan_full_forward.2} parent=11 // pred_region
        _
      $region48: #{frustum_point_dan_full_forward.2} parent=11 // pred_fallthru
        _
      // Predicated region
      $region49: #{frustum_point_dan_full_forward.2} parent=11 // pred_check
        %p596 = pneg %p292
      $region50: #{frustum_point_dan_full_forward.2} parent=11 // pred_check_branch
        %598 = sbr.rel (%p596) target = $region52
      $region51: #{frustum_point_dan_full_forward.2} parent=11 // pred_region
        _
      $region52: #{frustum_point_dan_full_forward.2} parent=11 // pred_fallthru
        _
      // Predicated region
      $region53: #{frustum_point_dan_full_forward.2} parent=11 // pred_check
        %p599 = pneg %p313
      $region54: #{frustum_point_dan_full_forward.2} parent=11 // pred_check_branch
        %601 = sbr.rel (%p599) target = $region56
      $region55: #{frustum_point_dan_full_forward.2} parent=11 // pred_region
        _
      $region56: #{frustum_point_dan_full_forward.2} parent=11 // pred_fallthru
        _
      // Predicated region
      $region57: #{frustum_point_dan_full_forward.2} parent=11 // pred_check
        %p602 = pneg %p334
      $region58: #{frustum_point_dan_full_forward.2} parent=11 // pred_check_branch
        %604 = sbr.rel (%p602) target = $region60
      $region59: #{frustum_point_dan_full_forward.2} parent=11 // pred_region
        _
      $region60: #{frustum_point_dan_full_forward.2} parent=11 // pred_fallthru
        _
      // Predicated region
      $region61: #{frustum_point_dan_full_forward.2} parent=11 // pred_check
        %p605 = pneg %p355
      $region62: #{frustum_point_dan_full_forward.2} parent=11 // pred_check_branch
        %607 = sbr.rel (%p605) target = $region64
      $region63: #{frustum_point_dan_full_forward.2} parent=11 // pred_region
        _
      $region64: #{frustum_point_dan_full_forward.2} parent=11 // pred_fallthru
        _
      // Predicated region
      $region65: #{frustum_point_dan_full_forward.2} parent=11 // pred_check
        %p608 = pneg %p376
      $region66: #{frustum_point_dan_full_forward.2} parent=11 // pred_check_branch
        %610 = sbr.rel (%p608) target = $region68
      $region67: #{frustum_point_dan_full_forward.2} parent=11 // pred_region
        _
      $region68: #{frustum_point_dan_full_forward.2} parent=11 // pred_fallthru
        _
      // Predicated region
      $region69: #{frustum_point_dan_full_forward.2} parent=11 // pred_check
        %p611 = pneg %p397
      $region70: #{frustum_point_dan_full_forward.2} parent=11 // pred_check_branch
        %613 = sbr.rel (%p611) target = $region72
      $region71: #{frustum_point_dan_full_forward.2} parent=11 // pred_region
        _
      $region72: #{frustum_point_dan_full_forward.2} parent=11 // pred_fallthru
        _
      // Predicated region
      $region73: #{frustum_point_dan_full_forward.2} parent=11 // pred_check
        %p614 = pneg %p418
      $region74: #{frustum_point_dan_full_forward.2} parent=11 // pred_check_branch
        %616 = sbr.rel (%p614) target = $region76
      $region75: #{frustum_point_dan_full_forward.2} parent=11 // pred_region
        _
      $region76: #{frustum_point_dan_full_forward.2} parent=11 // pred_fallthru
        _
      // Predicated region
      $region77: #{frustum_point_dan_full_forward.2} parent=11 // pred_check
        %p617 = pneg %p439
      $region78: #{frustum_point_dan_full_forward.2} parent=11 // pred_check_branch
        %619 = sbr.rel (%p617) target = $region80
      $region79: #{frustum_point_dan_full_forward.2} parent=11 // pred_region
        _
      $region80: #{frustum_point_dan_full_forward.2} parent=11 // pred_fallthru
        _
      // Predicated region
      $region81: #{frustum_point_dan_full_forward.2} parent=11 // pred_check
        %p620 = pneg %p460
      $region82: #{frustum_point_dan_full_forward.2} parent=11 // pred_check_branch
        %622 = sbr.rel (%p620) target = $region84
      $region83: #{frustum_point_dan_full_forward.2} parent=11 // pred_region
        _
      $region84: #{frustum_point_dan_full_forward.2} parent=11 // pred_fallthru
        _
      // Predicated region
      $region85: #{frustum_point_dan_full_forward.2} parent=11 // pred_check
        %p623 = pneg %p481
      $region86: #{frustum_point_dan_full_forward.2} parent=11 // pred_check_branch
        %625 = sbr.rel (%p623) target = $region88
      $region87: #{frustum_point_dan_full_forward.2} parent=11 // pred_region
        _
      $region88: #{frustum_point_dan_full_forward.2} parent=11 // pred_fallthru
        _
      // Predicated region
      $region89: #{frustum_point_dan_full_forward.2} parent=11 // pred_check
        %p626 = pneg %p502
      $region90: #{frustum_point_dan_full_forward.2} parent=11 // pred_check_branch
        %628 = sbr.rel (%p626) target = $region92
      $region91: #{frustum_point_dan_full_forward.2} parent=11 // pred_region
        _
      $region92: #{frustum_point_dan_full_forward.2} parent=11 // pred_fallthru
        _
    $region12: #{frustum_point_dan_full_forward.2} parent=5 // pred_fallthru
      _
    %p629 = scmp.lt.s32.totalorder %s30, 2
    // Predicated region
    $region93: #{frustum_point_dan_full_forward.2} parent=5 // pred_check
      %p630 = pneg %p629
    $region94: #{frustum_point_dan_full_forward.2} parent=5 // pred_check_branch
      %632 = sbr.rel (%p630) target = $region96
    $region95: #{frustum_point_dan_full_forward.2} parent=5 // pred_region
      // Predicated region
      $region97: #{frustum_point_dan_full_forward.2} parent=95 // pred_check
        %p633 = pneg %p50
      $region98: #{frustum_point_dan_full_forward.2} parent=95 // pred_check_branch
        %635 = sbr.rel (%p633) target = $region100
      $region99: #{frustum_point_dan_full_forward.2} parent=95 // pred_region
        %p636 = scmp.lt.s32.totalorder %s30, 1
        %s637 = scalar_select %p636, %s30, 1
        %s638 = smul.addr %s637, 16
        %s639 = smul.addr %s638, 8
        %s640 = scalar_lea.vmem %s0, %s639
      $region100: #{frustum_point_dan_full_forward.2} parent=95 // pred_fallthru
        _
      // Predicated region
      $region101: #{frustum_point_dan_full_forward.2} parent=95 // pred_check
        %p641 = pneg %p76
      $region102: #{frustum_point_dan_full_forward.2} parent=95 // pred_check_branch
        %643 = sbr.rel (%p641) target = $region104
      $region103: #{frustum_point_dan_full_forward.2} parent=95 // pred_region
        %p644 = scmp.lt.s32.totalorder %s30, 1
        %s645 = scalar_select %p644, %s30, 1
        %s646 = scalar_lea.vmem %s1, %s645
      $region104: #{frustum_point_dan_full_forward.2} parent=95 // pred_fallthru
        _
    $region96: #{frustum_point_dan_full_forward.2} parent=5 // pred_fallthru
      _
    %p647 = scmp.le.s32.totalorder 1, %s30
    %p648 = scmp.lt.s32.totalorder %s30, 3
    %p649 = pnand %p647, %p648
    %p650 = pneg %p649
    // Predicated region
    $region105: #{frustum_point_dan_full_forward.2} parent=5 // pred_check
      _
    $region106: #{frustum_point_dan_full_forward.2} parent=5 // pred_check_branch
      %652 = sbr.rel (%p649) target = $region108
    $region107: #{frustum_point_dan_full_forward.2} parent=5 // pred_region
      %s653 = ssub.s32 %s30, 1
      %p654 = scmp.lt.s32.totalorder %s35, 1
      %s655 = scalar_select %p654, %s35, 1
      %s656 = smul.addr %s655, 16
      %s657 = smul.addr %s656, 8
      %s658 = scalar_lea.vmem %s0, %s657
      %p659 = pneg %p56
      %p660 = pneg %p53
      %p661 = scmp.lt.s32.totalorder %s35, 1
      %s662 = scalar_select %p661, %s35, 1
      %s663 = scalar_lea.vmem %s1, %s662
      %p664 = pneg %p82
      %p665 = pneg %p79
      %p666 = pneg %p103
      %p667 = pneg %p100
      %p668 = pneg %p124
      %p669 = pneg %p121
      %p670 = pneg %p145
      %p671 = pneg %p142
      %p672 = pneg %p166
      %p673 = pneg %p163
      %p674 = pneg %p187
      %p675 = pneg %p184
      %p676 = pneg %p208
      %p677 = pneg %p205
      %p678 = pneg %p229
      %p679 = pneg %p226
      %p680 = pneg %p250
      %p681 = pneg %p247
      %p682 = pneg %p271
      %p683 = pneg %p268
      %p684 = pneg %p292
      %p685 = pneg %p289
      %p686 = pneg %p313
      %p687 = pneg %p310
      %p688 = pneg %p334
      %p689 = pneg %p331
      %p690 = pneg %p355
      %p691 = pneg %p352
      %p692 = pneg %p376
      %p693 = pneg %p373
      %p694 = pneg %p397
      %p695 = pneg %p394
      %p696 = pneg %p418
      %p697 = pneg %p415
      %p698 = pneg %p439
      %p699 = pneg %p436
      %p700 = pneg %p460
      %p701 = pneg %p457
      %p702 = pneg %p481
      %p703 = pneg %p478
      %p704 = pneg %p502
      %p705 = pneg %p499
      %p706 = pneg %p528
      %p707 = pneg %p525
      %p708 = scmp.lt.s32.totalorder %s35, 1
      %s709 = scalar_select %p708, %s35, 1
      %s710 = smul.addr %s709, 4
      %s711 = scalar_lea.vmem %s22, %s710
      %p712 = pneg %p554
      %p713 = pneg %p551
      %p714 = scmp.lt.s32.totalorder %s35, 1
      %s715 = scalar_select %p714, %s35, 1
      %s716 = scalar_lea.vmem %s23, %s715
      %p717 = scmp.lt.s32.totalorder %s35, 1
      %s718 = scalar_select %p717, %s35, 1
      %s719 = smul.addr %s718, 16
      %s720 = smul.addr %s719, 8
      %s721 = scalar_lea.vmem %s0, %s720
      %p722 = scmp.lt.s32.totalorder %s35, 1
      %s723 = scalar_select %p722, %s35, 1
      %s724 = scalar_lea.vmem %s1, %s723
      %p725 = scmp.lt.s32.totalorder %s35, 1
      %s726 = scalar_select %p725, %s35, 1
      %s727 = smul.addr %s726, 4
      %s728 = scalar_lea.vmem %s22, %s727
      %p729 = scmp.lt.s32.totalorder %s35, 1
      %s730 = scalar_select %p729, %s35, 1
      %s731 = scalar_lea.vmem %s23, %s730
      %v733 = vld [vmem:[%s721] sm:$0xff]
      %v734 = vld [vmem:[%s721 + $0x8] sm:$0xff]
      %v735 = vld [vmem:[%s721 + $0x10] sm:$0xff]
      %v736 = vld [vmem:[%s721 + $0x18] sm:$0xff]
      %v737 = vld [vmem:[%s721 + $0x20] sm:$0xff]
      %v738 = vld [vmem:[%s721 + $0x28] sm:$0xff]
      %v739 = vld [vmem:[%s721 + $0x30] sm:$0xff]
      %v740 = vld [vmem:[%s721 + $0x38] sm:$0xff]
      %v741 = vld [vmem:[%s721 + $0x40] sm:$0xff]
      %v742 = vld [vmem:[%s721 + $0x48] sm:$0xff]
      %v743 = vld [vmem:[%s721 + $0x50] sm:$0xff]
      %v744 = vld [vmem:[%s721 + $0x58] sm:$0xff]
      %v745 = vld [vmem:[%s721 + $0x60] sm:$0xff]
      %v746 = vld [vmem:[%s721 + $0x68] sm:$0xff]
      %v747 = vld [vmem:[%s721 + $0x70] sm:$0xff]
      %v748 = vld [vmem:[%s721 + $0x78] sm:$0xff]
      %v749 = vld [vmem:[%s2] sm:$0xf]
      %v750 = vld [vmem:[%s3] sm:$0x1]
      %v752 = vlaneseq
      %v753 = vshrl.u32 %v752, 7
      %v754 = vsub.s32 0, %v753
      %v755 = vrot.slane %v750, %v754
      %vm757 = vcmask 31744
      %v759 = vsel %vm757, %v733, 0
      %v762 = vsel %vm757, %v734, 0
      %v765 = vsel %vm757, %v735, 0
      %v768 = vsel %vm757, %v736, 0
      %v771 = vsel %vm757, %v737, 0
      %v774 = vsel %vm757, %v738, 0
      %v777 = vsel %vm757, %v739, 0
      %v780 = vsel %vm757, %v740, 0
      %v783 = vsel %vm757, %v741, 0
      %v786 = vsel %vm757, %v742, 0
      %v789 = vsel %vm757, %v743, 0
      %v792 = vsel %vm757, %v744, 0
      %v795 = vsel %vm757, %v745, 0
      %v798 = vsel %vm757, %v746, 0
      %v801 = vsel %vm757, %v747, 0
      %v804 = vsel %vm757, %v748, 0
      %vm806 = vcmask 1043456
      %v808 = vsel %vm806, %v749, 0
      %810 = vmatprep.subr.mxu0 0.0
      %811 = vmatpush1.msra.mxu0 %v808
      %812 = vmatprep.subr.mxu0 0.0
      %813 = vmatpush1.msra.mxu0 0.0
      %814 = vmatprep.subr.mxu0 0.0
      %815 = vmatpush1.msra.mxu0 0.0
      %816 = vmatprep.subr.mxu0 0.0
      %817 = vmatpush1.msra.mxu0 0.0
      %818 = vmatprep.subr.mxu0 0.0
      %819 = vmatpush1.msra.mxu0 0.0
      %820 = vmatprep.subr.mxu0 0.0
      %821 = vmatpush1.msra.mxu0 0.0
      %822 = vmatprep.subr.mxu0 0.0
      %823 = vmatpush1.msra.mxu0 0.0
      %824 = vmatprep.subr.mxu0 0.0
      %825 = vmatpush1.msra.mxu0 0.0
      %826 = vmatprep.subr.mxu0 0.0
      %827 = vmatpush1.msra.mxu0 0.0
      %828 = vmatprep.subr.mxu0 0.0
      %829 = vmatpush1.msra.mxu0 0.0
      %830 = vmatprep.subr.mxu0 0.0
      %831 = vmatpush1.msra.mxu0 0.0
      %832 = vmatprep.subr.mxu0 0.0
      %833 = vmatpush1.msra.mxu0 0.0
      %834 = vmatprep.subr.mxu0 0.0
      %835 = vmatpush1.msra.mxu0 0.0
      %836 = vmatprep.subr.mxu0 0.0
      %837 = vmatpush1.msra.mxu0 0.0
      %838 = vmatprep.subr.mxu0 0.0
      %839 = vmatpush1.msra.mxu0 0.0
      %840 = vmatprep.subr.mxu0 0.0
      %841 = vmatpush1.msra.mxu0 0.0
      %842 = vmatprep.subr.mxu0 0.0
      %843 = vmatpush1.msra.mxu0 0.0
      %844 = vmatprep.subr.mxu0 0.0
      %845 = vmatpush1.msra.mxu0 0.0
      %846 = vmatprep.subr.mxu0 0.0
      %847 = vmatpush1.msra.mxu0 0.0
      %848 = vmatprep.subr.mxu0 0.0
      %849 = vmatpush1.msra.mxu0 0.0
      %850 = vmatprep.subr.mxu0 0.0
      %851 = vmatpush1.msra.mxu0 0.0
      %852 = vmatprep.subr.mxu0 0.0
      %853 = vmatpush1.msra.mxu0 0.0
      %854 = vmatprep.subr.mxu0 0.0
      %855 = vmatpush1.msra.mxu0 0.0
      %856 = vmatprep.subr.mxu0 0.0
      %857 = vmatpush1.msra.mxu0 0.0
      %858 = vmatprep.subr.mxu0 0.0
      %859 = vmatpush1.msra.mxu0 0.0
      %860 = vmatprep.subr.mxu0 0.0
      %861 = vmatpush1.msra.mxu0 0.0
      %862 = vmatprep.subr.mxu0 0.0
      %863 = vmatpush1.msra.mxu0 0.0
      %864 = vmatprep.subr.mxu0 0.0
      %865 = vmatpush1.msra.mxu0 0.0
      %866 = vmatprep.subr.mxu0 0.0
      %867 = vmatpush1.msra.mxu0 0.0
      %868 = vmatprep.subr.mxu0 0.0
      %869 = vmatpush1.msra.mxu0 0.0
      %870 = vmatprep.subr.mxu0 0.0
      %871 = vmatpush1.msra.mxu0 0.0
      %872 = vmatprep.subr.mxu0 0.0
      %873 = vmatpush1.msra.mxu0 0.0
      %874 = vmatprep.mubr.f32.mxu0 0.0
      %875 = vmatmul.mubr.f32.gmra.mrb[0].mxu0 %v759
      %v876 = vpop.f32.mrb[0].mxu0
      %v877 = vadd.f32 %v755, %v876
      %v878 = vpop.f32.mrb[0].mxu0
      %879 = vmatprep.mubr.f32.mxu0 0.0
      %880 = vmatmul.mubr.f32.gmra.mrb[0].mxu0 %v762
      %v881 = vpop.f32.mrb[0].mxu0
      %v882 = vadd.f32 %v755, %v881
      %v883 = vpop.f32.mrb[0].mxu0
      %884 = vmatprep.mubr.f32.mxu0 0.0
      %885 = vmatmul.mubr.f32.gmra.mrb[0].mxu0 %v765
      %v886 = vpop.f32.mrb[0].mxu0
      %v887 = vadd.f32 %v755, %v886
      %v888 = vpop.f32.mrb[0].mxu0
      %889 = vmatprep.mubr.f32.mxu0 0.0
      %890 = vmatmul.mubr.f32.gmra.mrb[0].mxu0 %v768
      %v891 = vpop.f32.mrb[0].mxu0
      %v892 = vadd.f32 %v755, %v891
      %v893 = vpop.f32.mrb[0].mxu0
      %894 = vmatprep.mubr.f32.mxu0 0.0
      %895 = vmatmul.mubr.f32.gmra.mrb[0].mxu0 %v771
      %v896 = vpop.f32.mrb[0].mxu0
      %v897 = vadd.f32 %v755, %v896
      %v898 = vpop.f32.mrb[0].mxu0
      %899 = vmatprep.mubr.f32.mxu0 0.0
      %900 = vmatmul.mubr.f32.gmra.mrb[0].mxu0 %v774
      %v901 = vpop.f32.mrb[0].mxu0
      %v902 = vadd.f32 %v755, %v901
      %v903 = vpop.f32.mrb[0].mxu0
      %904 = vmatprep.mubr.f32.mxu0 0.0
      %905 = vmatmul.mubr.f32.gmra.mrb[0].mxu0 %v777
      %v906 = vpop.f32.mrb[0].mxu0
      %v907 = vadd.f32 %v755, %v906
      %v908 = vpop.f32.mrb[0].mxu0
      %909 = vmatprep.mubr.f32.mxu0 0.0
      %910 = vmatmul.mubr.f32.gmra.mrb[0].mxu0 %v780
      %v911 = vpop.f32.mrb[0].mxu0
      %v912 = vadd.f32 %v755, %v911
      %v913 = vpop.f32.mrb[0].mxu0
      %914 = vmatprep.mubr.f32.mxu0 0.0
      %915 = vmatmul.mubr.f32.gmra.mrb[0].mxu0 %v783
      %v916 = vpop.f32.mrb[0].mxu0
      %v917 = vadd.f32 %v755, %v916
      %v918 = vpop.f32.mrb[0].mxu0
      %919 = vmatprep.mubr.f32.mxu0 0.0
      %920 = vmatmul.mubr.f32.gmra.mrb[0].mxu0 %v786
      %v921 = vpop.f32.mrb[0].mxu0
      %v922 = vadd.f32 %v755, %v921
      %v923 = vpop.f32.mrb[0].mxu0
      %924 = vmatprep.mubr.f32.mxu0 0.0
      %925 = vmatmul.mubr.f32.gmra.mrb[0].mxu0 %v789
      %v926 = vpop.f32.mrb[0].mxu0
      %v927 = vadd.f32 %v755, %v926
      %v928 = vpop.f32.mrb[0].mxu0
      %929 = vmatprep.mubr.f32.mxu0 0.0
      %930 = vmatmul.mubr.f32.gmra.mrb[0].mxu0 %v792
      %v931 = vpop.f32.mrb[0].mxu0
      %v932 = vadd.f32 %v755, %v931
      %v933 = vpop.f32.mrb[0].mxu0
      %934 = vmatprep.mubr.f32.mxu0 0.0
      %935 = vmatmul.mubr.f32.gmra.mrb[0].mxu0 %v795
      %v936 = vpop.f32.mrb[0].mxu0
      %v937 = vadd.f32 %v755, %v936
      %v938 = vpop.f32.mrb[0].mxu0
      %939 = vmatprep.mubr.f32.mxu0 0.0
      %940 = vmatmul.mubr.f32.gmra.mrb[0].mxu0 %v798
      %v941 = vpop.f32.mrb[0].mxu0
      %v942 = vadd.f32 %v755, %v941
      %v943 = vpop.f32.mrb[0].mxu0
      %944 = vmatprep.mubr.f32.mxu0 0.0
      %945 = vmatmul.mubr.f32.gmra.mrb[0].mxu0 %v801
      %v946 = vpop.f32.mrb[0].mxu0
      %v947 = vadd.f32 %v755, %v946
      %v948 = vpop.f32.mrb[0].mxu0
      %949 = vmatprep.mubr.f32.mxu0 0.0
      %950 = vmatmul.mubr.f32.gmra.mrb[0].mxu0 %v804
      %v951 = vpop.f32.mrb[0].mxu0
      %v952 = vadd.f32 %v755, %v951
      %v953 = vpop.f32.mrb[0].mxu0
      %954 = vdwg.mxu0
      %v955 = vmax.f32 %v877, 0.0
      %v956 = vmax.f32 %v882, 0.0
      %v957 = vmax.f32 %v887, 0.0
      %v958 = vmax.f32 %v892, 0.0
      %v959 = vmax.f32 %v897, 0.0
      %v960 = vmax.f32 %v902, 0.0
      %v961 = vmax.f32 %v907, 0.0
      %v962 = vmax.f32 %v912, 0.0
      %v963 = vmax.f32 %v917, 0.0
      %v964 = vmax.f32 %v922, 0.0
      %v965 = vmax.f32 %v927, 0.0
      %v966 = vmax.f32 %v932, 0.0
      %v967 = vmax.f32 %v937, 0.0
      %v968 = vmax.f32 %v942, 0.0
      %v969 = vmax.f32 %v947, 0.0
      %v970 = vmax.f32 %v952, 0.0
      %v971 = vpack.c.bf16 %v956, %v955
      %v972 = vpack.c.bf16 %v958, %v957
      %v973 = vpack.c.bf16 %v960, %v959
      %v974 = vpack.c.bf16 %v962, %v961
      %v975 = vpack.c.bf16 %v964, %v963
      %v976 = vpack.c.bf16 %v966, %v965
      %v977 = vpack.c.bf16 %v968, %v967
      %v978 = vpack.c.bf16 %v970, %v969
      %v979 = vld [vmem:[%s4] sm:$0xf]
      %v980 = vld [vmem:[%s4 + $0x4] sm:$0xf]
      %v981 = vld [vmem:[%s4 + $0x8] sm:$0xf]
      %v982 = vld [vmem:[%s4 + $0xc] sm:$0xf]
      %v983 = vld [vmem:[%s5] sm:$0x1]
      %v985 = vlaneseq
      %v986 = vshrl.u32 %v985, 7
      %v987 = vsub.s32 0, %v986
      %v988 = vrot.slane %v983, %v987
      %v994 = vunpack.c.l.b16 %v979
      %v995 = vunpack.c.l.b16 %v980
      %v996 = vunpack.c.l.b16 %v981
      %v997 = vunpack.c.l.b16 %v982
      %v998 = vpack.c.b16 %v995, %v994
      %v999 = vpack.c.b16 %v997, %v996
      %vm1002 = vcmask 261120
      %v1004 = vsel %vm1002, %v971, 0
      %v1007 = vsel %vm1002, %v972, 0
      %v1010 = vsel %vm1002, %v973, 0
      %v1013 = vsel %vm1002, %v974, 0
      %v1016 = vsel %vm1002, %v975, 0
      %v1019 = vsel %vm1002, %v976, 0
      %v1022 = vsel %vm1002, %v977, 0
      %v1025 = vsel %vm1002, %v978, 0
      %1027 = vmatprep.subr.bf16.mxu0 0
      %1028 = vmatpush1.bf16.msra.mxu0 %v998
      %1029 = vmatprep.subr.bf16.mxu0 0
      %1030 = vmatpush1.bf16.msra.mxu0 %v999
      %1031 = vmatprep.subr.bf16.mxu0 0
      %1032 = vmatpush1.bf16.msra.mxu0 0
      %1033 = vmatprep.subr.bf16.mxu0 0
      %1034 = vmatpush1.bf16.msra.mxu0 0
      %1035 = vmatprep.subr.bf16.mxu0 0
      %1036 = vmatpush1.bf16.msra.mxu0 0
      %1037 = vmatprep.subr.bf16.mxu0 0
      %1038 = vmatpush1.bf16.msra.mxu0 0
      %1039 = vmatprep.subr.bf16.mxu0 0
      %1040 = vmatpush1.bf16.msra.mxu0 0
      %1041 = vmatprep.subr.bf16.mxu0 0
      %1042 = vmatpush1.bf16.msra.mxu0 0
      %1043 = vmatprep.subr.bf16.mxu0 0
      %1044 = vmatpush1.bf16.msra.mxu0 0
      %1045 = vmatprep.subr.bf16.mxu0 0
      %1046 = vmatpush1.bf16.msra.mxu0 0
      %1047 = vmatprep.subr.bf16.mxu0 0
      %1048 = vmatpush1.bf16.msra.mxu0 0
      %1049 = vmatprep.subr.bf16.mxu0 0
      %1050 = vmatpush1.bf16.msra.mxu0 0
      %1051 = vmatprep.subr.bf16.mxu0 0
      %1052 = vmatpush1.bf16.msra.mxu0 0
      %1053 = vmatprep.subr.bf16.mxu0 0
      %1054 = vmatpush1.bf16.msra.mxu0 0
      %1055 = vmatprep.subr.bf16.mxu0 0
      %1056 = vmatpush1.bf16.msra.mxu0 0
      %1057 = vmatprep.subr.bf16.mxu0 0
      %1058 = vmatpush1.bf16.msra.mxu0 0
      %1059 = vmatprep.mubr.bf16.mxu0 0
      %1060 = vmatmul.mubr.bf16.gmra.mrb[0].mxu0 %v1004
      %v1061 = vpop.f32.mrb[0].mxu0
      %v1062 = vadd.f32 %v988, %v1061
      %v1063 = vpop.f32.mrb[0].mxu0
      %v1064 = vpop.f32.mrb[0].mxu0
      %v1065 = vadd.f32 %v988, %v1064
      %v1066 = vpop.f32.mrb[0].mxu0
      %1067 = vmatprep.mubr.bf16.mxu0 0
      %1068 = vmatmul.mubr.bf16.gmra.mrb[0].mxu0 %v1007
      %v1069 = vpop.f32.mrb[0].mxu0
      %v1070 = vadd.f32 %v988, %v1069
      %v1071 = vpop.f32.mrb[0].mxu0
      %v1072 = vpop.f32.mrb[0].mxu0
      %v1073 = vadd.f32 %v988, %v1072
      %v1074 = vpop.f32.mrb[0].mxu0
      %1075 = vmatprep.mubr.bf16.mxu0 0
      %1076 = vmatmul.mubr.bf16.gmra.mrb[0].mxu0 %v1010
      %v1077 = vpop.f32.mrb[0].mxu0
      %v1078 = vadd.f32 %v988, %v1077
      %v1079 = vpop.f32.mrb[0].mxu0
      %v1080 = vpop.f32.mrb[0].mxu0
      %v1081 = vadd.f32 %v988, %v1080
      %v1082 = vpop.f32.mrb[0].mxu0
      %1083 = vmatprep.mubr.bf16.mxu0 0
      %1084 = vmatmul.mubr.bf16.gmra.mrb[0].mxu0 %v1013
      %v1085 = vpop.f32.mrb[0].mxu0
      %v1086 = vadd.f32 %v988, %v1085
      %v1087 = vpop.f32.mrb[0].mxu0
      %v1088 = vpop.f32.mrb[0].mxu0
      %v1089 = vadd.f32 %v988, %v1088
      %v1090 = vpop.f32.mrb[0].mxu0
      %1091 = vmatprep.mubr.bf16.mxu0 0
      %1092 = vmatmul.mubr.bf16.gmra.mrb[0].mxu0 %v1016
      %v1093 = vpop.f32.mrb[0].mxu0
      %v1094 = vadd.f32 %v988, %v1093
      %v1095 = vpop.f32.mrb[0].mxu0
      %v1096 = vpop.f32.mrb[0].mxu0
      %v1097 = vadd.f32 %v988, %v1096
      %v1098 = vpop.f32.mrb[0].mxu0
      %1099 = vmatprep.mubr.bf16.mxu0 0
      %1100 = vmatmul.mubr.bf16.gmra.mrb[0].mxu0 %v1019
      %v1101 = vpop.f32.mrb[0].mxu0
      %v1102 = vadd.f32 %v988, %v1101
      %v1103 = vpop.f32.mrb[0].mxu0
      %v1104 = vpop.f32.mrb[0].mxu0
      %v1105 = vadd.f32 %v988, %v1104
      %v1106 = vpop.f32.mrb[0].mxu0
      %1107 = vmatprep.mubr.bf16.mxu0 0
      %1108 = vmatmul.mubr.bf16.gmra.mrb[0].mxu0 %v1022
      %v1109 = vpop.f32.mrb[0].mxu0
      %v1110 = vadd.f32 %v988, %v1109
      %v1111 = vpop.f32.mrb[0].mxu0
      %v1112 = vpop.f32.mrb[0].mxu0
      %v1113 = vadd.f32 %v988, %v1112
      %v1114 = vpop.f32.mrb[0].mxu0
      %1115 = vmatprep.mubr.bf16.mxu0 0
      %1116 = vmatmul.mubr.bf16.gmra.mrb[0].mxu0 %v1025
      %v1117 = vpop.f32.mrb[0].mxu0
      %v1118 = vadd.f32 %v988, %v1117
      %v1119 = vpop.f32.mrb[0].mxu0
      %v1120 = vpop.f32.mrb[0].mxu0
      %v1121 = vadd.f32 %v988, %v1120
      %v1122 = vpop.f32.mrb[0].mxu0
      %1123 = vdwg.mxu0
      %v1124 = vmax.f32 %v1062, 0.0
      %v1125 = vmax.f32 %v1065, 0.0
      %v1126 = vmax.f32 %v1070, 0.0
      %v1127 = vmax.f32 %v1073, 0.0
      %v1128 = vmax.f32 %v1078, 0.0
      %v1129 = vmax.f32 %v1081, 0.0
      %v1130 = vmax.f32 %v1086, 0.0
      %v1131 = vmax.f32 %v1089, 0.0
      %v1132 = vmax.f32 %v1094, 0.0
      %v1133 = vmax.f32 %v1097, 0.0
      %v1134 = vmax.f32 %v1102, 0.0
      %v1135 = vmax.f32 %v1105, 0.0
      %v1136 = vmax.f32 %v1110, 0.0
      %v1137 = vmax.f32 %v1113, 0.0
      %v1138 = vmax.f32 %v1118, 0.0
      %v1139 = vmax.f32 %v1121, 0.0
      %v1140 = vpack.c.bf16 %v1125, %v1124
      %v1141 = vpack.c.bf16 %v1127, %v1126
      %v1142 = vpack.c.bf16 %v1129, %v1128
      %v1143 = vpack.c.bf16 %v1131, %v1130
      %v1144 = vpack.c.bf16 %v1133, %v1132
      %v1145 = vpack.c.bf16 %v1135, %v1134
      %v1146 = vpack.c.bf16 %v1137, %v1136
      %v1147 = vpack.c.bf16 %v1139, %v1138
      %v1148 = vld [vmem:[%s6] sm:$0xf]
      %v1149 = vld [vmem:[%s6 + $0x4] sm:$0xf]
      %v1150 = vld [vmem:[%s6 + $0x8] sm:$0xf]
      %v1151 = vld [vmem:[%s6 + $0xc] sm:$0xf]
      %v1152 = vld [vmem:[%s7] sm:$0x1]
      %v1154 = vlaneseq
      %v1155 = vshrl.u32 %v1154, 7
      %v1156 = vsub.s32 0, %v1155
      %v1157 = vrot.slane %v1152, %v1156
      %v1163 = vunpack.c.l.b16 %v1148
      %v1164 = vunpack.c.l.b16 %v1149
      %v1165 = vunpack.c.l.b16 %v1150
      %v1166 = vunpack.c.l.b16 %v1151
      %v1167 = vpack.c.b16 %v1164, %v1163
      %v1168 = vpack.c.b16 %v1166, %v1165
      %v1172 = vsel %vm1002, %v1140, 0
      %v1175 = vsel %vm1002, %v1141, 0
      %v1178 = vsel %vm1002, %v1142, 0
      %v1181 = vsel %vm1002, %v1143, 0
      %v1184 = vsel %vm1002, %v1144, 0
      %v1187 = vsel %vm1002, %v1145, 0
      %v1190 = vsel %vm1002, %v1146, 0
      %v1193 = vsel %vm1002, %v1147, 0
      %1195 = vmatprep.subr.bf16.mxu0 0
      %1196 = vmatpush1.bf16.msra.mxu0 %v1167
      %1197 = vmatprep.subr.bf16.mxu0 0
      %1198 = vmatpush1.bf16.msra.mxu0 %v1168
      %1199 = vmatprep.subr.bf16.mxu0 0
      %1200 = vmatpush1.bf16.msra.mxu0 0
      %1201 = vmatprep.subr.bf16.mxu0 0
      %1202 = vmatpush1.bf16.msra.mxu0 0
      %1203 = vmatprep.subr.bf16.mxu0 0
      %1204 = vmatpush1.bf16.msra.mxu0 0
      %1205 = vmatprep.subr.bf16.mxu0 0
      %1206 = vmatpush1.bf16.msra.mxu0 0
      %1207 = vmatprep.subr.bf16.mxu0 0
      %1208 = vmatpush1.bf16.msra.mxu0 0
      %1209 = vmatprep.subr.bf16.mxu0 0
      %1210 = vmatpush1.bf16.msra.mxu0 0
      %1211 = vmatprep.subr.bf16.mxu0 0
      %1212 = vmatpush1.bf16.msra.mxu0 0
      %1213 = vmatprep.subr.bf16.mxu0 0
      %1214 = vmatpush1.bf16.msra.mxu0 0
      %1215 = vmatprep.subr.bf16.mxu0 0
      %1216 = vmatpush1.bf16.msra.mxu0 0
      %1217 = vmatprep.subr.bf16.mxu0 0
      %1218 = vmatpush1.bf16.msra.mxu0 0
      %1219 = vmatprep.subr.bf16.mxu0 0
      %1220 = vmatpush1.bf16.msra.mxu0 0
      %1221 = vmatprep.subr.bf16.mxu0 0
      %1222 = vmatpush1.bf16.msra.mxu0 0
      %1223 = vmatprep.subr.bf16.mxu0 0
      %1224 = vmatpush1.bf16.msra.mxu0 0
      %1225 = vmatprep.subr.bf16.mxu0 0
      %1226 = vmatpush1.bf16.msra.mxu0 0
      %1227 = vmatprep.mubr.bf16.mxu0 0
      %1228 = vmatmul.mubr.bf16.gmra.mrb[0].mxu0 %v1172
      %v1229 = vpop.f32.mrb[0].mxu0
      %v1230 = vadd.f32 %v1157, %v1229
      %v1231 = vpop.f32.mrb[0].mxu0
      %v1232 = vpop.f32.mrb[0].mxu0
      %v1233 = vadd.f32 %v1157, %v1232
      %v1234 = vpop.f32.mrb[0].mxu0
      %1235 = vmatprep.mubr.bf16.mxu0 0
      %1236 = vmatmul.mubr.bf16.gmra.mrb[0].mxu0 %v1175
      %v1237 = vpop.f32.mrb[0].mxu0
      %v1238 = vadd.f32 %v1157, %v1237
      %v1239 = vpop.f32.mrb[0].mxu0
      %v1240 = vpop.f32.mrb[0].mxu0
      %v1241 = vadd.f32 %v1157, %v1240
      %v1242 = vpop.f32.mrb[0].mxu0
      %1243 = vmatprep.mubr.bf16.mxu0 0
      %1244 = vmatmul.mubr.bf16.gmra.mrb[0].mxu0 %v1178
      %v1245 = vpop.f32.mrb[0].mxu0
      %v1246 = vadd.f32 %v1157, %v1245
      %v1247 = vpop.f32.mrb[0].mxu0
      %v1248 = vpop.f32.mrb[0].mxu0
      %v1249 = vadd.f32 %v1157, %v1248
      %v1250 = vpop.f32.mrb[0].mxu0
      %1251 = vmatprep.mubr.bf16.mxu0 0
      %1252 = vmatmul.mubr.bf16.gmra.mrb[0].mxu0 %v1181
      %v1253 = vpop.f32.mrb[0].mxu0
      %v1254 = vadd.f32 %v1157, %v1253
      %v1255 = vpop.f32.mrb[0].mxu0
      %v1256 = vpop.f32.mrb[0].mxu0
      %v1257 = vadd.f32 %v1157, %v1256
      %v1258 = vpop.f32.mrb[0].mxu0
      %1259 = vmatprep.mubr.bf16.mxu0 0
      %1260 = vmatmul.mubr.bf16.gmra.mrb[0].mxu0 %v1184
      %v1261 = vpop.f32.mrb[0].mxu0
      %v1262 = vadd.f32 %v1157, %v1261
      %v1263 = vpop.f32.mrb[0].mxu0
      %v1264 = vpop.f32.mrb[0].mxu0
      %v1265 = vadd.f32 %v1157, %v1264
      %v1266 = vpop.f32.mrb[0].mxu0
      %1267 = vmatprep.mubr.bf16.mxu0 0
      %1268 = vmatmul.mubr.bf16.gmra.mrb[0].mxu0 %v1187
      %v1269 = vpop.f32.mrb[0].mxu0
      %v1270 = vadd.f32 %v1157, %v1269
      %v1271 = vpop.f32.mrb[0].mxu0
      %v1272 = vpop.f32.mrb[0].mxu0
      %v1273 = vadd.f32 %v1157, %v1272
      %v1274 = vpop.f32.mrb[0].mxu0
      %1275 = vmatprep.mubr.bf16.mxu0 0
      %1276 = vmatmul.mubr.bf16.gmra.mrb[0].mxu0 %v1190
      %v1277 = vpop.f32.mrb[0].mxu0
      %v1278 = vadd.f32 %v1157, %v1277
      %v1279 = vpop.f32.mrb[0].mxu0
      %v1280 = vpop.f32.mrb[0].mxu0
      %v1281 = vadd.f32 %v1157, %v1280
      %v1282 = vpop.f32.mrb[0].mxu0
      %1283 = vmatprep.mubr.bf16.mxu0 0
      %1284 = vmatmul.mubr.bf16.gmra.mrb[0].mxu0 %v1193
      %v1285 = vpop.f32.mrb[0].mxu0
      %v1286 = vadd.f32 %v1157, %v1285
      %v1287 = vpop.f32.mrb[0].mxu0
      %v1288 = vpop.f32.mrb[0].mxu0
      %v1289 = vadd.f32 %v1157, %v1288
      %v1290 = vpop.f32.mrb[0].mxu0
      %1291 = vdwg.mxu0
      %v1292 = vmax.f32 %v1230, 0.0
      %v1293 = vmax.f32 %v1233, 0.0
      %v1294 = vmax.f32 %v1238, 0.0
      %v1295 = vmax.f32 %v1241, 0.0
      %v1296 = vmax.f32 %v1246, 0.0
      %v1297 = vmax.f32 %v1249, 0.0
      %v1298 = vmax.f32 %v1254, 0.0
      %v1299 = vmax.f32 %v1257, 0.0
      %v1300 = vmax.f32 %v1262, 0.0
      %v1301 = vmax.f32 %v1265, 0.0
      %v1302 = vmax.f32 %v1270, 0.0
      %v1303 = vmax.f32 %v1273, 0.0
      %v1304 = vmax.f32 %v1278, 0.0
      %v1305 = vmax.f32 %v1281, 0.0
      %v1306 = vmax.f32 %v1286, 0.0
      %v1307 = vmax.f32 %v1289, 0.0
      %v1308 = vpack.c.bf16 %v1293, %v1292
      %v1309 = vpack.c.bf16 %v1295, %v1294
      %v1310 = vpack.c.bf16 %v1297, %v1296
      %v1311 = vpack.c.bf16 %v1299, %v1298
      %v1312 = vpack.c.bf16 %v1301, %v1300
      %v1313 = vpack.c.bf16 %v1303, %v1302
      %v1314 = vpack.c.bf16 %v1305, %v1304
      %v1315 = vpack.c.bf16 %v1307, %v1306
      %v1316 = vld [vmem:[%s8] sm:$0xf]
      %v1317 = vld [vmem:[%s8 + $0x4] sm:$0xf]
      %v1318 = vld [vmem:[%s8 + $0x8] sm:$0xf]
      %v1319 = vld [vmem:[%s8 + $0xc] sm:$0xf]
      %v1320 = vld [vmem:[%s8 + $0x10] sm:$0xf]
      %v1321 = vld [vmem:[%s8 + $0x14] sm:$0xf]
      %v1322 = vld [vmem:[%s8 + $0x18] sm:$0xf]
      %v1323 = vld [vmem:[%s8 + $0x1c] sm:$0xf]
      %v1324 = vld [vmem:[%s9] sm:$0x1]
      %v1326 = vlaneseq
      %v1327 = vshrl.u32 %v1326, 7
      %v1328 = vsub.s32 0, %v1327
      %v1329 = vrot.slane %v1324, %v1328
      %v1339 = vunpack.c.l.b16 %v1316
      %v1340 = vunpack.c.l.b16 %v1317
      %v1341 = vunpack.c.l.b16 %v1318
      %v1342 = vunpack.c.l.b16 %v1319
      %v1343 = vunpack.c.l.b16 %v1320
      %v1344 = vunpack.c.l.b16 %v1321
      %v1345 = vunpack.c.l.b16 %v1322
      %v1346 = vunpack.c.l.b16 %v1323
      %v1347 = vpack.c.b16 %v1340, %v1339
      %v1348 = vpack.c.b16 %v1342, %v1341
      %v1349 = vpack.c.b16 %v1344, %v1343
      %v1350 = vpack.c.b16 %v1346, %v1345
      %vm1355 = vcmask 523264
      %v1357 = vsel %vm1355, %v1308, 0
      %v1360 = vsel %vm1355, %v1309, 0
      %v1363 = vsel %vm1355, %v1310, 0
      %v1366 = vsel %vm1355, %v1311, 0
      %v1369 = vsel %vm1355, %v1312, 0
      %v1372 = vsel %vm1355, %v1313, 0
      %v1375 = vsel %vm1355, %v1314, 0
      %v1378 = vsel %vm1355, %v1315, 0
      %1380 = vmatprep.subr.bf16.mxu0 0
      %1381 = vmatpush1.bf16.msra.mxu0 %v1347
      %1382 = vmatprep.subr.bf16.mxu0 0
      %1383 = vmatpush1.bf16.msra.mxu0 %v1348
      %1384 = vmatprep.subr.bf16.mxu0 0
      %1385 = vmatpush1.bf16.msra.mxu0 %v1349
      %1386 = vmatprep.subr.bf16.mxu0 0
      %1387 = vmatpush1.bf16.msra.mxu0 %v1350
      %1388 = vmatprep.subr.bf16.mxu0 0
      %1389 = vmatpush1.bf16.msra.mxu0 0
      %1390 = vmatprep.subr.bf16.mxu0 0
      %1391 = vmatpush1.bf16.msra.mxu0 0
      %1392 = vmatprep.subr.bf16.mxu0 0
      %1393 = vmatpush1.bf16.msra.mxu0 0
      %1394 = vmatprep.subr.bf16.mxu0 0
      %1395 = vmatpush1.bf16.msra.mxu0 0
      %1396 = vmatprep.subr.bf16.mxu0 0
      %1397 = vmatpush1.bf16.msra.mxu0 0
      %1398 = vmatprep.subr.bf16.mxu0 0
      %1399 = vmatpush1.bf16.msra.mxu0 0
      %1400 = vmatprep.subr.bf16.mxu0 0
      %1401 = vmatpush1.bf16.msra.mxu0 0
      %1402 = vmatprep.subr.bf16.mxu0 0
      %1403 = vmatpush1.bf16.msra.mxu0 0
      %1404 = vmatprep.subr.bf16.mxu0 0
      %1405 = vmatpush1.bf16.msra.mxu0 0
      %1406 = vmatprep.subr.bf16.mxu0 0
      %1407 = vmatpush1.bf16.msra.mxu0 0
      %1408 = vmatprep.subr.bf16.mxu0 0
      %1409 = vmatpush1.bf16.msra.mxu0 0
      %1410 = vmatprep.subr.bf16.mxu0 0
      %1411 = vmatpush1.bf16.msra.mxu0 0
      %1412 = vmatprep.mubr.bf16.mxu0 0
      %1413 = vmatmul.mubr.bf16.gmra.mrb[0].mxu0 %v1357
      %v1414 = vpop.f32.mrb[0].mxu0
      %v1415 = vadd.f32 %v1329, %v1414
      %v1416 = vpop.f32.mrb[0].mxu0
      %v1417 = vpop.f32.mrb[0].mxu0
      %v1418 = vadd.f32 %v1329, %v1417
      %v1419 = vpop.f32.mrb[0].mxu0
      %1420 = vmatprep.mubr.bf16.mxu0 0
      %1421 = vmatmul.mubr.bf16.gmra.mrb[0].mxu0 %v1360
      %v1422 = vpop.f32.mrb[0].mxu0
      %v1423 = vadd.f32 %v1329, %v1422
      %v1424 = vpop.f32.mrb[0].mxu0
      %v1425 = vpop.f32.mrb[0].mxu0
      %v1426 = vadd.f32 %v1329, %v1425
      %v1427 = vpop.f32.mrb[0].mxu0
      %1428 = vmatprep.mubr.bf16.mxu0 0
      %1429 = vmatmul.mubr.bf16.gmra.mrb[0].mxu0 %v1363
      %v1430 = vpop.f32.mrb[0].mxu0
      %v1431 = vadd.f32 %v1329, %v1430
      %v1432 = vpop.f32.mrb[0].mxu0
      %v1433 = vpop.f32.mrb[0].mxu0
      %v1434 = vadd.f32 %v1329, %v1433
      %v1435 = vpop.f32.mrb[0].mxu0
      %1436 = vmatprep.mubr.bf16.mxu0 0
      %1437 = vmatmul.mubr.bf16.gmra.mrb[0].mxu0 %v1366
      %v1438 = vpop.f32.mrb[0].mxu0
      %v1439 = vadd.f32 %v1329, %v1438
      %v1440 = vpop.f32.mrb[0].mxu0
      %v1441 = vpop.f32.mrb[0].mxu0
      %v1442 = vadd.f32 %v1329, %v1441
      %v1443 = vpop.f32.mrb[0].mxu0
      %1444 = vmatprep.mubr.bf16.mxu0 0
      %1445 = vmatmul.mubr.bf16.gmra.mrb[0].mxu0 %v1369
      %v1446 = vpop.f32.mrb[0].mxu0
      %v1447 = vadd.f32 %v1329, %v1446
      %v1448 = vpop.f32.mrb[0].mxu0
      %v1449 = vpop.f32.mrb[0].mxu0
      %v1450 = vadd.f32 %v1329, %v1449
      %v1451 = vpop.f32.mrb[0].mxu0
      %1452 = vmatprep.mubr.bf16.mxu0 0
      %1453 = vmatmul.mubr.bf16.gmra.mrb[0].mxu0 %v1372
      %v1454 = vpop.f32.mrb[0].mxu0
      %v1455 = vadd.f32 %v1329, %v1454
      %v1456 = vpop.f32.mrb[0].mxu0
      %v1457 = vpop.f32.mrb[0].mxu0
      %v1458 = vadd.f32 %v1329, %v1457
      %v1459 = vpop.f32.mrb[0].mxu0
      %1460 = vmatprep.mubr.bf16.mxu0 0
      %1461 = vmatmul.mubr.bf16.gmra.mrb[0].mxu0 %v1375
      %v1462 = vpop.f32.mrb[0].mxu0
      %v1463 = vadd.f32 %v1329, %v1462
      %v1464 = vpop.f32.mrb[0].mxu0
      %v1465 = vpop.f32.mrb[0].mxu0
      %v1466 = vadd.f32 %v1329, %v1465
      %v1467 = vpop.f32.mrb[0].mxu0
      %1468 = vmatprep.mubr.bf16.mxu0 0
      %1469 = vmatmul.mubr.bf16.gmra.mrb[0].mxu0 %v1378
      %v1470 = vpop.f32.mrb[0].mxu0
      %v1471 = vadd.f32 %v1329, %v1470
      %v1472 = vpop.f32.mrb[0].mxu0
      %v1473 = vpop.f32.mrb[0].mxu0
      %v1474 = vadd.f32 %v1329, %v1473
      %v1475 = vpop.f32.mrb[0].mxu0
      %1476 = vdwg.mxu0
      %v1477 = vmax.f32 %v1415, 0.0
      %v1478 = vmax.f32 %v1418, 0.0
      %v1479 = vmax.f32 %v1423, 0.0
      %v1480 = vmax.f32 %v1426, 0.0
      %v1481 = vmax.f32 %v1431, 0.0
      %v1482 = vmax.f32 %v1434, 0.0
      %v1483 = vmax.f32 %v1439, 0.0
      %v1484 = vmax.f32 %v1442, 0.0
      %v1485 = vmax.f32 %v1447, 0.0
      %v1486 = vmax.f32 %v1450, 0.0
      %v1487 = vmax.f32 %v1455, 0.0
      %v1488 = vmax.f32 %v1458, 0.0
      %v1489 = vmax.f32 %v1463, 0.0
      %v1490 = vmax.f32 %v1466, 0.0
      %v1491 = vmax.f32 %v1471, 0.0
      %v1492 = vmax.f32 %v1474, 0.0
      %v1493 = vpack.c.bf16 %v1478, %v1477
      %v1494 = vpack.c.bf16 %v1480, %v1479
      %v1495 = vpack.c.bf16 %v1482, %v1481
      %v1496 = vpack.c.bf16 %v1484, %v1483
      %v1497 = vpack.c.bf16 %v1486, %v1485
      %v1498 = vpack.c.bf16 %v1488, %v1487
      %v1499 = vpack.c.bf16 %v1490, %v1489
      %v1500 = vpack.c.bf16 %v1492, %v1491
      %v1501 = vld [vmem:[%s10] sm:$0xf]
      %v1502 = vld [vmem:[%s10 + $0x4] sm:$0xf]
      %v1503 = vld [vmem:[%s10 + $0x8] sm:$0xf]
      %v1504 = vld [vmem:[%s10 + $0xc] sm:$0xf]
      %v1505 = vld [vmem:[%s10 + $0x10] sm:$0xf]
      %v1506 = vld [vmem:[%s10 + $0x14] sm:$0xf]
      %v1507 = vld [vmem:[%s10 + $0x18] sm:$0xf]
      %v1508 = vld [vmem:[%s10 + $0x1c] sm:$0xf]
      %v1509 = vld [vmem:[%s11] sm:$0x1]
      %v1511 = vlaneseq
      %v1512 = vshrl.u32 %v1511, 7
      %v1513 = vsub.s32 0, %v1512
      %v1514 = vrot.slane %v1509, %v1513
      %v1524 = vunpack.c.l.b16 %v1501
      %v1525 = vunpack.c.l.b16 %v1502
      %v1526 = vunpack.c.l.b16 %v1503
      %v1527 = vunpack.c.l.b16 %v1504
      %v1528 = vunpack.c.l.b16 %v1505
      %v1529 = vunpack.c.l.b16 %v1506
      %v1530 = vunpack.c.l.b16 %v1507
      %v1531 = vunpack.c.l.b16 %v1508
      %v1532 = vpack.c.b16 %v1525, %v1524
      %v1533 = vpack.c.b16 %v1527, %v1526
      %v1534 = vpack.c.b16 %v1529, %v1528
      %v1535 = vpack.c.b16 %v1531, %v1530
      %v1541 = vsel %vm1355, %v1493, 0
      %v1544 = vsel %vm1355, %v1494, 0
      %v1547 = vsel %vm1355, %v1495, 0
      %v1550 = vsel %vm1355, %v1496, 0
      %v1553 = vsel %vm1355, %v1497, 0
      %v1556 = vsel %vm1355, %v1498, 0
      %v1559 = vsel %vm1355, %v1499, 0
      %v1562 = vsel %vm1355, %v1500, 0
      %1564 = vmatprep.subr.bf16.mxu0 0
      %1565 = vmatpush1.bf16.msra.mxu0 %v1532
      %1566 = vmatprep.subr.bf16.mxu0 0
      %1567 = vmatpush1.bf16.msra.mxu0 %v1533
      %1568 = vmatprep.subr.bf16.mxu0 0
      %1569 = vmatpush1.bf16.msra.mxu0 %v1534
      %1570 = vmatprep.subr.bf16.mxu0 0
      %1571 = vmatpush1.bf16.msra.mxu0 %v1535
      %1572 = vmatprep.subr.bf16.mxu0 0
      %1573 = vmatpush1.bf16.msra.mxu0 0
      %1574 = vmatprep.subr.bf16.mxu0 0
      %1575 = vmatpush1.bf16.msra.mxu0 0
      %1576 = vmatprep.subr.bf16.mxu0 0
      %1577 = vmatpush1.bf16.msra.mxu0 0
      %1578 = vmatprep.subr.bf16.mxu0 0
      %1579 = vmatpush1.bf16.msra.mxu0 0
      %1580 = vmatprep.subr.bf16.mxu0 0
      %1581 = vmatpush1.bf16.msra.mxu0 0
      %1582 = vmatprep.subr.bf16.mxu0 0
      %1583 = vmatpush1.bf16.msra.mxu0 0
      %1584 = vmatprep.subr.bf16.mxu0 0
      %1585 = vmatpush1.bf16.msra.mxu0 0
      %1586 = vmatprep.subr.bf16.mxu0 0
      %1587 = vmatpush1.bf16.msra.mxu0 0
      %1588 = vmatprep.subr.bf16.mxu0 0
      %1589 = vmatpush1.bf16.msra.mxu0 0
      %1590 = vmatprep.subr.bf16.mxu0 0
      %1591 = vmatpush1.bf16.msra.mxu0 0
      %1592 = vmatprep.subr.bf16.mxu0 0
      %1593 = vmatpush1.bf16.msra.mxu0 0
      %1594 = vmatprep.subr.bf16.mxu0 0
      %1595 = vmatpush1.bf16.msra.mxu0 0
      %1596 = vmatprep.mubr.bf16.mxu0 0
      %1597 = vmatmul.mubr.bf16.gmra.mrb[0].mxu0 %v1541
      %v1598 = vpop.f32.mrb[0].mxu0
      %v1599 = vadd.f32 %v1514, %v1598
      %v1600 = vpop.f32.mrb[0].mxu0
      %v1601 = vpop.f32.mrb[0].mxu0
      %v1602 = vadd.f32 %v1514, %v1601
      %v1603 = vpop.f32.mrb[0].mxu0
      %1604 = vmatprep.mubr.bf16.mxu0 0
      %1605 = vmatmul.mubr.bf16.gmra.mrb[0].mxu0 %v1544
      %v1606 = vpop.f32.mrb[0].mxu0
      %v1607 = vadd.f32 %v1514, %v1606
      %v1608 = vpop.f32.mrb[0].mxu0
      %v1609 = vpop.f32.mrb[0].mxu0
      %v1610 = vadd.f32 %v1514, %v1609
      %v1611 = vpop.f32.mrb[0].mxu0
      %1612 = vmatprep.mubr.bf16.mxu0 0
      %1613 = vmatmul.mubr.bf16.gmra.mrb[0].mxu0 %v1547
      %v1614 = vpop.f32.mrb[0].mxu0
      %v1615 = vadd.f32 %v1514, %v1614
      %v1616 = vpop.f32.mrb[0].mxu0
      %v1617 = vpop.f32.mrb[0].mxu0
      %v1618 = vadd.f32 %v1514, %v1617
      %v1619 = vpop.f32.mrb[0].mxu0
      %1620 = vmatprep.mubr.bf16.mxu0 0
      %1621 = vmatmul.mubr.bf16.gmra.mrb[0].mxu0 %v1550
      %v1622 = vpop.f32.mrb[0].mxu0
      %v1623 = vadd.f32 %v1514, %v1622
      %v1624 = vpop.f32.mrb[0].mxu0
      %v1625 = vpop.f32.mrb[0].mxu0
      %v1626 = vadd.f32 %v1514, %v1625
      %v1627 = vpop.f32.mrb[0].mxu0
      %1628 = vmatprep.mubr.bf16.mxu0 0
      %1629 = vmatmul.mubr.bf16.gmra.mrb[0].mxu0 %v1553
      %v1630 = vpop.f32.mrb[0].mxu0
      %v1631 = vadd.f32 %v1514, %v1630
      %v1632 = vpop.f32.mrb[0].mxu0
      %v1633 = vpop.f32.mrb[0].mxu0
      %v1634 = vadd.f32 %v1514, %v1633
      %v1635 = vpop.f32.mrb[0].mxu0
      %1636 = vmatprep.mubr.bf16.mxu0 0
      %1637 = vmatmul.mubr.bf16.gmra.mrb[0].mxu0 %v1556
      %v1638 = vpop.f32.mrb[0].mxu0
      %v1639 = vadd.f32 %v1514, %v1638
      %v1640 = vpop.f32.mrb[0].mxu0
      %v1641 = vpop.f32.mrb[0].mxu0
      %v1642 = vadd.f32 %v1514, %v1641
      %v1643 = vpop.f32.mrb[0].mxu0
      %1644 = vmatprep.mubr.bf16.mxu0 0
      %1645 = vmatmul.mubr.bf16.gmra.mrb[0].mxu0 %v1559
      %v1646 = vpop.f32.mrb[0].mxu0
      %v1647 = vadd.f32 %v1514, %v1646
      %v1648 = vpop.f32.mrb[0].mxu0
      %v1649 = vpop.f32.mrb[0].mxu0
      %v1650 = vadd.f32 %v1514, %v1649
      %v1651 = vpop.f32.mrb[0].mxu0
      %1652 = vmatprep.mubr.bf16.mxu0 0
      %1653 = vmatmul.mubr.bf16.gmra.mrb[0].mxu0 %v1562
      %v1654 = vpop.f32.mrb[0].mxu0
      %v1655 = vadd.f32 %v1514, %v1654
      %v1656 = vpop.f32.mrb[0].mxu0
      %v1657 = vpop.f32.mrb[0].mxu0
      %v1658 = vadd.f32 %v1514, %v1657
      %v1659 = vpop.f32.mrb[0].mxu0
      %1660 = vdwg.mxu0
      %v1661 = vmax.f32 %v1599, 0.0
      %v1662 = vmax.f32 %v1602, 0.0
      %v1663 = vmax.f32 %v1607, 0.0
      %v1664 = vmax.f32 %v1610, 0.0
      %v1665 = vmax.f32 %v1615, 0.0
      %v1666 = vmax.f32 %v1618, 0.0
      %v1667 = vmax.f32 %v1623, 0.0
      %v1668 = vmax.f32 %v1626, 0.0
      %v1669 = vmax.f32 %v1631, 0.0
      %v1670 = vmax.f32 %v1634, 0.0
      %v1671 = vmax.f32 %v1639, 0.0
      %v1672 = vmax.f32 %v1642, 0.0
      %v1673 = vmax.f32 %v1647, 0.0
      %v1674 = vmax.f32 %v1650, 0.0
      %v1675 = vmax.f32 %v1655, 0.0
      %v1676 = vmax.f32 %v1658, 0.0
      %v1677 = vmax.f32 %v1661, %v1665
      %v1678 = vmax.f32 %v1662, %v1666
      %v1679 = vmax.f32 %v1663, %v1667
      %v1680 = vmax.f32 %v1664, %v1668
      %v1681 = vmax.f32 %v1677, %v1669
      %v1682 = vmax.f32 %v1678, %v1670
      %v1683 = vmax.f32 %v1679, %v1671
      %v1684 = vmax.f32 %v1680, %v1672
      %v1685 = vmax.f32 %v1681, %v1673
      %v1686 = vmax.f32 %v1682, %v1674
      %v1687 = vmax.f32 %v1683, %v1675
      %v1688 = vmax.f32 %v1684, %v1676
      %v1689 = vmax.f32 %v1685, %v1686
      %v1690 = vmax.f32 %v1687, %v1688
      %v1691 = vmax.f32 %v1689, %v1690
      %v1692 = vrot.slane %v1691, 4
      %v1693 = vmax.f32 %v1691, %v1692
      %v1694 = vrot.slane %v1693, 2
      %v1695 = vmax.f32 %v1693, %v1694
      %v1696 = vrot.slane %v1695, 1
      %v1697 = vmax.f32 %v1695, %v1696
      %v1698 = vld [vmem:[%s724] sm:$0x1]
      %v1699 = vpack.c.bf16 %v1697, %v1697
      %v1700 = vld [vmem:[%s13] sm:$0xf]
      %v1701 = vld [vmem:[%s13 + $0x4] sm:$0xf]
      %v1702 = vld [vmem:[%s13 + $0x8] sm:$0xf]
      %v1703 = vld [vmem:[%s13 + $0xc] sm:$0xf]
      %v1704 = vld [vmem:[%s13 + $0x10] sm:$0xf]
      %v1705 = vld [vmem:[%s13 + $0x14] sm:$0xf]
      %v1706 = vld [vmem:[%s13 + $0x18] sm:$0xf]
      %v1707 = vld [vmem:[%s13 + $0x1c] sm:$0xf]
      %v1708 = vld [vmem:[%s13 + $0x20] sm:$0xf]
      %v1709 = vld [vmem:[%s13 + $0x24] sm:$0xf]
      %v1710 = vld [vmem:[%s13 + $0x28] sm:$0xf]
      %v1711 = vld [vmem:[%s13 + $0x2c] sm:$0xf]
      %v1712 = vld [vmem:[%s13 + $0x30] sm:$0xf]
      %v1713 = vld [vmem:[%s13 + $0x34] sm:$0xf]
      %v1714 = vld [vmem:[%s13 + $0x38] sm:$0xf]
      %v1715 = vld [vmem:[%s13 + $0x3c] sm:$0xf]
      %v1716 = vpack.c.bf16 %v1698, %v1698
      %v1717 = vld [vmem:[%s14] sm:$0x3]
      %vm1718 = vcmask 23552
      %v1720 = vsel %vm1718, %v1716, 0
      %vm1722 = vcmask 1040384
      %vm1723 = vcmask 1041408
      %v1724 = vsel %vm1722, 4294967295, 65535
      %v1725 = vsel %vm1723, %v1724, 0
      %v1727 = vand.u32 %v1717, %v1725
      %1729 = vmatprep.subr.bf16.mxu0 0
      %1730 = vmatpush1.bf16.msra.mxu0 %v1727
      %1731 = vmatprep.subr.bf16.mxu0 0
      %1732 = vmatpush1.bf16.msra.mxu0 0
      %1733 = vmatprep.subr.bf16.mxu0 0
      %1734 = vmatpush1.bf16.msra.mxu0 0
      %1735 = vmatprep.subr.bf16.mxu0 0
      %1736 = vmatpush1.bf16.msra.mxu0 0
      %1737 = vmatprep.subr.bf16.mxu0 0
      %1738 = vmatpush1.bf16.msra.mxu0 0
      %1739 = vmatprep.subr.bf16.mxu0 0
      %1740 = vmatpush1.bf16.msra.mxu0 0
      %1741 = vmatprep.subr.bf16.mxu0 0
      %1742 = vmatpush1.bf16.msra.mxu0 0
      %1743 = vmatprep.subr.bf16.mxu0 0
      %1744 = vmatpush1.bf16.msra.mxu0 0
      %1745 = vmatprep.subr.bf16.mxu0 0
      %1746 = vmatpush1.bf16.msra.mxu0 0
      %1747 = vmatprep.subr.bf16.mxu0 0
      %1748 = vmatpush1.bf16.msra.mxu0 0
      %1749 = vmatprep.subr.bf16.mxu0 0
      %1750 = vmatpush1.bf16.msra.mxu0 0
      %1751 = vmatprep.subr.bf16.mxu0 0
      %1752 = vmatpush1.bf16.msra.mxu0 0
      %1753 = vmatprep.subr.bf16.mxu0 0
      %1754 = vmatpush1.bf16.msra.mxu0 0
      %1755 = vmatprep.subr.bf16.mxu0 0
      %1756 = vmatpush1.bf16.msra.mxu0 0
      %1757 = vmatprep.subr.bf16.mxu0 0
      %1758 = vmatpush1.bf16.msra.mxu0 0
      %1759 = vmatprep.subr.bf16.mxu0 0
      %1760 = vmatpush1.bf16.msra.mxu0 0
      %1761 = vmatprep.mubr.bf16.mxu0 0
      %1762 = vmatmul.mubr.bf16.gmra.mrb[0].mxu0 %v1720
      %v1763 = vpop.f32.mrb[0].mxu0
      %v1764 = vadd.f32 0.0, %v1763
      %v1765 = vpop.f32.mrb[0].mxu0
      %v1766 = vpop.f32.mrb[0].mxu0
      %v1767 = vpop.f32.mrb[0].mxu0
      %1768 = vdwg.mxu0
      %v1785 = vunpack.c.l.b16 %v1700
      %v1786 = vunpack.c.l.b16 %v1701
      %v1787 = vunpack.c.l.b16 %v1702
      %v1788 = vunpack.c.l.b16 %v1703
      %v1789 = vunpack.c.l.b16 %v1704
      %v1790 = vunpack.c.l.b16 %v1705
      %v1791 = vunpack.c.l.b16 %v1706
      %v1792 = vunpack.c.l.b16 %v1707
      %v1793 = vunpack.c.l.b16 %v1708
      %v1794 = vunpack.c.l.b16 %v1709
      %v1795 = vunpack.c.l.b16 %v1710
      %v1796 = vunpack.c.l.b16 %v1711
      %v1797 = vunpack.c.l.b16 %v1712
      %v1798 = vunpack.c.l.b16 %v1713
      %v1799 = vunpack.c.l.b16 %v1714
      %v1800 = vunpack.c.l.b16 %v1715
      %v1801 = vpack.c.b16 %v1786, %v1785
      %v1802 = vpack.c.b16 %v1788, %v1787
      %v1803 = vpack.c.b16 %v1790, %v1789
      %v1804 = vpack.c.b16 %v1792, %v1791
      %v1805 = vpack.c.b16 %v1794, %v1793
      %v1806 = vpack.c.b16 %v1796, %v1795
      %v1807 = vpack.c.b16 %v1798, %v1797
      %v1808 = vpack.c.b16 %v1800, %v1799
      %1817 = vmatprep.subr.bf16.mxu0 0
      %1818 = vmatpush1.bf16.msra.mxu0 %v1801
      %1819 = vmatprep.subr.bf16.mxu0 0
      %1820 = vmatpush1.bf16.msra.mxu0 %v1802
      %1821 = vmatprep.subr.bf16.mxu0 0
      %1822 = vmatpush1.bf16.msra.mxu0 %v1803
      %1823 = vmatprep.subr.bf16.mxu0 0
      %1824 = vmatpush1.bf16.msra.mxu0 %v1804
      %1825 = vmatprep.subr.bf16.mxu0 0
      %1826 = vmatpush1.bf16.msra.mxu0 %v1805
      %1827 = vmatprep.subr.bf16.mxu0 0
      %1828 = vmatpush1.bf16.msra.mxu0 %v1806
      %1829 = vmatprep.subr.bf16.mxu0 0
      %1830 = vmatpush1.bf16.msra.mxu0 %v1807
      %1831 = vmatprep.subr.bf16.mxu0 0
      %1832 = vmatpush1.bf16.msra.mxu0 %v1808
      %1833 = vmatprep.subr.bf16.mxu0 0
      %1834 = vmatpush1.bf16.msra.mxu0 0
      %1835 = vmatprep.subr.bf16.mxu0 0
      %1836 = vmatpush1.bf16.msra.mxu0 0
      %1837 = vmatprep.subr.bf16.mxu0 0
      %1838 = vmatpush1.bf16.msra.mxu0 0
      %1839 = vmatprep.subr.bf16.mxu0 0
      %1840 = vmatpush1.bf16.msra.mxu0 0
      %1841 = vmatprep.subr.bf16.mxu0 0
      %1842 = vmatpush1.bf16.msra.mxu0 0
      %1843 = vmatprep.subr.bf16.mxu0 0
      %1844 = vmatpush1.bf16.msra.mxu0 0
      %1845 = vmatprep.subr.bf16.mxu0 0
      %1846 = vmatpush1.bf16.msra.mxu0 0
      %1847 = vmatprep.subr.bf16.mxu0 0
      %1848 = vmatpush1.bf16.msra.mxu0 0
      %1849 = vmatprep.mubr.bf16.mxu0 0
      %1850 = vmatmul.mubr.bf16.gmra.mrb[0].mxu0 %v1699
      %v1851 = vpop.f32.mrb[0].mxu0
      %v1852 = vadd.f32 %v1764, %v1851
      %v1853 = vpop.f32.mrb[0].mxu0
      %v1854 = vpop.f32.mrb[0].mxu0
      %v1855 = vpop.f32.mrb[0].mxu0
      %1856 = vdwg.mxu0
      %v1857 = vld [vmem:[%s15] sm:$0x1]
      %v1858 = vadd.f32 %v1852, %v1857
      %v1859 = vld [vmem:[%s12] sm:$0xf]
      %v1860 = vld [vmem:[%s12 + $0x4] sm:$0xf]
      %v1861 = vld [vmem:[%s12 + $0x8] sm:$0xf]
      %v1862 = vld [vmem:[%s12 + $0xc] sm:$0xf]
      %v1863 = vld [vmem:[%s12 + $0x10] sm:$0xf]
      %v1864 = vld [vmem:[%s12 + $0x14] sm:$0xf]
      %v1865 = vld [vmem:[%s12 + $0x18] sm:$0xf]
      %v1866 = vld [vmem:[%s12 + $0x1c] sm:$0xf]
      %v1875 = vunpack.c.l.b16 %v1859
      %v1876 = vunpack.c.l.b16 %v1860
      %v1877 = vunpack.c.l.b16 %v1861
      %v1878 = vunpack.c.l.b16 %v1862
      %v1879 = vunpack.c.l.b16 %v1863
      %v1880 = vunpack.c.l.b16 %v1864
      %v1881 = vunpack.c.l.b16 %v1865
      %v1882 = vunpack.c.l.b16 %v1866
      %v1883 = vpack.c.b16 %v1876, %v1875
      %v1884 = vpack.c.b16 %v1878, %v1877
      %v1885 = vpack.c.b16 %v1880, %v1879
      %v1886 = vpack.c.b16 %v1882, %v1881
      %1891 = vmatprep.subr.bf16.mxu0 0
      %1892 = vmatpush1.bf16.msra.mxu0 %v1883
      %1893 = vmatprep.subr.bf16.mxu0 0
      %1894 = vmatpush1.bf16.msra.mxu0 %v1884
      %1895 = vmatprep.subr.bf16.mxu0 0
      %1896 = vmatpush1.bf16.msra.mxu0 %v1885
      %1897 = vmatprep.subr.bf16.mxu0 0
      %1898 = vmatpush1.bf16.msra.mxu0 %v1886
      %1899 = vmatprep.subr.bf16.mxu0 0
      %1900 = vmatpush1.bf16.msra.mxu0 0
      %1901 = vmatprep.subr.bf16.mxu0 0
      %1902 = vmatpush1.bf16.msra.mxu0 0
      %1903 = vmatprep.subr.bf16.mxu0 0
      %1904 = vmatpush1.bf16.msra.mxu0 0
      %1905 = vmatprep.subr.bf16.mxu0 0
      %1906 = vmatpush1.bf16.msra.mxu0 0
      %1907 = vmatprep.subr.bf16.mxu0 0
      %1908 = vmatpush1.bf16.msra.mxu0 0
      %1909 = vmatprep.subr.bf16.mxu0 0
      %1910 = vmatpush1.bf16.msra.mxu0 0
      %1911 = vmatprep.subr.bf16.mxu0 0
      %1912 = vmatpush1.bf16.msra.mxu0 0
      %1913 = vmatprep.subr.bf16.mxu0 0
      %1914 = vmatpush1.bf16.msra.mxu0 0
      %1915 = vmatprep.subr.bf16.mxu0 0
      %1916 = vmatpush1.bf16.msra.mxu0 0
      %1917 = vmatprep.subr.bf16.mxu0 0
      %1918 = vmatpush1.bf16.msra.mxu0 0
      %1919 = vmatprep.subr.bf16.mxu0 0
      %1920 = vmatpush1.bf16.msra.mxu0 0
      %1921 = vmatprep.subr.bf16.mxu0 0
      %1922 = vmatpush1.bf16.msra.mxu0 0
      %1923 = vmatprep.mubr.bf16.mxu0 0
      %1924 = vmatmul.mubr.bf16.gmra.mrb[0].mxu0 %v1357
      %v1925 = vpop.f32.mrb[0].mxu0
      %v1926 = vadd.f32 0.0, %v1925
      %v1927 = vpop.f32.mrb[0].mxu0
      %v1928 = vpop.f32.mrb[0].mxu0
      %v1929 = vadd.f32 0.0, %v1928
      %v1930 = vpop.f32.mrb[0].mxu0
      %1931 = vmatprep.mubr.bf16.mxu0 0
      %1932 = vmatmul.mubr.bf16.gmra.mrb[0].mxu0 %v1360
      %v1933 = vpop.f32.mrb[0].mxu0
      %v1934 = vadd.f32 0.0, %v1933
      %v1935 = vpop.f32.mrb[0].mxu0
      %v1936 = vpop.f32.mrb[0].mxu0
      %v1937 = vadd.f32 0.0, %v1936
      %v1938 = vpop.f32.mrb[0].mxu0
      %1939 = vmatprep.mubr.bf16.mxu0 0
      %1940 = vmatmul.mubr.bf16.gmra.mrb[0].mxu0 %v1363
      %v1941 = vpop.f32.mrb[0].mxu0
      %v1942 = vadd.f32 0.0, %v1941
      %v1943 = vpop.f32.mrb[0].mxu0
      %v1944 = vpop.f32.mrb[0].mxu0
      %v1945 = vadd.f32 0.0, %v1944
      %v1946 = vpop.f32.mrb[0].mxu0
      %1947 = vmatprep.mubr.bf16.mxu0 0
      %1948 = vmatmul.mubr.bf16.gmra.mrb[0].mxu0 %v1366
      %v1949 = vpop.f32.mrb[0].mxu0
      %v1950 = vadd.f32 0.0, %v1949
      %v1951 = vpop.f32.mrb[0].mxu0
      %v1952 = vpop.f32.mrb[0].mxu0
      %v1953 = vadd.f32 0.0, %v1952
      %v1954 = vpop.f32.mrb[0].mxu0
      %1955 = vmatprep.mubr.bf16.mxu0 0
      %1956 = vmatmul.mubr.bf16.gmra.mrb[0].mxu0 %v1369
      %v1957 = vpop.f32.mrb[0].mxu0
      %v1958 = vadd.f32 0.0, %v1957
      %v1959 = vpop.f32.mrb[0].mxu0
      %v1960 = vpop.f32.mrb[0].mxu0
      %v1961 = vadd.f32 0.0, %v1960
      %v1962 = vpop.f32.mrb[0].mxu0
      %1963 = vmatprep.mubr.bf16.mxu0 0
      %1964 = vmatmul.mubr.bf16.gmra.mrb[0].mxu0 %v1372
      %v1965 = vpop.f32.mrb[0].mxu0
      %v1966 = vadd.f32 0.0, %v1965
      %v1967 = vpop.f32.mrb[0].mxu0
      %v1968 = vpop.f32.mrb[0].mxu0
      %v1969 = vadd.f32 0.0, %v1968
      %v1970 = vpop.f32.mrb[0].mxu0
      %1971 = vmatprep.mubr.bf16.mxu0 0
      %1972 = vmatmul.mubr.bf16.gmra.mrb[0].mxu0 %v1375
      %v1973 = vpop.f32.mrb[0].mxu0
      %v1974 = vadd.f32 0.0, %v1973
      %v1975 = vpop.f32.mrb[0].mxu0
      %v1976 = vpop.f32.mrb[0].mxu0
      %v1977 = vadd.f32 0.0, %v1976
      %v1978 = vpop.f32.mrb[0].mxu0
      %1979 = vmatprep.mubr.bf16.mxu0 0
      %1980 = vmatmul.mubr.bf16.gmra.mrb[0].mxu0 %v1378
      %v1981 = vpop.f32.mrb[0].mxu0
      %v1982 = vadd.f32 0.0, %v1981
      %v1983 = vpop.f32.mrb[0].mxu0
      %v1984 = vpop.f32.mrb[0].mxu0
      %v1985 = vadd.f32 0.0, %v1984
      %v1986 = vpop.f32.mrb[0].mxu0
      %1987 = vdwg.mxu0
      %v1988 = vlaneseq
      %v1989 = vshrl.u32 %v1988, 7
      %v1990 = vsub.s32 0, %v1989
      %v1991 = vrot.slane %v1858, %v1990
      %v1992 = vadd.f32 %v1926, %v1991
      %v1993 = vadd.f32 %v1929, %v1991
      %v1994 = vadd.f32 %v1934, %v1991
      %v1995 = vadd.f32 %v1937, %v1991
      %v1996 = vadd.f32 %v1942, %v1991
      %v1997 = vadd.f32 %v1945, %v1991
      %v1998 = vadd.f32 %v1950, %v1991
      %v1999 = vadd.f32 %v1953, %v1991
      %v2000 = vadd.f32 %v1958, %v1991
      %v2001 = vadd.f32 %v1961, %v1991
      %v2002 = vadd.f32 %v1966, %v1991
      %v2003 = vadd.f32 %v1969, %v1991
      %v2004 = vadd.f32 %v1974, %v1991
      %v2005 = vadd.f32 %v1977, %v1991
      %v2006 = vadd.f32 %v1982, %v1991
      %v2007 = vadd.f32 %v1985, %v1991
      %v2008 = vmax.f32 %v1992, 0.0
      %v2009 = vmax.f32 %v1993, 0.0
      %v2010 = vmax.f32 %v1994, 0.0
      %v2011 = vmax.f32 %v1995, 0.0
      %v2012 = vmax.f32 %v1996, 0.0
      %v2013 = vmax.f32 %v1997, 0.0
      %v2014 = vmax.f32 %v1998, 0.0
      %v2015 = vmax.f32 %v1999, 0.0
      %v2016 = vmax.f32 %v2000, 0.0
      %v2017 = vmax.f32 %v2001, 0.0
      %v2018 = vmax.f32 %v2002, 0.0
      %v2019 = vmax.f32 %v2003, 0.0
      %v2020 = vmax.f32 %v2004, 0.0
      %v2021 = vmax.f32 %v2005, 0.0
      %v2022 = vmax.f32 %v2006, 0.0
      %v2023 = vmax.f32 %v2007, 0.0
      %v2024 = vpack.c.bf16 %v2009, %v2008
      %v2025 = vpack.c.bf16 %v2011, %v2010
      %v2026 = vpack.c.bf16 %v2013, %v2012
      %v2027 = vpack.c.bf16 %v2015, %v2014
      %v2028 = vpack.c.bf16 %v2017, %v2016
      %v2029 = vpack.c.bf16 %v2019, %v2018
      %v2030 = vpack.c.bf16 %v2021, %v2020
      %v2031 = vpack.c.bf16 %v2023, %v2022
      %v2032 = vld [vmem:[%s16] sm:$0xf]
      %v2033 = vld [vmem:[%s16 + $0x4] sm:$0xf]
      %v2034 = vld [vmem:[%s16 + $0x8] sm:$0xf]
      %v2035 = vld [vmem:[%s16 + $0xc] sm:$0xf]
      %v2036 = vld [vmem:[%s16 + $0x10] sm:$0xf]
      %v2037 = vld [vmem:[%s16 + $0x14] sm:$0xf]
      %v2038 = vld [vmem:[%s16 + $0x18] sm:$0xf]
      %v2039 = vld [vmem:[%s16 + $0x1c] sm:$0xf]
      %v2040 = vld [vmem:[%s16 + $0x20] sm:$0xf]
      %v2041 = vld [vmem:[%s16 + $0x24] sm:$0xf]
      %v2042 = vld [vmem:[%s16 + $0x28] sm:$0xf]
      %v2043 = vld [vmem:[%s16 + $0x2c] sm:$0xf]
      %v2044 = vld [vmem:[%s16 + $0x30] sm:$0xf]
      %v2045 = vld [vmem:[%s16 + $0x34] sm:$0xf]
      %v2046 = vld [vmem:[%s16 + $0x38] sm:$0xf]
      %v2047 = vld [vmem:[%s16 + $0x3c] sm:$0xf]
      %v2048 = vld [vmem:[%s17] sm:$0x1]
      %v2050 = vlaneseq
      %v2051 = vshrl.u32 %v2050, 7
      %v2052 = vsub.s32 0, %v2051
      %v2053 = vrot.slane %v2048, %v2052
      %v2071 = vunpack.c.l.b16 %v2032
      %v2072 = vunpack.c.l.b16 %v2033
      %v2073 = vunpack.c.l.b16 %v2034
      %v2074 = vunpack.c.l.b16 %v2035
      %v2075 = vunpack.c.l.b16 %v2036
      %v2076 = vunpack.c.l.b16 %v2037
      %v2077 = vunpack.c.l.b16 %v2038
      %v2078 = vunpack.c.l.b16 %v2039
      %v2079 = vunpack.c.l.b16 %v2040
      %v2080 = vunpack.c.l.b16 %v2041
      %v2081 = vunpack.c.l.b16 %v2042
      %v2082 = vunpack.c.l.b16 %v2043
      %v2083 = vunpack.c.l.b16 %v2044
      %v2084 = vunpack.c.l.b16 %v2045
      %v2085 = vunpack.c.l.b16 %v2046
      %v2086 = vunpack.c.l.b16 %v2047
      %v2087 = vpack.c.b16 %v2072, %v2071
      %v2088 = vpack.c.b16 %v2074, %v2073
      %v2089 = vpack.c.b16 %v2076, %v2075
      %v2090 = vpack.c.b16 %v2078, %v2077
      %v2091 = vpack.c.b16 %v2080, %v2079
      %v2092 = vpack.c.b16 %v2082, %v2081
      %v2093 = vpack.c.b16 %v2084, %v2083
      %v2094 = vpack.c.b16 %v2086, %v2085
      %2103 = vmatprep.subr.bf16.mxu0 0
      %2104 = vmatpush1.bf16.msra.mxu0 %v2087
      %2105 = vmatprep.subr.bf16.mxu0 0
      %2106 = vmatpush1.bf16.msra.mxu0 %v2088
      %2107 = vmatprep.subr.bf16.mxu0 0
      %2108 = vmatpush1.bf16.msra.mxu0 %v2089
      %2109 = vmatprep.subr.bf16.mxu0 0
      %2110 = vmatpush1.bf16.msra.mxu0 %v2090
      %2111 = vmatprep.subr.bf16.mxu0 0
      %2112 = vmatpush1.bf16.msra.mxu0 %v2091
      %2113 = vmatprep.subr.bf16.mxu0 0
      %2114 = vmatpush1.bf16.msra.mxu0 %v2092
      %2115 = vmatprep.subr.bf16.mxu0 0
      %2116 = vmatpush1.bf16.msra.mxu0 %v2093
      %2117 = vmatprep.subr.bf16.mxu0 0
      %2118 = vmatpush1.bf16.msra.mxu0 %v2094
      %2119 = vmatprep.subr.bf16.mxu0 0
      %2120 = vmatpush1.bf16.msra.mxu0 0
      %2121 = vmatprep.subr.bf16.mxu0 0
      %2122 = vmatpush1.bf16.msra.mxu0 0
      %2123 = vmatprep.subr.bf16.mxu0 0
      %2124 = vmatpush1.bf16.msra.mxu0 0
      %2125 = vmatprep.subr.bf16.mxu0 0
      %2126 = vmatpush1.bf16.msra.mxu0 0
      %2127 = vmatprep.subr.bf16.mxu0 0
      %2128 = vmatpush1.bf16.msra.mxu0 0
      %2129 = vmatprep.subr.bf16.mxu0 0
      %2130 = vmatpush1.bf16.msra.mxu0 0
      %2131 = vmatprep.subr.bf16.mxu0 0
      %2132 = vmatpush1.bf16.msra.mxu0 0
      %2133 = vmatprep.subr.bf16.mxu0 0
      %2134 = vmatpush1.bf16.msra.mxu0 0
      %2135 = vmatprep.mubr.bf16.mxu0 0
      %2136 = vmatmul.mubr.bf16.gmra.mrb[0].mxu0 %v2024
      %v2137 = vpop.f32.mrb[0].mxu0
      %v2138 = vadd.f32 %v2053, %v2137
      %v2139 = vpop.f32.mrb[0].mxu0
      %v2140 = vpop.f32.mrb[0].mxu0
      %v2141 = vadd.f32 %v2053, %v2140
      %v2142 = vpop.f32.mrb[0].mxu0
      %2143 = vmatprep.mubr.bf16.mxu0 0
      %2144 = vmatmul.mubr.bf16.gmra.mrb[0].mxu0 %v2025
      %v2145 = vpop.f32.mrb[0].mxu0
      %v2146 = vadd.f32 %v2053, %v2145
      %v2147 = vpop.f32.mrb[0].mxu0
      %v2148 = vpop.f32.mrb[0].mxu0
      %v2149 = vadd.f32 %v2053, %v2148
      %v2150 = vpop.f32.mrb[0].mxu0
      %2151 = vmatprep.mubr.bf16.mxu0 0
      %2152 = vmatmul.mubr.bf16.gmra.mrb[0].mxu0 %v2026
      %v2153 = vpop.f32.mrb[0].mxu0
      %v2154 = vadd.f32 %v2053, %v2153
      %v2155 = vpop.f32.mrb[0].mxu0
      %v2156 = vpop.f32.mrb[0].mxu0
      %v2157 = vadd.f32 %v2053, %v2156
      %v2158 = vpop.f32.mrb[0].mxu0
      %2159 = vmatprep.mubr.bf16.mxu0 0
      %2160 = vmatmul.mubr.bf16.gmra.mrb[0].mxu0 %v2027
      %v2161 = vpop.f32.mrb[0].mxu0
      %v2162 = vadd.f32 %v2053, %v2161
      %v2163 = vpop.f32.mrb[0].mxu0
      %v2164 = vpop.f32.mrb[0].mxu0
      %v2165 = vadd.f32 %v2053, %v2164
      %v2166 = vpop.f32.mrb[0].mxu0
      %2167 = vmatprep.mubr.bf16.mxu0 0
      %2168 = vmatmul.mubr.bf16.gmra.mrb[0].mxu0 %v2028
      %v2169 = vpop.f32.mrb[0].mxu0
      %v2170 = vadd.f32 %v2053, %v2169
      %v2171 = vpop.f32.mrb[0].mxu0
      %v2172 = vpop.f32.mrb[0].mxu0
      %v2173 = vadd.f32 %v2053, %v2172
      %v2174 = vpop.f32.mrb[0].mxu0
      %2175 = vmatprep.mubr.bf16.mxu0 0
      %2176 = vmatmul.mubr.bf16.gmra.mrb[0].mxu0 %v2029
      %v2177 = vpop.f32.mrb[0].mxu0
      %v2178 = vadd.f32 %v2053, %v2177
      %v2179 = vpop.f32.mrb[0].mxu0
      %v2180 = vpop.f32.mrb[0].mxu0
      %v2181 = vadd.f32 %v2053, %v2180
      %v2182 = vpop.f32.mrb[0].mxu0
      %2183 = vmatprep.mubr.bf16.mxu0 0
      %2184 = vmatmul.mubr.bf16.gmra.mrb[0].mxu0 %v2030
      %v2185 = vpop.f32.mrb[0].mxu0
      %v2186 = vadd.f32 %v2053, %v2185
      %v2187 = vpop.f32.mrb[0].mxu0
      %v2188 = vpop.f32.mrb[0].mxu0
      %v2189 = vadd.f32 %v2053, %v2188
      %v2190 = vpop.f32.mrb[0].mxu0
      %2191 = vmatprep.mubr.bf16.mxu0 0
      %2192 = vmatmul.mubr.bf16.gmra.mrb[0].mxu0 %v2031
      %v2193 = vpop.f32.mrb[0].mxu0
      %v2194 = vadd.f32 %v2053, %v2193
      %v2195 = vpop.f32.mrb[0].mxu0
      %v2196 = vpop.f32.mrb[0].mxu0
      %v2197 = vadd.f32 %v2053, %v2196
      %v2198 = vpop.f32.mrb[0].mxu0
      %2199 = vdwg.mxu0
      %v2200 = vmax.f32 %v2138, 0.0
      %v2201 = vmax.f32 %v2141, 0.0
      %v2202 = vmax.f32 %v2146, 0.0
      %v2203 = vmax.f32 %v2149, 0.0
      %v2204 = vmax.f32 %v2154, 0.0
      %v2205 = vmax.f32 %v2157, 0.0
      %v2206 = vmax.f32 %v2162, 0.0
      %v2207 = vmax.f32 %v2165, 0.0
      %v2208 = vmax.f32 %v2170, 0.0
      %v2209 = vmax.f32 %v2173, 0.0
      %v2210 = vmax.f32 %v2178, 0.0
      %v2211 = vmax.f32 %v2181, 0.0
      %v2212 = vmax.f32 %v2186, 0.0
      %v2213 = vmax.f32 %v2189, 0.0
      %v2214 = vmax.f32 %v2194, 0.0
      %v2215 = vmax.f32 %v2197, 0.0
      %v2216 = vpack.c.bf16 %v2201, %v2200
      %v2217 = vpack.c.bf16 %v2203, %v2202
      %v2218 = vpack.c.bf16 %v2205, %v2204
      %v2219 = vpack.c.bf16 %v2207, %v2206
      %v2220 = vpack.c.bf16 %v2209, %v2208
      %v2221 = vpack.c.bf16 %v2211, %v2210
      %v2222 = vpack.c.bf16 %v2213, %v2212
      %v2223 = vpack.c.bf16 %v2215, %v2214
      %v2224 = vld [vmem:[%s18] sm:$0xf]
      %v2225 = vld [vmem:[%s18 + $0x4] sm:$0xf]
      %v2226 = vld [vmem:[%s18 + $0x8] sm:$0xf]
      %v2227 = vld [vmem:[%s18 + $0xc] sm:$0xf]
      %v2228 = vld [vmem:[%s18 + $0x10] sm:$0xf]
      %v2229 = vld [vmem:[%s18 + $0x14] sm:$0xf]
      %v2230 = vld [vmem:[%s18 + $0x18] sm:$0xf]
      %v2231 = vld [vmem:[%s18 + $0x1c] sm:$0xf]
      %v2232 = vld [vmem:[%s19] sm:$0x1]
      %v2234 = vlaneseq
      %v2235 = vshrl.u32 %v2234, 7
      %v2236 = vsub.s32 0, %v2235
      %v2237 = vrot.slane %v2232, %v2236
      %v2247 = vunpack.c.l.b16 %v2224
      %v2248 = vunpack.c.l.b16 %v2225
      %v2249 = vunpack.c.l.b16 %v2226
      %v2250 = vunpack.c.l.b16 %v2227
      %v2251 = vunpack.c.l.b16 %v2228
      %v2252 = vunpack.c.l.b16 %v2229
      %v2253 = vunpack.c.l.b16 %v2230
      %v2254 = vunpack.c.l.b16 %v2231
      %v2255 = vpack.c.b16 %v2248, %v2247
      %v2256 = vpack.c.b16 %v2250, %v2249
      %v2257 = vpack.c.b16 %v2252, %v2251
      %v2258 = vpack.c.b16 %v2254, %v2253
      %v2264 = vsel %vm1355, %v2216, 0
      %v2267 = vsel %vm1355, %v2217, 0
      %v2270 = vsel %vm1355, %v2218, 0
      %v2273 = vsel %vm1355, %v2219, 0
      %v2276 = vsel %vm1355, %v2220, 0
      %v2279 = vsel %vm1355, %v2221, 0
      %v2282 = vsel %vm1355, %v2222, 0
      %v2285 = vsel %vm1355, %v2223, 0
      %2287 = vmatprep.subr.bf16.mxu0 0
      %2288 = vmatpush1.bf16.msra.mxu0 %v2255
      %2289 = vmatprep.subr.bf16.mxu0 0
      %2290 = vmatpush1.bf16.msra.mxu0 %v2256
      %2291 = vmatprep.subr.bf16.mxu0 0
      %2292 = vmatpush1.bf16.msra.mxu0 %v2257
      %2293 = vmatprep.subr.bf16.mxu0 0
      %2294 = vmatpush1.bf16.msra.mxu0 %v2258
      %2295 = vmatprep.subr.bf16.mxu0 0
      %2296 = vmatpush1.bf16.msra.mxu0 0
      %2297 = vmatprep.subr.bf16.mxu0 0
      %2298 = vmatpush1.bf16.msra.mxu0 0
      %2299 = vmatprep.subr.bf16.mxu0 0
      %2300 = vmatpush1.bf16.msra.mxu0 0
      %2301 = vmatprep.subr.bf16.mxu0 0
      %2302 = vmatpush1.bf16.msra.mxu0 0
      %2303 = vmatprep.subr.bf16.mxu0 0
      %2304 = vmatpush1.bf16.msra.mxu0 0
      %2305 = vmatprep.subr.bf16.mxu0 0
      %2306 = vmatpush1.bf16.msra.mxu0 0
      %2307 = vmatprep.subr.bf16.mxu0 0
      %2308 = vmatpush1.bf16.msra.mxu0 0
      %2309 = vmatprep.subr.bf16.mxu0 0
      %2310 = vmatpush1.bf16.msra.mxu0 0
      %2311 = vmatprep.subr.bf16.mxu0 0
      %2312 = vmatpush1.bf16.msra.mxu0 0
      %2313 = vmatprep.subr.bf16.mxu0 0
      %2314 = vmatpush1.bf16.msra.mxu0 0
      %2315 = vmatprep.subr.bf16.mxu0 0
      %2316 = vmatpush1.bf16.msra.mxu0 0
      %2317 = vmatprep.subr.bf16.mxu0 0
      %2318 = vmatpush1.bf16.msra.mxu0 0
      %2319 = vmatprep.mubr.bf16.mxu0 0
      %2320 = vmatmul.mubr.bf16.gmra.mrb[0].mxu0 %v2264
      %v2321 = vpop.f32.mrb[0].mxu0
      %v2322 = vadd.f32 %v2237, %v2321
      %v2323 = vpop.f32.mrb[0].mxu0
      %v2324 = vpop.f32.mrb[0].mxu0
      %v2325 = vadd.f32 %v2237, %v2324
      %v2326 = vpop.f32.mrb[0].mxu0
      %2327 = vmatprep.mubr.bf16.mxu0 0
      %2328 = vmatmul.mubr.bf16.gmra.mrb[0].mxu0 %v2267
      %v2329 = vpop.f32.mrb[0].mxu0
      %v2330 = vadd.f32 %v2237, %v2329
      %v2331 = vpop.f32.mrb[0].mxu0
      %v2332 = vpop.f32.mrb[0].mxu0
      %v2333 = vadd.f32 %v2237, %v2332
      %v2334 = vpop.f32.mrb[0].mxu0
      %2335 = vmatprep.mubr.bf16.mxu0 0
      %2336 = vmatmul.mubr.bf16.gmra.mrb[0].mxu0 %v2270
      %v2337 = vpop.f32.mrb[0].mxu0
      %v2338 = vadd.f32 %v2237, %v2337
      %v2339 = vpop.f32.mrb[0].mxu0
      %v2340 = vpop.f32.mrb[0].mxu0
      %v2341 = vadd.f32 %v2237, %v2340
      %v2342 = vpop.f32.mrb[0].mxu0
      %2343 = vmatprep.mubr.bf16.mxu0 0
      %2344 = vmatmul.mubr.bf16.gmra.mrb[0].mxu0 %v2273
      %v2345 = vpop.f32.mrb[0].mxu0
      %v2346 = vadd.f32 %v2237, %v2345
      %v2347 = vpop.f32.mrb[0].mxu0
      %v2348 = vpop.f32.mrb[0].mxu0
      %v2349 = vadd.f32 %v2237, %v2348
      %v2350 = vpop.f32.mrb[0].mxu0
      %2351 = vmatprep.mubr.bf16.mxu0 0
      %2352 = vmatmul.mubr.bf16.gmra.mrb[0].mxu0 %v2276
      %v2353 = vpop.f32.mrb[0].mxu0
      %v2354 = vadd.f32 %v2237, %v2353
      %v2355 = vpop.f32.mrb[0].mxu0
      %v2356 = vpop.f32.mrb[0].mxu0
      %v2357 = vadd.f32 %v2237, %v2356
      %v2358 = vpop.f32.mrb[0].mxu0
      %2359 = vmatprep.mubr.bf16.mxu0 0
      %2360 = vmatmul.mubr.bf16.gmra.mrb[0].mxu0 %v2279
      %v2361 = vpop.f32.mrb[0].mxu0
      %v2362 = vadd.f32 %v2237, %v2361
      %v2363 = vpop.f32.mrb[0].mxu0
      %v2364 = vpop.f32.mrb[0].mxu0
      %v2365 = vadd.f32 %v2237, %v2364
      %v2366 = vpop.f32.mrb[0].mxu0
      %2367 = vmatprep.mubr.bf16.mxu0 0
      %2368 = vmatmul.mubr.bf16.gmra.mrb[0].mxu0 %v2282
      %v2369 = vpop.f32.mrb[0].mxu0
      %v2370 = vadd.f32 %v2237, %v2369
      %v2371 = vpop.f32.mrb[0].mxu0
      %v2372 = vpop.f32.mrb[0].mxu0
      %v2373 = vadd.f32 %v2237, %v2372
      %v2374 = vpop.f32.mrb[0].mxu0
      %2375 = vmatprep.mubr.bf16.mxu0 0
      %2376 = vmatmul.mubr.bf16.gmra.mrb[0].mxu0 %v2285
      %v2377 = vpop.f32.mrb[0].mxu0
      %v2378 = vadd.f32 %v2237, %v2377
      %v2379 = vpop.f32.mrb[0].mxu0
      %v2380 = vpop.f32.mrb[0].mxu0
      %v2381 = vadd.f32 %v2237, %v2380
      %v2382 = vpop.f32.mrb[0].mxu0
      %2383 = vdwg.mxu0
      %v2384 = vmax.f32 %v2322, 0.0
      %v2385 = vmax.f32 %v2325, 0.0
      %v2386 = vmax.f32 %v2330, 0.0
      %v2387 = vmax.f32 %v2333, 0.0
      %v2388 = vmax.f32 %v2338, 0.0
      %v2389 = vmax.f32 %v2341, 0.0
      %v2390 = vmax.f32 %v2346, 0.0
      %v2391 = vmax.f32 %v2349, 0.0
      %v2392 = vmax.f32 %v2354, 0.0
      %v2393 = vmax.f32 %v2357, 0.0
      %v2394 = vmax.f32 %v2362, 0.0
      %v2395 = vmax.f32 %v2365, 0.0
      %v2396 = vmax.f32 %v2370, 0.0
      %v2397 = vmax.f32 %v2373, 0.0
      %v2398 = vmax.f32 %v2378, 0.0
      %v2399 = vmax.f32 %v2381, 0.0
      %v2400 = vpack.c.bf16 %v2385, %v2384
      %v2401 = vpack.c.bf16 %v2387, %v2386
      %v2402 = vpack.c.bf16 %v2389, %v2388
      %v2403 = vpack.c.bf16 %v2391, %v2390
      %v2404 = vpack.c.bf16 %v2393, %v2392
      %v2405 = vpack.c.bf16 %v2395, %v2394
      %v2406 = vpack.c.bf16 %v2397, %v2396
      %v2407 = vpack.c.bf16 %v2399, %v2398
      %v2408 = vld [vmem:[%s20] sm:$0xf]
      %v2409 = vld [vmem:[%s20 + $0x4] sm:$0xf]
      %v2410 = vld [vmem:[%s20 + $0x8] sm:$0xf]
      %v2411 = vld [vmem:[%s20 + $0xc] sm:$0xf]
      %v2412 = vld [vmem:[%s20 + $0x10] sm:$0xf]
      %v2413 = vld [vmem:[%s20 + $0x14] sm:$0xf]
      %v2414 = vld [vmem:[%s20 + $0x18] sm:$0xf]
      %v2415 = vld [vmem:[%s20 + $0x1c] sm:$0xf]
      %v2416 = vld [vmem:[%s21] sm:$0x1]
      %v2418 = vlaneseq
      %v2419 = vshrl.u32 %v2418, 7
      %v2420 = vsub.s32 0, %v2419
      %v2421 = vrot.slane %v2416, %v2420
      %v2431 = vunpack.c.l.b16 %v2408
      %v2432 = vunpack.c.l.b16 %v2409
      %v2433 = vunpack.c.l.b16 %v2410
      %v2434 = vunpack.c.l.b16 %v2411
      %v2435 = vunpack.c.l.b16 %v2412
      %v2436 = vunpack.c.l.b16 %v2413
      %v2437 = vunpack.c.l.b16 %v2414
      %v2438 = vunpack.c.l.b16 %v2415
      %v2439 = vpack.c.b16 %v2432, %v2431
      %v2440 = vpack.c.b16 %v2434, %v2433
      %v2441 = vpack.c.b16 %v2436, %v2435
      %v2442 = vpack.c.b16 %v2438, %v2437
      %v2448 = vsel %vm1355, %v2400, 0
      %v2451 = vsel %vm1355, %v2401, 0
      %v2454 = vsel %vm1355, %v2402, 0
      %v2457 = vsel %vm1355, %v2403, 0
      %v2460 = vsel %vm1355, %v2404, 0
      %v2463 = vsel %vm1355, %v2405, 0
      %v2466 = vsel %vm1355, %v2406, 0
      %v2469 = vsel %vm1355, %v2407, 0
      %2471 = vmatprep.subr.bf16.mxu0 0
      %2472 = vmatpush1.bf16.msra.mxu0 %v2439
      %2473 = vmatprep.subr.bf16.mxu0 0
      %2474 = vmatpush1.bf16.msra.mxu0 %v2440
      %2475 = vmatprep.subr.bf16.mxu0 0
      %2476 = vmatpush1.bf16.msra.mxu0 %v2441
      %2477 = vmatprep.subr.bf16.mxu0 0
      %2478 = vmatpush1.bf16.msra.mxu0 %v2442
      %2479 = vmatprep.subr.bf16.mxu0 0
      %2480 = vmatpush1.bf16.msra.mxu0 0
      %2481 = vmatprep.subr.bf16.mxu0 0
      %2482 = vmatpush1.bf16.msra.mxu0 0
      %2483 = vmatprep.subr.bf16.mxu0 0
      %2484 = vmatpush1.bf16.msra.mxu0 0
      %2485 = vmatprep.subr.bf16.mxu0 0
      %2486 = vmatpush1.bf16.msra.mxu0 0
      %2487 = vmatprep.subr.bf16.mxu0 0
      %2488 = vmatpush1.bf16.msra.mxu0 0
      %2489 = vmatprep.subr.bf16.mxu0 0
      %2490 = vmatpush1.bf16.msra.mxu0 0
      %2491 = vmatprep.subr.bf16.mxu0 0
      %2492 = vmatpush1.bf16.msra.mxu0 0
      %2493 = vmatprep.subr.bf16.mxu0 0
      %2494 = vmatpush1.bf16.msra.mxu0 0
      %2495 = vmatprep.subr.bf16.mxu0 0
      %2496 = vmatpush1.bf16.msra.mxu0 0
      %2497 = vmatprep.subr.bf16.mxu0 0
      %2498 = vmatpush1.bf16.msra.mxu0 0
      %2499 = vmatprep.subr.bf16.mxu0 0
      %2500 = vmatpush1.bf16.msra.mxu0 0
      %2501 = vmatprep.subr.bf16.mxu0 0
      %2502 = vmatpush1.bf16.msra.mxu0 0
      %2503 = vmatprep.mubr.bf16.mxu0 0
      %2504 = vmatmul.mubr.bf16.gmra.mrb[0].mxu0 %v2448
      %v2505 = vpop.f32.mrb[0].mxu0
      %v2506 = vadd.f32 %v2421, %v2505
      %v2507 = vpop.f32.mrb[0].mxu0
      %v2508 = vpop.f32.mrb[0].mxu0
      %v2509 = vadd.f32 %v2421, %v2508
      %v2510 = vpop.f32.mrb[0].mxu0
      %2511 = vmatprep.mubr.bf16.mxu0 0
      %2512 = vmatmul.mubr.bf16.gmra.mrb[0].mxu0 %v2451
      %v2513 = vpop.f32.mrb[0].mxu0
      %v2514 = vadd.f32 %v2421, %v2513
      %v2515 = vpop.f32.mrb[0].mxu0
      %v2516 = vpop.f32.mrb[0].mxu0
      %v2517 = vadd.f32 %v2421, %v2516
      %v2518 = vpop.f32.mrb[0].mxu0
      %2519 = vmatprep.mubr.bf16.mxu0 0
      %2520 = vmatmul.mubr.bf16.gmra.mrb[0].mxu0 %v2454
      %v2521 = vpop.f32.mrb[0].mxu0
      %v2522 = vadd.f32 %v2421, %v2521
      %v2523 = vpop.f32.mrb[0].mxu0
      %v2524 = vpop.f32.mrb[0].mxu0
      %v2525 = vadd.f32 %v2421, %v2524
      %v2526 = vpop.f32.mrb[0].mxu0
      %2527 = vmatprep.mubr.bf16.mxu0 0
      %2528 = vmatmul.mubr.bf16.gmra.mrb[0].mxu0 %v2457
      %v2529 = vpop.f32.mrb[0].mxu0
      %v2530 = vadd.f32 %v2421, %v2529
      %v2531 = vpop.f32.mrb[0].mxu0
      %v2532 = vpop.f32.mrb[0].mxu0
      %v2533 = vadd.f32 %v2421, %v2532
      %v2534 = vpop.f32.mrb[0].mxu0
      %2535 = vmatprep.mubr.bf16.mxu0 0
      %2536 = vmatmul.mubr.bf16.gmra.mrb[0].mxu0 %v2460
      %v2537 = vpop.f32.mrb[0].mxu0
      %v2538 = vadd.f32 %v2421, %v2537
      %v2539 = vpop.f32.mrb[0].mxu0
      %v2540 = vpop.f32.mrb[0].mxu0
      %v2541 = vadd.f32 %v2421, %v2540
      %v2542 = vpop.f32.mrb[0].mxu0
      %2543 = vmatprep.mubr.bf16.mxu0 0
      %2544 = vmatmul.mubr.bf16.gmra.mrb[0].mxu0 %v2463
      %v2545 = vpop.f32.mrb[0].mxu0
      %v2546 = vadd.f32 %v2421, %v2545
      %v2547 = vpop.f32.mrb[0].mxu0
      %v2548 = vpop.f32.mrb[0].mxu0
      %v2549 = vadd.f32 %v2421, %v2548
      %v2550 = vpop.f32.mrb[0].mxu0
      %2551 = vmatprep.mubr.bf16.mxu0 0
      %2552 = vmatmul.mubr.bf16.gmra.mrb[0].mxu0 %v2466
      %v2553 = vpop.f32.mrb[0].mxu0
      %v2554 = vadd.f32 %v2421, %v2553
      %v2555 = vpop.f32.mrb[0].mxu0
      %v2556 = vpop.f32.mrb[0].mxu0
      %v2557 = vadd.f32 %v2421, %v2556
      %v2558 = vpop.f32.mrb[0].mxu0
      %2559 = vmatprep.mubr.bf16.mxu0 0
      %2560 = vmatmul.mubr.bf16.gmra.mrb[0].mxu0 %v2469
      %v2561 = vpop.f32.mrb[0].mxu0
      %v2562 = vadd.f32 %v2421, %v2561
      %v2563 = vpop.f32.mrb[0].mxu0
      %v2564 = vpop.f32.mrb[0].mxu0
      %v2565 = vadd.f32 %v2421, %v2564
      %v2566 = vpop.f32.mrb[0].mxu0
      %2567 = vdwg.mxu0
      %2568 = vxpose.xlu0.b32.start [1/16] %v2506, 128
      %2569 = vxpose.xlu0.b32.cont [2/16] %v2509, 128
      %2570 = vxpose.xlu0.b32.cont [3/16] %v2514, 128
      %2571 = vxpose.xlu0.b32.cont [4/16] %v2517, 128
      %2572 = vxpose.xlu0.b32.cont [5/16] %v2522, 128
      %2573 = vxpose.xlu0.b32.cont [6/16] %v2525, 128
      %2574 = vxpose.xlu0.b32.cont [7/16] %v2530, 128
      %2575 = vxpose.xlu0.b32.cont [8/16] %v2533, 128
      %2576 = vxpose.xlu0.b32.cont [9/16] %v2538, 128
      %2577 = vxpose.xlu0.b32.cont [10/16] %v2541, 128
      %2578 = vxpose.xlu0.b32.cont [11/16] %v2546, 128
      %2579 = vxpose.xlu0.b32.cont [12/16] %v2549, 128
      %2580 = vxpose.xlu0.b32.cont [13/16] %v2554, 128
      %2581 = vxpose.xlu0.b32.cont [14/16] %v2557, 128
      %2582 = vxpose.xlu0.b32.cont [15/16] %v2562, 128
      %2583 = vxpose.xlu0.b32.end [16/16] %v2565, 128
      %v2584 = vpop.trf.xlu0
      %v2585 = vpop.trf.xlu0
      %v2586 = vpop.trf.xlu0
      %v2587 = vpop.trf.xlu0
      %v2588 = vpop.trf.xlu0
      %v2589 = vpop.trf.xlu0
      %v2590 = vpop.trf.xlu0
      %v2591 = vpop.trf.xlu0
      %v2592 = vpop.trf.xlu0
      %v2593 = vpop.trf.xlu0
      %v2594 = vpop.trf.xlu0
      %v2595 = vpop.trf.xlu0
      %v2596 = vpop.trf.xlu0
      %v2597 = vpop.trf.xlu0
      %v2598 = vpop.trf.xlu0
      %v2599 = vpop.trf.xlu0
      %2600 = vst [vmem:[%s728] sm:$0xf] %v2584
      %2617 = vrot.lane.b32.xlu0 %v2506, 126
      %v2618 = vpop.permute.xlu0 %2617
      %2619 = vrot.lane.b32.xlu0 %v2509, 126
      %v2620 = vpop.permute.xlu0 %2619
      %2621 = vrot.lane.b32.xlu0 %v2514, 126
      %v2622 = vpop.permute.xlu0 %2621
      %2623 = vrot.lane.b32.xlu0 %v2517, 126
      %v2624 = vpop.permute.xlu0 %2623
      %2625 = vrot.lane.b32.xlu0 %v2522, 126
      %v2626 = vpop.permute.xlu0 %2625
      %2627 = vrot.lane.b32.xlu0 %v2525, 126
      %v2628 = vpop.permute.xlu0 %2627
      %2629 = vrot.lane.b32.xlu0 %v2530, 126
      %v2630 = vpop.permute.xlu0 %2629
      %2631 = vrot.lane.b32.xlu0 %v2533, 126
      %v2632 = vpop.permute.xlu0 %2631
      %2633 = vrot.lane.b32.xlu0 %v2538, 126
      %v2634 = vpop.permute.xlu0 %2633
      %2635 = vrot.lane.b32.xlu0 %v2541, 126
      %v2636 = vpop.permute.xlu0 %2635
      %2637 = vrot.lane.b32.xlu0 %v2546, 126
      %v2638 = vpop.permute.xlu0 %2637
      %2639 = vrot.lane.b32.xlu0 %v2549, 126
      %v2640 = vpop.permute.xlu0 %2639
      %2641 = vrot.lane.b32.xlu0 %v2554, 126
      %v2642 = vpop.permute.xlu0 %2641
      %2643 = vrot.lane.b32.xlu0 %v2557, 126
      %v2644 = vpop.permute.xlu0 %2643
      %2645 = vrot.lane.b32.xlu0 %v2562, 126
      %v2646 = vpop.permute.xlu0 %2645
      %2647 = vrot.lane.b32.xlu0 %v2565, 126
      %v2648 = vpop.permute.xlu0 %2647
      %v2665 = vadd.f32 %v2506, %v2618
      %v2666 = vadd.f32 %v2509, %v2620
      %v2667 = vadd.f32 %v2514, %v2622
      %v2668 = vadd.f32 %v2517, %v2624
      %v2669 = vadd.f32 %v2522, %v2626
      %v2670 = vadd.f32 %v2525, %v2628
      %v2671 = vadd.f32 %v2530, %v2630
      %v2672 = vadd.f32 %v2533, %v2632
      %v2673 = vadd.f32 %v2538, %v2634
      %v2674 = vadd.f32 %v2541, %v2636
      %v2675 = vadd.f32 %v2546, %v2638
      %v2676 = vadd.f32 %v2549, %v2640
      %v2677 = vadd.f32 %v2554, %v2642
      %v2678 = vadd.f32 %v2557, %v2644
      %v2679 = vadd.f32 %v2562, %v2646
      %v2680 = vadd.f32 %v2565, %v2648
      %v2681 = vmul.f32 %v2665, 0.5
      %v2682 = vmul.f32 %v2666, 0.5
      %v2683 = vmul.f32 %v2667, 0.5
      %v2684 = vmul.f32 %v2668, 0.5
      %v2685 = vmul.f32 %v2669, 0.5
      %v2686 = vmul.f32 %v2670, 0.5
      %v2687 = vmul.f32 %v2671, 0.5
      %v2688 = vmul.f32 %v2672, 0.5
      %v2689 = vmul.f32 %v2673, 0.5
      %v2690 = vmul.f32 %v2674, 0.5
      %v2691 = vmul.f32 %v2675, 0.5
      %v2692 = vmul.f32 %v2676, 0.5
      %v2693 = vmul.f32 %v2677, 0.5
      %v2694 = vmul.f32 %v2678, 0.5
      %v2695 = vmul.f32 %v2679, 0.5
      %v2696 = vmul.f32 %v2680, 0.5
      %2713 = vrot.lane.b32.xlu0 %v2681, 1
      %v2714 = vpop.permute.xlu0 %2713
      %2715 = vrot.lane.b32.xlu0 %v2682, 1
      %v2716 = vpop.permute.xlu0 %2715
      %2717 = vrot.lane.b32.xlu0 %v2683, 1
      %v2718 = vpop.permute.xlu0 %2717
      %2719 = vrot.lane.b32.xlu0 %v2684, 1
      %v2720 = vpop.permute.xlu0 %2719
      %2721 = vrot.lane.b32.xlu0 %v2685, 1
      %v2722 = vpop.permute.xlu0 %2721
      %2723 = vrot.lane.b32.xlu0 %v2686, 1
      %v2724 = vpop.permute.xlu0 %2723
      %2725 = vrot.lane.b32.xlu0 %v2687, 1
      %v2726 = vpop.permute.xlu0 %2725
      %2727 = vrot.lane.b32.xlu0 %v2688, 1
      %v2728 = vpop.permute.xlu0 %2727
      %2729 = vrot.lane.b32.xlu0 %v2689, 1
      %v2730 = vpop.permute.xlu0 %2729
      %2731 = vrot.lane.b32.xlu0 %v2690, 1
      %v2732 = vpop.permute.xlu0 %2731
      %2733 = vrot.lane.b32.xlu0 %v2691, 1
      %v2734 = vpop.permute.xlu0 %2733
      %2735 = vrot.lane.b32.xlu0 %v2692, 1
      %v2736 = vpop.permute.xlu0 %2735
      %2737 = vrot.lane.b32.xlu0 %v2693, 1
      %v2738 = vpop.permute.xlu0 %2737
      %2739 = vrot.lane.b32.xlu0 %v2694, 1
      %v2740 = vpop.permute.xlu0 %2739
      %2741 = vrot.lane.b32.xlu0 %v2695, 1
      %v2742 = vpop.permute.xlu0 %2741
      %2743 = vrot.lane.b32.xlu0 %v2696, 1
      %v2744 = vpop.permute.xlu0 %2743
      %vm2761 = vcmp.gt.f32.partialorder %v2681, %v2714
      %vm2762 = vcmp.gt.f32.partialorder %v2682, %v2716
      %vm2763 = vcmp.gt.f32.partialorder %v2683, %v2718
      %vm2764 = vcmp.gt.f32.partialorder %v2684, %v2720
      %vm2765 = vcmp.gt.f32.partialorder %v2685, %v2722
      %vm2766 = vcmp.gt.f32.partialorder %v2686, %v2724
      %vm2767 = vcmp.gt.f32.partialorder %v2687, %v2726
      %vm2768 = vcmp.gt.f32.partialorder %v2688, %v2728
      %vm2769 = vcmp.gt.f32.partialorder %v2689, %v2730
      %vm2770 = vcmp.gt.f32.partialorder %v2690, %v2732
      %vm2771 = vcmp.gt.f32.partialorder %v2691, %v2734
      %vm2772 = vcmp.gt.f32.partialorder %v2692, %v2736
      %vm2773 = vcmp.gt.f32.partialorder %v2693, %v2738
      %vm2774 = vcmp.gt.f32.partialorder %v2694, %v2740
      %vm2775 = vcmp.gt.f32.partialorder %v2695, %v2742
      %vm2776 = vcmp.gt.f32.partialorder %v2696, %v2744
      %v2777 = vsel %vm2761, 1, 0
      %v2778 = vsel %vm2762, 1, 0
      %v2779 = vsel %vm2763, 1, 0
      %v2780 = vsel %vm2764, 1, 0
      %v2781 = vsel %vm2765, 1, 0
      %v2782 = vsel %vm2766, 1, 0
      %v2783 = vsel %vm2767, 1, 0
      %v2784 = vsel %vm2768, 1, 0
      %v2785 = vsel %vm2769, 1, 0
      %v2786 = vsel %vm2770, 1, 0
      %v2787 = vsel %vm2771, 1, 0
      %v2788 = vsel %vm2772, 1, 0
      %v2789 = vsel %vm2773, 1, 0
      %v2790 = vsel %vm2774, 1, 0
      %v2791 = vsel %vm2775, 1, 0
      %v2792 = vsel %vm2776, 1, 0
      %v2793 = vcvt.s32.f32 %v2777
      %v2794 = vcvt.s32.f32 %v2778
      %v2795 = vcvt.s32.f32 %v2779
      %v2796 = vcvt.s32.f32 %v2780
      %v2797 = vcvt.s32.f32 %v2781
      %v2798 = vcvt.s32.f32 %v2782
      %v2799 = vcvt.s32.f32 %v2783
      %v2800 = vcvt.s32.f32 %v2784
      %v2801 = vcvt.s32.f32 %v2785
      %v2802 = vcvt.s32.f32 %v2786
      %v2803 = vcvt.s32.f32 %v2787
      %v2804 = vcvt.s32.f32 %v2788
      %v2805 = vcvt.s32.f32 %v2789
      %v2806 = vcvt.s32.f32 %v2790
      %v2807 = vcvt.s32.f32 %v2791
      %v2808 = vcvt.s32.f32 %v2792
      %vm2809 = vcmask 15368
      %v2810 = vsel %vm2809, %v2793, 0.0
      %v2811 = vsel %vm2809, %v2794, 0.0
      %v2812 = vadd.f32 %v2810, %v2811
      %v2813 = vsel %vm2809, %v2795, 0.0
      %v2814 = vadd.f32 %v2812, %v2813
      %v2815 = vsel %vm2809, %v2796, 0.0
      %v2816 = vadd.f32 %v2814, %v2815
      %v2817 = vsel %vm2809, %v2797, 0.0
      %v2818 = vadd.f32 %v2816, %v2817
      %v2819 = vsel %vm2809, %v2798, 0.0
      %v2820 = vadd.f32 %v2818, %v2819
      %v2821 = vsel %vm2809, %v2799, 0.0
      %v2822 = vadd.f32 %v2820, %v2821
      %v2823 = vsel %vm2809, %v2800, 0.0
      %v2824 = vadd.f32 %v2822, %v2823
      %v2825 = vsel %vm2809, %v2801, 0.0
      %v2826 = vadd.f32 %v2824, %v2825
      %v2827 = vsel %vm2809, %v2802, 0.0
      %v2828 = vadd.f32 %v2826, %v2827
      %v2829 = vsel %vm2809, %v2803, 0.0
      %v2830 = vadd.f32 %v2828, %v2829
      %v2831 = vsel %vm2809, %v2804, 0.0
      %v2832 = vadd.f32 %v2830, %v2831
      %v2833 = vsel %vm2809, %v2805, 0.0
      %v2834 = vadd.f32 %v2832, %v2833
      %v2835 = vsel %vm2809, %v2806, 0.0
      %v2836 = vadd.f32 %v2834, %v2835
      %v2837 = vsel %vm2809, %v2807, 0.0
      %v2838 = vadd.f32 %v2836, %v2837
      %v2839 = vsel %vm2809, %v2808, 0.0
      %v2840 = vadd.f32 %v2838, %v2839
      %v2841 = vrot.slane %v2840, 4
      %v2842 = vadd.f32 %v2840, %v2841
      %v2843 = vrot.slane %v2842, 2
      %v2844 = vadd.f32 %v2842, %v2843
      %v2845 = vrot.slane %v2844, 1
      %v2846 = vadd.f32 %v2844, %v2845
      %v2847 = vmax.f32 %v2846, 1.0
      %2849 = vset.pattern.permute.xlu0 1
      %2850 = vperm.xlu0 %2849, %v2793
      %v2851 = vpop.permute.xlu0 %2850
      %2854 = vset.pattern.permute.xlu0 1
      %2855 = vperm.xlu0 %2854, %v2794
      %v2856 = vpop.permute.xlu0 %2855
      %2859 = vset.pattern.permute.xlu0 1
      %2860 = vperm.xlu0 %2859, %v2795
      %v2861 = vpop.permute.xlu0 %2860
      %2864 = vset.pattern.permute.xlu0 1
      %2865 = vperm.xlu0 %2864, %v2796
      %v2866 = vpop.permute.xlu0 %2865
      %2869 = vset.pattern.permute.xlu0 1
      %2870 = vperm.xlu0 %2869, %v2797
      %v2871 = vpop.permute.xlu0 %2870
      %2874 = vset.pattern.permute.xlu0 1
      %2875 = vperm.xlu0 %2874, %v2798
      %v2876 = vpop.permute.xlu0 %2875
      %2879 = vset.pattern.permute.xlu0 1
      %2880 = vperm.xlu0 %2879, %v2799
      %v2881 = vpop.permute.xlu0 %2880
      %2884 = vset.pattern.permute.xlu0 1
      %2885 = vperm.xlu0 %2884, %v2800
      %v2886 = vpop.permute.xlu0 %2885
      %2889 = vset.pattern.permute.xlu0 1
      %2890 = vperm.xlu0 %2889, %v2801
      %v2891 = vpop.permute.xlu0 %2890
      %2894 = vset.pattern.permute.xlu0 1
      %2895 = vperm.xlu0 %2894, %v2802
      %v2896 = vpop.permute.xlu0 %2895
      %2899 = vset.pattern.permute.xlu0 1
      %2900 = vperm.xlu0 %2899, %v2803
      %v2901 = vpop.permute.xlu0 %2900
      %2904 = vset.pattern.permute.xlu0 1
      %2905 = vperm.xlu0 %2904, %v2804
      %v2906 = vpop.permute.xlu0 %2905
      %2909 = vset.pattern.permute.xlu0 1
      %2910 = vperm.xlu0 %2909, %v2805
      %v2911 = vpop.permute.xlu0 %2910
      %2914 = vset.pattern.permute.xlu0 1
      %2915 = vperm.xlu0 %2914, %v2806
      %v2916 = vpop.permute.xlu0 %2915
      %2919 = vset.pattern.permute.xlu0 1
      %2920 = vperm.xlu0 %2919, %v2807
      %v2921 = vpop.permute.xlu0 %2920
      %2924 = vset.pattern.permute.xlu0 1
      %2925 = vperm.xlu0 %2924, %v2808
      %v2926 = vpop.permute.xlu0 %2925
      %v2928 = vmul.f32 %v733, %v2851
      %v2929 = vmul.f32 %v734, %v2856
      %v2930 = vmul.f32 %v735, %v2861
      %v2931 = vmul.f32 %v736, %v2866
      %v2932 = vmul.f32 %v737, %v2871
      %v2933 = vmul.f32 %v738, %v2876
      %v2934 = vmul.f32 %v739, %v2881
      %v2935 = vmul.f32 %v740, %v2886
      %v2936 = vmul.f32 %v741, %v2891
      %v2937 = vmul.f32 %v742, %v2896
      %v2938 = vmul.f32 %v743, %v2901
      %v2939 = vmul.f32 %v744, %v2906
      %v2940 = vmul.f32 %v745, %v2911
      %v2941 = vmul.f32 %v746, %v2916
      %v2942 = vmul.f32 %v747, %v2921
      %v2943 = vmul.f32 %v748, %v2926
      %v2944 = vsel %vm1718, %v2928, 0.0
      %v2945 = vsel %vm1718, %v2929, 0.0
      %v2946 = vadd.f32 %v2944, %v2945
      %v2947 = vsel %vm1718, %v2930, 0.0
      %v2948 = vadd.f32 %v2946, %v2947
      %v2949 = vsel %vm1718, %v2931, 0.0
      %v2950 = vadd.f32 %v2948, %v2949
      %v2951 = vsel %vm1718, %v2932, 0.0
      %v2952 = vadd.f32 %v2950, %v2951
      %v2953 = vsel %vm1718, %v2933, 0.0
      %v2954 = vadd.f32 %v2952, %v2953
      %v2955 = vsel %vm1718, %v2934, 0.0
      %v2956 = vadd.f32 %v2954, %v2955
      %v2957 = vsel %vm1718, %v2935, 0.0
      %v2958 = vadd.f32 %v2956, %v2957
      %v2959 = vsel %vm1718, %v2936, 0.0
      %v2960 = vadd.f32 %v2958, %v2959
      %v2961 = vsel %vm1718, %v2937, 0.0
      %v2962 = vadd.f32 %v2960, %v2961
      %v2963 = vsel %vm1718, %v2938, 0.0
      %v2964 = vadd.f32 %v2962, %v2963
      %v2965 = vsel %vm1718, %v2939, 0.0
      %v2966 = vadd.f32 %v2964, %v2965
      %v2967 = vsel %vm1718, %v2940, 0.0
      %v2968 = vadd.f32 %v2966, %v2967
      %v2969 = vsel %vm1718, %v2941, 0.0
      %v2970 = vadd.f32 %v2968, %v2969
      %v2971 = vsel %vm1718, %v2942, 0.0
      %v2972 = vadd.f32 %v2970, %v2971
      %v2973 = vsel %vm1718, %v2943, 0.0
      %v2974 = vadd.f32 %v2972, %v2973
      %v2975 = vrot.slane %v2974, 4
      %v2976 = vadd.f32 %v2974, %v2975
      %v2977 = vrot.slane %v2976, 2
      %v2978 = vadd.f32 %v2976, %v2977
      %v2979 = vrot.slane %v2978, 1
      %v2980 = vadd.f32 %v2978, %v2979
      %2982 = vset.pattern.permute.xlu0 1
      %2983 = vperm.xlu0 %2982, %v2847
      %v2984 = vpop.permute.xlu0 %2983
      %v2986 = vrcp.pop %v2984
      %v2987 = vmul.f32 %v2980, %v2986
      %vm2988 = vcmask 16384
      %2989 = vst.msk [vmem:[%s731] sm:$0x1] %vm2988, %v2987
      %p2990 = scmp.lt.s32.totalorder %s35, 1
      %s2991 = scalar_select %p2990, %s35, 1
      %s2992 = smul.addr %s2991, 4
      %s2993 = scalar_lea.vmem %s22, %s2992
      %p2994 = scmp.lt.s32.totalorder %s35, 1
      %s2995 = scalar_select %p2994, %s35, 1
      %s2996 = scalar_lea.vmem %s23, %s2995
      // Predicated region
      $region109: #{frustum_point_dan_full_forward.2} parent=107 // pred_check
        %p2997 = pneg %p525
      $region110: #{frustum_point_dan_full_forward.2} parent=107 // pred_check_branch
        %2999 = sbr.rel (%p2997) target = $region112
      $region111: #{frustum_point_dan_full_forward.2} parent=107 // pred_region
        _
      $region112: #{frustum_point_dan_full_forward.2} parent=107 // pred_fallthru
        _
      // Predicated region
      $region113: #{frustum_point_dan_full_forward.2} parent=107 // pred_check
        %p3000 = pneg %p551
      $region114: #{frustum_point_dan_full_forward.2} parent=107 // pred_check_branch
        %3002 = sbr.rel (%p3000) target = $region116
      $region115: #{frustum_point_dan_full_forward.2} parent=107 // pred_region
        _
      $region116: #{frustum_point_dan_full_forward.2} parent=107 // pred_fallthru
        _
    $region108: #{frustum_point_dan_full_forward.2} parent=5 // pred_fallthru
      _
    %p3003 = scmp.le.s32.totalorder 2, %s30
    // Predicated region
    $region117: #{frustum_point_dan_full_forward.2} parent=5 // pred_check
      %p3004 = pneg %p3003
    $region118: #{frustum_point_dan_full_forward.2} parent=5 // pred_check_branch
      %3006 = sbr.rel (%p3004) target = $region120
    $region119: #{frustum_point_dan_full_forward.2} parent=5 // pred_region
      %s3007 = ssub.s32 %s30, 2
      // Predicated region
      $region121: #{frustum_point_dan_full_forward.2} parent=119 // pred_check
        %p3008 = pneg %p531
      $region122: #{frustum_point_dan_full_forward.2} parent=119 // pred_check_branch
        %3010 = sbr.rel (%p3008) target = $region124
      $region123: #{frustum_point_dan_full_forward.2} parent=119 // pred_region
        %p3011 = scmp.lt.s32.totalorder %s36, 1
        %s3012 = scalar_select %p3011, %s36, 1
        %s3013 = smul.addr %s3012, 4
        %s3014 = scalar_lea.vmem %s22, %s3013
      $region124: #{frustum_point_dan_full_forward.2} parent=119 // pred_fallthru
        _
      // Predicated region
      $region125: #{frustum_point_dan_full_forward.2} parent=119 // pred_check
        %p3015 = pneg %p557
      $region126: #{frustum_point_dan_full_forward.2} parent=119 // pred_check_branch
        %3017 = sbr.rel (%p3015) target = $region128
      $region127: #{frustum_point_dan_full_forward.2} parent=119 // pred_region
        %p3018 = scmp.lt.s32.totalorder %s36, 1
        %s3019 = scalar_select %p3018, %s36, 1
        %s3020 = scalar_lea.vmem %s23, %s3019
      $region128: #{frustum_point_dan_full_forward.2} parent=119 // pred_fallthru
        _
    $region120: #{frustum_point_dan_full_forward.2} parent=5 // pred_fallthru
      _
  $region6: #{frustum_point_dan_full_forward.2} parent=0 // loop_footer
    %s34 = sadd.s32 1, %s30
  $region7: #{frustum_point_dan_full_forward.2} parent=0 // loop_footer_branch
    %29 = sbr.rel target = $region3
  $region8: #{frustum_point_dan_full_forward.2} parent=0 // loop_exit
    _

// kernel: frustum_point_dan_full_forward.3
$region0: #{frustum_point_dan_full_forward.3}
  #allocation0 [shape = 'u32[]', space=smem, size = 0x4, offset = 0x4, fixed_abs, tag = 'smem constant byte address 0x4 - core index']
  #allocation1 [shape = 'u32[144,128]{1,0:T(1,128)}', space=vmem, size = 0x12000, scoped, tag = 'internal scratch']
  %s0 = inlined_call_operand.smem [shape: u32[30], index: -1, kind: input, shape index: {}]
  %s1 = sld [smem:[%s0]]
  %s2 = scalar_lea.smem %s0, 1
  %s3 = sld [smem:[%s2]]
  %s4 = scalar_lea.smem %s0, 2
  %s5 = sld [smem:[%s4]]
  %s6 = scalar_lea.smem %s0, 3
  %s7 = sld [smem:[%s6]]
  %s8 = scalar_lea.smem %s0, 4
  %s9 = sld [smem:[%s8]]
  %s10 = scalar_lea.smem %s0, 5
  %s11 = sld [smem:[%s10]]
  %s12 = scalar_lea.smem %s0, 6
  %s13 = sld [smem:[%s12]]
  %s14 = scalar_lea.smem %s0, 7
  %s15 = sld [smem:[%s14]]
  %s16 = scalar_lea.smem %s0, 8
  %s17 = sld [smem:[%s16]]
  %s18 = scalar_lea.smem %s0, 9
  %s19 = sld [smem:[%s18]]
  %s20 = scalar_lea.smem %s0, 10
  %s21 = sld [smem:[%s20]]
  %s22 = scalar_lea.smem %s0, 11
  %s23 = sld [smem:[%s22]]
  %s24 = scalar_lea.smem %s0, 12
  %s25 = sld [smem:[%s24]]
  %s26 = scalar_lea.smem %s0, 13
  %s27 = sld [smem:[%s26]]
  %s28 = scalar_lea.smem %s0, 14
  %s29 = sld [smem:[%s28]]
  %s30 = scalar_lea.smem %s0, 15
  %s31 = sld [smem:[%s30]]
  %s32 = scalar_lea.smem %s0, 16
  %s33 = sld [smem:[%s32]]
  %s34 = scalar_lea.smem %s0, 17
  %s35 = sld [smem:[%s34]]
  %s36 = scalar_lea.smem %s0, 18
  %s37 = sld [smem:[%s36]]
  %s38 = scalar_lea.smem %s0, 19
  %s39 = sld [smem:[%s38]]
  %s40 = scalar_lea.smem %s0, 20
  %s41 = sld [smem:[%s40]]
  %s42 = scalar_lea.smem %s0, 21
  %s43 = sld [smem:[%s42]]
  %s44 = scalar_lea.smem %s0, 22
  %s45 = sld [smem:[%s44]]
  %s46 = scalar_lea.smem %s0, 23
  %s47 = sld [smem:[%s46]]
  %s48 = scalar_lea.smem %s0, 24
  %s49 = sld [smem:[%s48]]
  %s50 = scalar_lea.smem %s0, 25
  %s51 = sld [smem:[%s50]]
  %s52 = scalar_lea.smem %s0, 26
  %s53 = sld [smem:[%s52]]
  %s54 = scalar_lea.smem %s0, 27
  %s55 = sld [smem:[%s54]]
  %s56 = scalar_lea.smem %s0, 28
  %s57 = sld [smem:[%s56]]
  %s58 = scalar_lea.smem %s0, 29
  %s59 = sld [smem:[%s58]]
  %60 = xla_tuple %s57, %s59
  %s61 = sld [smem:[#allocation0]]
  $region153: #{frustum_point_dan_full_forward.3} parent=0
    _
  %s63 = ssub.s32 1, %s61
  %s64 = scalar_select 0, %s63, %s61
  loop: start=0, step=1, limit=4
  $region2: #{frustum_point_dan_full_forward.3} parent=0 // loop_pre_header
    _
  $region3: #{frustum_point_dan_full_forward.3} parent=0 // loop_header
    %s66 = sphi 0, %s70
    %p67 = scmp.ge.s32.totalorder %s66, 4
    %s76 = sphi 0, %s78
    %s79 = sphi 0, %s76
    %s80 = sphi 0, %s79
    %s96 = sphi 0, %s80
    %s102 = sphi 0, %s104
    %s105 = sphi 0, %s102
    %s106 = sphi 0, %s105
    %s122 = sphi 0, %s106
    %s126 = sphi 0, %s126
    %s128 = sphi 0, %s126
    %s129 = sphi 0, %s128
    %s143 = sphi 0, %s129
    %s147 = sphi 0, %s147
    %s149 = sphi 0, %s147
    %s150 = sphi 0, %s149
    %s164 = sphi 0, %s150
    %s168 = sphi 0, %s168
    %s170 = sphi 0, %s168
    %s171 = sphi 0, %s170
    %s185 = sphi 0, %s171
    %s189 = sphi 0, %s189
    %s191 = sphi 0, %s189
    %s192 = sphi 0, %s191
    %s206 = sphi 0, %s192
    %s210 = sphi 0, %s210
    %s212 = sphi 0, %s210
    %s213 = sphi 0, %s212
    %s227 = sphi 0, %s213
    %s231 = sphi 0, %s231
    %s233 = sphi 0, %s231
    %s234 = sphi 0, %s233
    %s248 = sphi 0, %s234
    %s252 = sphi 0, %s252
    %s254 = sphi 0, %s252
    %s255 = sphi 0, %s254
    %s269 = sphi 0, %s255
    %s273 = sphi 0, %s273
    %s275 = sphi 0, %s273
    %s276 = sphi 0, %s275
    %s290 = sphi 0, %s276
    %s294 = sphi 0, %s294
    %s296 = sphi 0, %s294
    %s297 = sphi 0, %s296
    %s311 = sphi 0, %s297
    %s315 = sphi 0, %s315
    %s317 = sphi 0, %s315
    %s318 = sphi 0, %s317
    %s332 = sphi 0, %s318
    %s336 = sphi 0, %s336
    %s338 = sphi 0, %s336
    %s339 = sphi 0, %s338
    %s353 = sphi 0, %s339
    %s357 = sphi 0, %s357
    %s359 = sphi 0, %s357
    %s360 = sphi 0, %s359
    %s374 = sphi 0, %s360
    %s378 = sphi 0, %s378
    %s380 = sphi 0, %s378
    %s381 = sphi 0, %s380
    %s395 = sphi 0, %s381
    %s399 = sphi 0, %s399
    %s401 = sphi 0, %s399
    %s402 = sphi 0, %s401
    %s416 = sphi 0, %s402
    %s420 = sphi 0, %s420
    %s422 = sphi 0, %s420
    %s423 = sphi 0, %s422
    %s437 = sphi 0, %s423
    %s441 = sphi 0, %s441
    %s443 = sphi 0, %s441
    %s444 = sphi 0, %s443
    %s458 = sphi 0, %s444
    %s462 = sphi 0, %s462
    %s464 = sphi 0, %s462
    %s465 = sphi 0, %s464
    %s479 = sphi 0, %s465
    %s483 = sphi 0, %s483
    %s485 = sphi 0, %s483
    %s486 = sphi 0, %s485
    %s500 = sphi 0, %s486
    %s504 = sphi 0, %s504
    %s506 = sphi 0, %s504
    %s507 = sphi 0, %s506
    %s521 = sphi 0, %s507
    %s525 = sphi 0, %s525
    %s527 = sphi 0, %s525
    %s528 = sphi 0, %s527
    %s542 = sphi 0, %s528
    %s546 = sphi 0, %s546
    %s548 = sphi 0, %s546
    %s549 = sphi 0, %s548
    %s563 = sphi 0, %s549
    %s567 = sphi 0, %s567
    %s569 = sphi 0, %s567
    %s570 = sphi 0, %s569
    %s584 = sphi 0, %s570
    %s588 = sphi 0, %s588
    %s590 = sphi 0, %s588
    %s591 = sphi 0, %s590
    %s605 = sphi 0, %s591
    %s609 = sphi 0, %s609
    %s611 = sphi 0, %s609
    %s612 = sphi 0, %s611
    %s626 = sphi 0, %s612
    %s630 = sphi 0, %s630
    %s632 = sphi 0, %s630
    %s633 = sphi 0, %s632
    %s647 = sphi 0, %s633
    %s651 = sphi 0, %s651
    %s653 = sphi 0, %s651
    %s654 = sphi 0, %s653
    %s668 = sphi 0, %s654
    %s674 = sphi 0, %s676
    %s677 = sphi 0, %s674
    %s678 = sphi 0, %s677
    %s694 = sphi 0, %s678
    %s700 = sphi 0, %s702
    %s703 = sphi 0, %s700
    %s704 = sphi 0, %s703
    %s720 = sphi 0, %s704
  $region4: #{frustum_point_dan_full_forward.3} parent=0 // loop_header_branch
    %69 = sbr.rel (%p67) target = $region8
  $region5: #{frustum_point_dan_full_forward.3} parent=0 // loop_body
    %s71 = ssub.s32 %s66, 1
    %s72 = ssub.s32 %s66, 2
    %s73 = sadd.s32 %s66, 1
    %s74 = ssub.s32 %s66, %s73
    %p75 = scmp.eq.s32.totalorder %s74, 0
    %s77 = sadd.s32 %s76, 1
    %s78 = scalar_select %p75, %s76, %s77
    %p81 = pneg %p75
    %p82 = scmp.eq.s32.totalorder %s66, 1
    %p83 = por %p81, %p82
    %p84 = scmp.ne.s32.totalorder %s76, %s79
    %p85 = scmp.eq.s32.totalorder %s66, 0
    %p86 = por %p84, %p85
    %p87 = scmp.ne.s32.totalorder %s76, %s79
    %p88 = scmp.eq.s32.totalorder %s71, 1
    %p89 = por %p87, %p88
    %p90 = scmp.ne.s32.totalorder %s79, %s80
    %p91 = scmp.eq.s32.totalorder %s71, 0
    %p92 = por %p90, %p91
    %p93 = scmp.ne.s32.totalorder %s79, %s80
    %p94 = scmp.eq.s32.totalorder %s72, 1
    %p95 = por %p93, %p94
    %p97 = scmp.ne.s32.totalorder %s80, %s96
    %p98 = scmp.eq.s32.totalorder %s72, 0
    %p99 = por %p97, %p98
    %s100 = ssub.s32 %s66, %s73
    %p101 = scmp.eq.s32.totalorder %s100, 0
    %s103 = sadd.s32 %s102, 1
    %s104 = scalar_select %p101, %s102, %s103
    %p107 = pneg %p101
    %p108 = scmp.eq.s32.totalorder %s66, 1
    %p109 = por %p107, %p108
    %p110 = scmp.ne.s32.totalorder %s102, %s105
    %p111 = scmp.eq.s32.totalorder %s66, 0
    %p112 = por %p110, %p111
    %p113 = scmp.ne.s32.totalorder %s102, %s105
    %p114 = scmp.eq.s32.totalorder %s71, 1
    %p115 = por %p113, %p114
    %p116 = scmp.ne.s32.totalorder %s105, %s106
    %p117 = scmp.eq.s32.totalorder %s71, 0
    %p118 = por %p116, %p117
    %p119 = scmp.ne.s32.totalorder %s105, %s106
    %p120 = scmp.eq.s32.totalorder %s72, 1
    %p121 = por %p119, %p120
    %p123 = scmp.ne.s32.totalorder %s106, %s122
    %p124 = scmp.eq.s32.totalorder %s72, 0
    %p125 = por %p123, %p124
    %s127 = sadd.s32 %s126, 1
    %p130 = scmp.eq.s32.totalorder %s66, 1
    %p131 = scmp.ne.s32.totalorder %s126, %s128
    %p132 = scmp.eq.s32.totalorder %s66, 0
    %p133 = por %p131, %p132
    %p134 = scmp.ne.s32.totalorder %s126, %s128
    %p135 = scmp.eq.s32.totalorder %s71, 1
    %p136 = por %p134, %p135
    %p137 = scmp.ne.s32.totalorder %s128, %s129
    %p138 = scmp.eq.s32.totalorder %s71, 0
    %p139 = por %p137, %p138
    %p140 = scmp.ne.s32.totalorder %s128, %s129
    %p141 = scmp.eq.s32.totalorder %s72, 1
    %p142 = por %p140, %p141
    %p144 = scmp.ne.s32.totalorder %s129, %s143
    %p145 = scmp.eq.s32.totalorder %s72, 0
    %p146 = por %p144, %p145
    %s148 = sadd.s32 %s147, 1
    %p151 = scmp.eq.s32.totalorder %s66, 1
    %p152 = scmp.ne.s32.totalorder %s147, %s149
    %p153 = scmp.eq.s32.totalorder %s66, 0
    %p154 = por %p152, %p153
    %p155 = scmp.ne.s32.totalorder %s147, %s149
    %p156 = scmp.eq.s32.totalorder %s71, 1
    %p157 = por %p155, %p156
    %p158 = scmp.ne.s32.totalorder %s149, %s150
    %p159 = scmp.eq.s32.totalorder %s71, 0
    %p160 = por %p158, %p159
    %p161 = scmp.ne.s32.totalorder %s149, %s150
    %p162 = scmp.eq.s32.totalorder %s72, 1
    %p163 = por %p161, %p162
    %p165 = scmp.ne.s32.totalorder %s150, %s164
    %p166 = scmp.eq.s32.totalorder %s72, 0
    %p167 = por %p165, %p166
    %s169 = sadd.s32 %s168, 1
    %p172 = scmp.eq.s32.totalorder %s66, 1
    %p173 = scmp.ne.s32.totalorder %s168, %s170
    %p174 = scmp.eq.s32.totalorder %s66, 0
    %p175 = por %p173, %p174
    %p176 = scmp.ne.s32.totalorder %s168, %s170
    %p177 = scmp.eq.s32.totalorder %s71, 1
    %p178 = por %p176, %p177
    %p179 = scmp.ne.s32.totalorder %s170, %s171
    %p180 = scmp.eq.s32.totalorder %s71, 0
    %p181 = por %p179, %p180
    %p182 = scmp.ne.s32.totalorder %s170, %s171
    %p183 = scmp.eq.s32.totalorder %s72, 1
    %p184 = por %p182, %p183
    %p186 = scmp.ne.s32.totalorder %s171, %s185
    %p187 = scmp.eq.s32.totalorder %s72, 0
    %p188 = por %p186, %p187
    %s190 = sadd.s32 %s189, 1
    %p193 = scmp.eq.s32.totalorder %s66, 1
    %p194 = scmp.ne.s32.totalorder %s189, %s191
    %p195 = scmp.eq.s32.totalorder %s66, 0
    %p196 = por %p194, %p195
    %p197 = scmp.ne.s32.totalorder %s189, %s191
    %p198 = scmp.eq.s32.totalorder %s71, 1
    %p199 = por %p197, %p198
    %p200 = scmp.ne.s32.totalorder %s191, %s192
    %p201 = scmp.eq.s32.totalorder %s71, 0
    %p202 = por %p200, %p201
    %p203 = scmp.ne.s32.totalorder %s191, %s192
    %p204 = scmp.eq.s32.totalorder %s72, 1
    %p205 = por %p203, %p204
    %p207 = scmp.ne.s32.totalorder %s192, %s206
    %p208 = scmp.eq.s32.totalorder %s72, 0
    %p209 = por %p207, %p208
    %s211 = sadd.s32 %s210, 1
    %p214 = scmp.eq.s32.totalorder %s66, 1
    %p215 = scmp.ne.s32.totalorder %s210, %s212
    %p216 = scmp.eq.s32.totalorder %s66, 0
    %p217 = por %p215, %p216
    %p218 = scmp.ne.s32.totalorder %s210, %s212
    %p219 = scmp.eq.s32.totalorder %s71, 1
    %p220 = por %p218, %p219
    %p221 = scmp.ne.s32.totalorder %s212, %s213
    %p222 = scmp.eq.s32.totalorder %s71, 0
    %p223 = por %p221, %p222
    %p224 = scmp.ne.s32.totalorder %s212, %s213
    %p225 = scmp.eq.s32.totalorder %s72, 1
    %p226 = por %p224, %p225
    %p228 = scmp.ne.s32.totalorder %s213, %s227
    %p229 = scmp.eq.s32.totalorder %s72, 0
    %p230 = por %p228, %p229
    %s232 = sadd.s32 %s231, 1
    %p235 = scmp.eq.s32.totalorder %s66, 1
    %p236 = scmp.ne.s32.totalorder %s231, %s233
    %p237 = scmp.eq.s32.totalorder %s66, 0
    %p238 = por %p236, %p237
    %p239 = scmp.ne.s32.totalorder %s231, %s233
    %p240 = scmp.eq.s32.totalorder %s71, 1
    %p241 = por %p239, %p240
    %p242 = scmp.ne.s32.totalorder %s233, %s234
    %p243 = scmp.eq.s32.totalorder %s71, 0
    %p244 = por %p242, %p243
    %p245 = scmp.ne.s32.totalorder %s233, %s234
    %p246 = scmp.eq.s32.totalorder %s72, 1
    %p247 = por %p245, %p246
    %p249 = scmp.ne.s32.totalorder %s234, %s248
    %p250 = scmp.eq.s32.totalorder %s72, 0
    %p251 = por %p249, %p250
    %s253 = sadd.s32 %s252, 1
    %p256 = scmp.eq.s32.totalorder %s66, 1
    %p257 = scmp.ne.s32.totalorder %s252, %s254
    %p258 = scmp.eq.s32.totalorder %s66, 0
    %p259 = por %p257, %p258
    %p260 = scmp.ne.s32.totalorder %s252, %s254
    %p261 = scmp.eq.s32.totalorder %s71, 1
    %p262 = por %p260, %p261
    %p263 = scmp.ne.s32.totalorder %s254, %s255
    %p264 = scmp.eq.s32.totalorder %s71, 0
    %p265 = por %p263, %p264
    %p266 = scmp.ne.s32.totalorder %s254, %s255
    %p267 = scmp.eq.s32.totalorder %s72, 1
    %p268 = por %p266, %p267
    %p270 = scmp.ne.s32.totalorder %s255, %s269
    %p271 = scmp.eq.s32.totalorder %s72, 0
    %p272 = por %p270, %p271
    %s274 = sadd.s32 %s273, 1
    %p277 = scmp.eq.s32.totalorder %s66, 1
    %p278 = scmp.ne.s32.totalorder %s273, %s275
    %p279 = scmp.eq.s32.totalorder %s66, 0
    %p280 = por %p278, %p279
    %p281 = scmp.ne.s32.totalorder %s273, %s275
    %p282 = scmp.eq.s32.totalorder %s71, 1
    %p283 = por %p281, %p282
    %p284 = scmp.ne.s32.totalorder %s275, %s276
    %p285 = scmp.eq.s32.totalorder %s71, 0
    %p286 = por %p284, %p285
    %p287 = scmp.ne.s32.totalorder %s275, %s276
    %p288 = scmp.eq.s32.totalorder %s72, 1
    %p289 = por %p287, %p288
    %p291 = scmp.ne.s32.totalorder %s276, %s290
    %p292 = scmp.eq.s32.totalorder %s72, 0
    %p293 = por %p291, %p292
    %s295 = sadd.s32 %s294, 1
    %p298 = scmp.eq.s32.totalorder %s66, 1
    %p299 = scmp.ne.s32.totalorder %s294, %s296
    %p300 = scmp.eq.s32.totalorder %s66, 0
    %p301 = por %p299, %p300
    %p302 = scmp.ne.s32.totalorder %s294, %s296
    %p303 = scmp.eq.s32.totalorder %s71, 1
    %p304 = por %p302, %p303
    %p305 = scmp.ne.s32.totalorder %s296, %s297
    %p306 = scmp.eq.s32.totalorder %s71, 0
    %p307 = por %p305, %p306
    %p308 = scmp.ne.s32.totalorder %s296, %s297
    %p309 = scmp.eq.s32.totalorder %s72, 1
    %p310 = por %p308, %p309
    %p312 = scmp.ne.s32.totalorder %s297, %s311
    %p313 = scmp.eq.s32.totalorder %s72, 0
    %p314 = por %p312, %p313
    %s316 = sadd.s32 %s315, 1
    %p319 = scmp.eq.s32.totalorder %s66, 1
    %p320 = scmp.ne.s32.totalorder %s315, %s317
    %p321 = scmp.eq.s32.totalorder %s66, 0
    %p322 = por %p320, %p321
    %p323 = scmp.ne.s32.totalorder %s315, %s317
    %p324 = scmp.eq.s32.totalorder %s71, 1
    %p325 = por %p323, %p324
    %p326 = scmp.ne.s32.totalorder %s317, %s318
    %p327 = scmp.eq.s32.totalorder %s71, 0
    %p328 = por %p326, %p327
    %p329 = scmp.ne.s32.totalorder %s317, %s318
    %p330 = scmp.eq.s32.totalorder %s72, 1
    %p331 = por %p329, %p330
    %p333 = scmp.ne.s32.totalorder %s318, %s332
    %p334 = scmp.eq.s32.totalorder %s72, 0
    %p335 = por %p333, %p334
    %s337 = sadd.s32 %s336, 1
    %p340 = scmp.eq.s32.totalorder %s66, 1
    %p341 = scmp.ne.s32.totalorder %s336, %s338
    %p342 = scmp.eq.s32.totalorder %s66, 0
    %p343 = por %p341, %p342
    %p344 = scmp.ne.s32.totalorder %s336, %s338
    %p345 = scmp.eq.s32.totalorder %s71, 1
    %p346 = por %p344, %p345
    %p347 = scmp.ne.s32.totalorder %s338, %s339
    %p348 = scmp.eq.s32.totalorder %s71, 0
    %p349 = por %p347, %p348
    %p350 = scmp.ne.s32.totalorder %s338, %s339
    %p351 = scmp.eq.s32.totalorder %s72, 1
    %p352 = por %p350, %p351
    %p354 = scmp.ne.s32.totalorder %s339, %s353
    %p355 = scmp.eq.s32.totalorder %s72, 0
    %p356 = por %p354, %p355
    %s358 = sadd.s32 %s357, 1
    %p361 = scmp.eq.s32.totalorder %s66, 1
    %p362 = scmp.ne.s32.totalorder %s357, %s359
    %p363 = scmp.eq.s32.totalorder %s66, 0
    %p364 = por %p362, %p363
    %p365 = scmp.ne.s32.totalorder %s357, %s359
    %p366 = scmp.eq.s32.totalorder %s71, 1
    %p367 = por %p365, %p366
    %p368 = scmp.ne.s32.totalorder %s359, %s360
    %p369 = scmp.eq.s32.totalorder %s71, 0
    %p370 = por %p368, %p369
    %p371 = scmp.ne.s32.totalorder %s359, %s360
    %p372 = scmp.eq.s32.totalorder %s72, 1
    %p373 = por %p371, %p372
    %p375 = scmp.ne.s32.totalorder %s360, %s374
    %p376 = scmp.eq.s32.totalorder %s72, 0
    %p377 = por %p375, %p376
    %s379 = sadd.s32 %s378, 1
    %p382 = scmp.eq.s32.totalorder %s66, 1
    %p383 = scmp.ne.s32.totalorder %s378, %s380
    %p384 = scmp.eq.s32.totalorder %s66, 0
    %p385 = por %p383, %p384
    %p386 = scmp.ne.s32.totalorder %s378, %s380
    %p387 = scmp.eq.s32.totalorder %s71, 1
    %p388 = por %p386, %p387
    %p389 = scmp.ne.s32.totalorder %s380, %s381
    %p390 = scmp.eq.s32.totalorder %s71, 0
    %p391 = por %p389, %p390
    %p392 = scmp.ne.s32.totalorder %s380, %s381
    %p393 = scmp.eq.s32.totalorder %s72, 1
    %p394 = por %p392, %p393
    %p396 = scmp.ne.s32.totalorder %s381, %s395
    %p397 = scmp.eq.s32.totalorder %s72, 0
    %p398 = por %p396, %p397
    %s400 = sadd.s32 %s399, 1
    %p403 = scmp.eq.s32.totalorder %s66, 1
    %p404 = scmp.ne.s32.totalorder %s399, %s401
    %p405 = scmp.eq.s32.totalorder %s66, 0
    %p406 = por %p404, %p405
    %p407 = scmp.ne.s32.totalorder %s399, %s401
    %p408 = scmp.eq.s32.totalorder %s71, 1
    %p409 = por %p407, %p408
    %p410 = scmp.ne.s32.totalorder %s401, %s402
    %p411 = scmp.eq.s32.totalorder %s71, 0
    %p412 = por %p410, %p411
    %p413 = scmp.ne.s32.totalorder %s401, %s402
    %p414 = scmp.eq.s32.totalorder %s72, 1
    %p415 = por %p413, %p414
    %p417 = scmp.ne.s32.totalorder %s402, %s416
    %p418 = scmp.eq.s32.totalorder %s72, 0
    %p419 = por %p417, %p418
    %s421 = sadd.s32 %s420, 1
    %p424 = scmp.eq.s32.totalorder %s66, 1
    %p425 = scmp.ne.s32.totalorder %s420, %s422
    %p426 = scmp.eq.s32.totalorder %s66, 0
    %p427 = por %p425, %p426
    %p428 = scmp.ne.s32.totalorder %s420, %s422
    %p429 = scmp.eq.s32.totalorder %s71, 1
    %p430 = por %p428, %p429
    %p431 = scmp.ne.s32.totalorder %s422, %s423
    %p432 = scmp.eq.s32.totalorder %s71, 0
    %p433 = por %p431, %p432
    %p434 = scmp.ne.s32.totalorder %s422, %s423
    %p435 = scmp.eq.s32.totalorder %s72, 1
    %p436 = por %p434, %p435
    %p438 = scmp.ne.s32.totalorder %s423, %s437
    %p439 = scmp.eq.s32.totalorder %s72, 0
    %p440 = por %p438, %p439
    %s442 = sadd.s32 %s441, 1
    %p445 = scmp.eq.s32.totalorder %s66, 1
    %p446 = scmp.ne.s32.totalorder %s441, %s443
    %p447 = scmp.eq.s32.totalorder %s66, 0
    %p448 = por %p446, %p447
    %p449 = scmp.ne.s32.totalorder %s441, %s443
    %p450 = scmp.eq.s32.totalorder %s71, 1
    %p451 = por %p449, %p450
    %p452 = scmp.ne.s32.totalorder %s443, %s444
    %p453 = scmp.eq.s32.totalorder %s71, 0
    %p454 = por %p452, %p453
    %p455 = scmp.ne.s32.totalorder %s443, %s444
    %p456 = scmp.eq.s32.totalorder %s72, 1
    %p457 = por %p455, %p456
    %p459 = scmp.ne.s32.totalorder %s444, %s458
    %p460 = scmp.eq.s32.totalorder %s72, 0
    %p461 = por %p459, %p460
    %s463 = sadd.s32 %s462, 1
    %p466 = scmp.eq.s32.totalorder %s66, 1
    %p467 = scmp.ne.s32.totalorder %s462, %s464
    %p468 = scmp.eq.s32.totalorder %s66, 0
    %p469 = por %p467, %p468
    %p470 = scmp.ne.s32.totalorder %s462, %s464
    %p471 = scmp.eq.s32.totalorder %s71, 1
    %p472 = por %p470, %p471
    %p473 = scmp.ne.s32.totalorder %s464, %s465
    %p474 = scmp.eq.s32.totalorder %s71, 0
    %p475 = por %p473, %p474
    %p476 = scmp.ne.s32.totalorder %s464, %s465
    %p477 = scmp.eq.s32.totalorder %s72, 1
    %p478 = por %p476, %p477
    %p480 = scmp.ne.s32.totalorder %s465, %s479
    %p481 = scmp.eq.s32.totalorder %s72, 0
    %p482 = por %p480, %p481
    %s484 = sadd.s32 %s483, 1
    %p487 = scmp.eq.s32.totalorder %s66, 1
    %p488 = scmp.ne.s32.totalorder %s483, %s485
    %p489 = scmp.eq.s32.totalorder %s66, 0
    %p490 = por %p488, %p489
    %p491 = scmp.ne.s32.totalorder %s483, %s485
    %p492 = scmp.eq.s32.totalorder %s71, 1
    %p493 = por %p491, %p492
    %p494 = scmp.ne.s32.totalorder %s485, %s486
    %p495 = scmp.eq.s32.totalorder %s71, 0
    %p496 = por %p494, %p495
    %p497 = scmp.ne.s32.totalorder %s485, %s486
    %p498 = scmp.eq.s32.totalorder %s72, 1
    %p499 = por %p497, %p498
    %p501 = scmp.ne.s32.totalorder %s486, %s500
    %p502 = scmp.eq.s32.totalorder %s72, 0
    %p503 = por %p501, %p502
    %s505 = sadd.s32 %s504, 1
    %p508 = scmp.eq.s32.totalorder %s66, 1
    %p509 = scmp.ne.s32.totalorder %s504, %s506
    %p510 = scmp.eq.s32.totalorder %s66, 0
    %p511 = por %p509, %p510
    %p512 = scmp.ne.s32.totalorder %s504, %s506
    %p513 = scmp.eq.s32.totalorder %s71, 1
    %p514 = por %p512, %p513
    %p515 = scmp.ne.s32.totalorder %s506, %s507
    %p516 = scmp.eq.s32.totalorder %s71, 0
    %p517 = por %p515, %p516
    %p518 = scmp.ne.s32.totalorder %s506, %s507
    %p519 = scmp.eq.s32.totalorder %s72, 1
    %p520 = por %p518, %p519
    %p522 = scmp.ne.s32.totalorder %s507, %s521
    %p523 = scmp.eq.s32.totalorder %s72, 0
    %p524 = por %p522, %p523
    %s526 = sadd.s32 %s525, 1
    %p529 = scmp.eq.s32.totalorder %s66, 1
    %p530 = scmp.ne.s32.totalorder %s525, %s527
    %p531 = scmp.eq.s32.totalorder %s66, 0
    %p532 = por %p530, %p531
    %p533 = scmp.ne.s32.totalorder %s525, %s527
    %p534 = scmp.eq.s32.totalorder %s71, 1
    %p535 = por %p533, %p534
    %p536 = scmp.ne.s32.totalorder %s527, %s528
    %p537 = scmp.eq.s32.totalorder %s71, 0
    %p538 = por %p536, %p537
    %p539 = scmp.ne.s32.totalorder %s527, %s528
    %p540 = scmp.eq.s32.totalorder %s72, 1
    %p541 = por %p539, %p540
    %p543 = scmp.ne.s32.totalorder %s528, %s542
    %p544 = scmp.eq.s32.totalorder %s72, 0
    %p545 = por %p543, %p544
    %s547 = sadd.s32 %s546, 1
    %p550 = scmp.eq.s32.totalorder %s66, 1
    %p551 = scmp.ne.s32.totalorder %s546, %s548
    %p552 = scmp.eq.s32.totalorder %s66, 0
    %p553 = por %p551, %p552
    %p554 = scmp.ne.s32.totalorder %s546, %s548
    %p555 = scmp.eq.s32.totalorder %s71, 1
    %p556 = por %p554, %p555
    %p557 = scmp.ne.s32.totalorder %s548, %s549
    %p558 = scmp.eq.s32.totalorder %s71, 0
    %p559 = por %p557, %p558
    %p560 = scmp.ne.s32.totalorder %s548, %s549
    %p561 = scmp.eq.s32.totalorder %s72, 1
    %p562 = por %p560, %p561
    %p564 = scmp.ne.s32.totalorder %s549, %s563
    %p565 = scmp.eq.s32.totalorder %s72, 0
    %p566 = por %p564, %p565
    %s568 = sadd.s32 %s567, 1
    %p571 = scmp.eq.s32.totalorder %s66, 1
    %p572 = scmp.ne.s32.totalorder %s567, %s569
    %p573 = scmp.eq.s32.totalorder %s66, 0
    %p574 = por %p572, %p573
    %p575 = scmp.ne.s32.totalorder %s567, %s569
    %p576 = scmp.eq.s32.totalorder %s71, 1
    %p577 = por %p575, %p576
    %p578 = scmp.ne.s32.totalorder %s569, %s570
    %p579 = scmp.eq.s32.totalorder %s71, 0
    %p580 = por %p578, %p579
    %p581 = scmp.ne.s32.totalorder %s569, %s570
    %p582 = scmp.eq.s32.totalorder %s72, 1
    %p583 = por %p581, %p582
    %p585 = scmp.ne.s32.totalorder %s570, %s584
    %p586 = scmp.eq.s32.totalorder %s72, 0
    %p587 = por %p585, %p586
    %s589 = sadd.s32 %s588, 1
    %p592 = scmp.eq.s32.totalorder %s66, 1
    %p593 = scmp.ne.s32.totalorder %s588, %s590
    %p594 = scmp.eq.s32.totalorder %s66, 0
    %p595 = por %p593, %p594
    %p596 = scmp.ne.s32.totalorder %s588, %s590
    %p597 = scmp.eq.s32.totalorder %s71, 1
    %p598 = por %p596, %p597
    %p599 = scmp.ne.s32.totalorder %s590, %s591
    %p600 = scmp.eq.s32.totalorder %s71, 0
    %p601 = por %p599, %p600
    %p602 = scmp.ne.s32.totalorder %s590, %s591
    %p603 = scmp.eq.s32.totalorder %s72, 1
    %p604 = por %p602, %p603
    %p606 = scmp.ne.s32.totalorder %s591, %s605
    %p607 = scmp.eq.s32.totalorder %s72, 0
    %p608 = por %p606, %p607
    %s610 = sadd.s32 %s609, 1
    %p613 = scmp.eq.s32.totalorder %s66, 1
    %p614 = scmp.ne.s32.totalorder %s609, %s611
    %p615 = scmp.eq.s32.totalorder %s66, 0
    %p616 = por %p614, %p615
    %p617 = scmp.ne.s32.totalorder %s609, %s611
    %p618 = scmp.eq.s32.totalorder %s71, 1
    %p619 = por %p617, %p618
    %p620 = scmp.ne.s32.totalorder %s611, %s612
    %p621 = scmp.eq.s32.totalorder %s71, 0
    %p622 = por %p620, %p621
    %p623 = scmp.ne.s32.totalorder %s611, %s612
    %p624 = scmp.eq.s32.totalorder %s72, 1
    %p625 = por %p623, %p624
    %p627 = scmp.ne.s32.totalorder %s612, %s626
    %p628 = scmp.eq.s32.totalorder %s72, 0
    %p629 = por %p627, %p628
    %s631 = sadd.s32 %s630, 1
    %p634 = scmp.eq.s32.totalorder %s66, 1
    %p635 = scmp.ne.s32.totalorder %s630, %s632
    %p636 = scmp.eq.s32.totalorder %s66, 0
    %p637 = por %p635, %p636
    %p638 = scmp.ne.s32.totalorder %s630, %s632
    %p639 = scmp.eq.s32.totalorder %s71, 1
    %p640 = por %p638, %p639
    %p641 = scmp.ne.s32.totalorder %s632, %s633
    %p642 = scmp.eq.s32.totalorder %s71, 0
    %p643 = por %p641, %p642
    %p644 = scmp.ne.s32.totalorder %s632, %s633
    %p645 = scmp.eq.s32.totalorder %s72, 1
    %p646 = por %p644, %p645
    %p648 = scmp.ne.s32.totalorder %s633, %s647
    %p649 = scmp.eq.s32.totalorder %s72, 0
    %p650 = por %p648, %p649
    %s652 = sadd.s32 %s651, 1
    %p655 = scmp.eq.s32.totalorder %s66, 1
    %p656 = scmp.ne.s32.totalorder %s651, %s653
    %p657 = scmp.eq.s32.totalorder %s66, 0
    %p658 = por %p656, %p657
    %p659 = scmp.ne.s32.totalorder %s651, %s653
    %p660 = scmp.eq.s32.totalorder %s71, 1
    %p661 = por %p659, %p660
    %p662 = scmp.ne.s32.totalorder %s653, %s654
    %p663 = scmp.eq.s32.totalorder %s71, 0
    %p664 = por %p662, %p663
    %p665 = scmp.ne.s32.totalorder %s653, %s654
    %p666 = scmp.eq.s32.totalorder %s72, 1
    %p667 = por %p665, %p666
    %p669 = scmp.ne.s32.totalorder %s654, %s668
    %p670 = scmp.eq.s32.totalorder %s72, 0
    %p671 = por %p669, %p670
    %s672 = ssub.s32 %s66, %s73
    %p673 = scmp.eq.s32.totalorder %s672, 0
    %s675 = sadd.s32 %s674, 1
    %s676 = scalar_select %p673, %s674, %s675
    %p679 = pneg %p673
    %p680 = scmp.eq.s32.totalorder %s66, 1
    %p681 = por %p679, %p680
    %p682 = scmp.ne.s32.totalorder %s674, %s677
    %p683 = scmp.eq.s32.totalorder %s66, 0
    %p684 = por %p682, %p683
    %p685 = scmp.ne.s32.totalorder %s674, %s677
    %p686 = scmp.eq.s32.totalorder %s71, 1
    %p687 = por %p685, %p686
    %p688 = scmp.ne.s32.totalorder %s677, %s678
    %p689 = scmp.eq.s32.totalorder %s71, 0
    %p690 = por %p688, %p689
    %p691 = scmp.ne.s32.totalorder %s677, %s678
    %p692 = scmp.eq.s32.totalorder %s72, 1
    %p693 = por %p691, %p692
    %p695 = scmp.ne.s32.totalorder %s678, %s694
    %p696 = scmp.eq.s32.totalorder %s72, 0
    %p697 = por %p695, %p696
    %s698 = ssub.s32 %s66, %s73
    %p699 = scmp.eq.s32.totalorder %s698, 0
    %s701 = sadd.s32 %s700, 1
    %s702 = scalar_select %p699, %s700, %s701
    %p705 = pneg %p699
    %p706 = scmp.eq.s32.totalorder %s66, 1
    %p707 = por %p705, %p706
    %p708 = scmp.ne.s32.totalorder %s700, %s703
    %p709 = scmp.eq.s32.totalorder %s66, 0
    %p710 = por %p708, %p709
    %p711 = scmp.ne.s32.totalorder %s700, %s703
    %p712 = scmp.eq.s32.totalorder %s71, 1
    %p713 = por %p711, %p712
    %p714 = scmp.ne.s32.totalorder %s703, %s704
    %p715 = scmp.eq.s32.totalorder %s71, 0
    %p716 = por %p714, %p715
    %p717 = scmp.ne.s32.totalorder %s703, %s704
    %p718 = scmp.eq.s32.totalorder %s72, 1
    %p719 = por %p717, %p718
    %p721 = scmp.ne.s32.totalorder %s704, %s720
    %p722 = scmp.eq.s32.totalorder %s72, 0
    %p723 = por %p721, %p722
    %p724 = scmp.le.s32.totalorder 1, %s66
    %p725 = scmp.lt.s32.totalorder %s66, 3
    %p726 = pnand %p724, %p725
    %p727 = pneg %p726
    // Predicated region
    $region9: #{frustum_point_dan_full_forward.3} parent=5 // pred_check
      _
    $region10: #{frustum_point_dan_full_forward.3} parent=5 // pred_check_branch
      %729 = sbr.rel (%p726) target = $region12
    $region11: #{frustum_point_dan_full_forward.3} parent=5 // pred_region
      %s730 = ssub.s32 %s66, 1
      // Predicated region
      $region13: #{frustum_point_dan_full_forward.3} parent=11 // pred_check
        %p731 = pneg %p139
      $region14: #{frustum_point_dan_full_forward.3} parent=11 // pred_check_branch
        %733 = sbr.rel (%p731) target = $region16
      $region15: #{frustum_point_dan_full_forward.3} parent=11 // pred_region
        _
      $region16: #{frustum_point_dan_full_forward.3} parent=11 // pred_fallthru
        _
      // Predicated region
      $region17: #{frustum_point_dan_full_forward.3} parent=11 // pred_check
        %p734 = pneg %p160
      $region18: #{frustum_point_dan_full_forward.3} parent=11 // pred_check_branch
        %736 = sbr.rel (%p734) target = $region20
      $region19: #{frustum_point_dan_full_forward.3} parent=11 // pred_region
        _
      $region20: #{frustum_point_dan_full_forward.3} parent=11 // pred_fallthru
        _
      // Predicated region
      $region21: #{frustum_point_dan_full_forward.3} parent=11 // pred_check
        %p737 = pneg %p181
      $region22: #{frustum_point_dan_full_forward.3} parent=11 // pred_check_branch
        %739 = sbr.rel (%p737) target = $region24
      $region23: #{frustum_point_dan_full_forward.3} parent=11 // pred_region
        _
      $region24: #{frustum_point_dan_full_forward.3} parent=11 // pred_fallthru
        _
      // Predicated region
      $region25: #{frustum_point_dan_full_forward.3} parent=11 // pred_check
        %p740 = pneg %p202
      $region26: #{frustum_point_dan_full_forward.3} parent=11 // pred_check_branch
        %742 = sbr.rel (%p740) target = $region28
      $region27: #{frustum_point_dan_full_forward.3} parent=11 // pred_region
        _
      $region28: #{frustum_point_dan_full_forward.3} parent=11 // pred_fallthru
        _
      // Predicated region
      $region29: #{frustum_point_dan_full_forward.3} parent=11 // pred_check
        %p743 = pneg %p223
      $region30: #{frustum_point_dan_full_forward.3} parent=11 // pred_check_branch
        %745 = sbr.rel (%p743) target = $region32
      $region31: #{frustum_point_dan_full_forward.3} parent=11 // pred_region
        _
      $region32: #{frustum_point_dan_full_forward.3} parent=11 // pred_fallthru
        _
      // Predicated region
      $region33: #{frustum_point_dan_full_forward.3} parent=11 // pred_check
        %p746 = pneg %p244
      $region34: #{frustum_point_dan_full_forward.3} parent=11 // pred_check_branch
        %748 = sbr.rel (%p746) target = $region36
      $region35: #{frustum_point_dan_full_forward.3} parent=11 // pred_region
        _
      $region36: #{frustum_point_dan_full_forward.3} parent=11 // pred_fallthru
        _
      // Predicated region
      $region37: #{frustum_point_dan_full_forward.3} parent=11 // pred_check
        %p749 = pneg %p265
      $region38: #{frustum_point_dan_full_forward.3} parent=11 // pred_check_branch
        %751 = sbr.rel (%p749) target = $region40
      $region39: #{frustum_point_dan_full_forward.3} parent=11 // pred_region
        _
      $region40: #{frustum_point_dan_full_forward.3} parent=11 // pred_fallthru
        _
      // Predicated region
      $region41: #{frustum_point_dan_full_forward.3} parent=11 // pred_check
        %p752 = pneg %p286
      $region42: #{frustum_point_dan_full_forward.3} parent=11 // pred_check_branch
        %754 = sbr.rel (%p752) target = $region44
      $region43: #{frustum_point_dan_full_forward.3} parent=11 // pred_region
        _
      $region44: #{frustum_point_dan_full_forward.3} parent=11 // pred_fallthru
        _
      // Predicated region
      $region45: #{frustum_point_dan_full_forward.3} parent=11 // pred_check
        %p755 = pneg %p307
      $region46: #{frustum_point_dan_full_forward.3} parent=11 // pred_check_branch
        %757 = sbr.rel (%p755) target = $region48
      $region47: #{frustum_point_dan_full_forward.3} parent=11 // pred_region
        _
      $region48: #{frustum_point_dan_full_forward.3} parent=11 // pred_fallthru
        _
      // Predicated region
      $region49: #{frustum_point_dan_full_forward.3} parent=11 // pred_check
        %p758 = pneg %p328
      $region50: #{frustum_point_dan_full_forward.3} parent=11 // pred_check_branch
        %760 = sbr.rel (%p758) target = $region52
      $region51: #{frustum_point_dan_full_forward.3} parent=11 // pred_region
        _
      $region52: #{frustum_point_dan_full_forward.3} parent=11 // pred_fallthru
        _
      // Predicated region
      $region53: #{frustum_point_dan_full_forward.3} parent=11 // pred_check
        %p761 = pneg %p349
      $region54: #{frustum_point_dan_full_forward.3} parent=11 // pred_check_branch
        %763 = sbr.rel (%p761) target = $region56
      $region55: #{frustum_point_dan_full_forward.3} parent=11 // pred_region
        _
      $region56: #{frustum_point_dan_full_forward.3} parent=11 // pred_fallthru
        _
      // Predicated region
      $region57: #{frustum_point_dan_full_forward.3} parent=11 // pred_check
        %p764 = pneg %p370
      $region58: #{frustum_point_dan_full_forward.3} parent=11 // pred_check_branch
        %766 = sbr.rel (%p764) target = $region60
      $region59: #{frustum_point_dan_full_forward.3} parent=11 // pred_region
        _
      $region60: #{frustum_point_dan_full_forward.3} parent=11 // pred_fallthru
        _
      // Predicated region
      $region61: #{frustum_point_dan_full_forward.3} parent=11 // pred_check
        %p767 = pneg %p391
      $region62: #{frustum_point_dan_full_forward.3} parent=11 // pred_check_branch
        %769 = sbr.rel (%p767) target = $region64
      $region63: #{frustum_point_dan_full_forward.3} parent=11 // pred_region
        _
      $region64: #{frustum_point_dan_full_forward.3} parent=11 // pred_fallthru
        _
      // Predicated region
      $region65: #{frustum_point_dan_full_forward.3} parent=11 // pred_check
        %p770 = pneg %p412
      $region66: #{frustum_point_dan_full_forward.3} parent=11 // pred_check_branch
        %772 = sbr.rel (%p770) target = $region68
      $region67: #{frustum_point_dan_full_forward.3} parent=11 // pred_region
        _
      $region68: #{frustum_point_dan_full_forward.3} parent=11 // pred_fallthru
        _
      // Predicated region
      $region69: #{frustum_point_dan_full_forward.3} parent=11 // pred_check
        %p773 = pneg %p433
      $region70: #{frustum_point_dan_full_forward.3} parent=11 // pred_check_branch
        %775 = sbr.rel (%p773) target = $region72
      $region71: #{frustum_point_dan_full_forward.3} parent=11 // pred_region
        _
      $region72: #{frustum_point_dan_full_forward.3} parent=11 // pred_fallthru
        _
      // Predicated region
      $region73: #{frustum_point_dan_full_forward.3} parent=11 // pred_check
        %p776 = pneg %p454
      $region74: #{frustum_point_dan_full_forward.3} parent=11 // pred_check_branch
        %778 = sbr.rel (%p776) target = $region76
      $region75: #{frustum_point_dan_full_forward.3} parent=11 // pred_region
        _
      $region76: #{frustum_point_dan_full_forward.3} parent=11 // pred_fallthru
        _
      // Predicated region
      $region77: #{frustum_point_dan_full_forward.3} parent=11 // pred_check
        %p779 = pneg %p475
      $region78: #{frustum_point_dan_full_forward.3} parent=11 // pred_check_branch
        %781 = sbr.rel (%p779) target = $region80
      $region79: #{frustum_point_dan_full_forward.3} parent=11 // pred_region
        _
      $region80: #{frustum_point_dan_full_forward.3} parent=11 // pred_fallthru
        _
      // Predicated region
      $region81: #{frustum_point_dan_full_forward.3} parent=11 // pred_check
        %p782 = pneg %p496
      $region82: #{frustum_point_dan_full_forward.3} parent=11 // pred_check_branch
        %784 = sbr.rel (%p782) target = $region84
      $region83: #{frustum_point_dan_full_forward.3} parent=11 // pred_region
        _
      $region84: #{frustum_point_dan_full_forward.3} parent=11 // pred_fallthru
        _
      // Predicated region
      $region85: #{frustum_point_dan_full_forward.3} parent=11 // pred_check
        %p785 = pneg %p517
      $region86: #{frustum_point_dan_full_forward.3} parent=11 // pred_check_branch
        %787 = sbr.rel (%p785) target = $region88
      $region87: #{frustum_point_dan_full_forward.3} parent=11 // pred_region
        _
      $region88: #{frustum_point_dan_full_forward.3} parent=11 // pred_fallthru
        _
      // Predicated region
      $region89: #{frustum_point_dan_full_forward.3} parent=11 // pred_check
        %p788 = pneg %p538
      $region90: #{frustum_point_dan_full_forward.3} parent=11 // pred_check_branch
        %790 = sbr.rel (%p788) target = $region92
      $region91: #{frustum_point_dan_full_forward.3} parent=11 // pred_region
        _
      $region92: #{frustum_point_dan_full_forward.3} parent=11 // pred_fallthru
        _
      // Predicated region
      $region93: #{frustum_point_dan_full_forward.3} parent=11 // pred_check
        %p791 = pneg %p559
      $region94: #{frustum_point_dan_full_forward.3} parent=11 // pred_check_branch
        %793 = sbr.rel (%p791) target = $region96
      $region95: #{frustum_point_dan_full_forward.3} parent=11 // pred_region
        _
      $region96: #{frustum_point_dan_full_forward.3} parent=11 // pred_fallthru
        _
      // Predicated region
      $region97: #{frustum_point_dan_full_forward.3} parent=11 // pred_check
        %p794 = pneg %p580
      $region98: #{frustum_point_dan_full_forward.3} parent=11 // pred_check_branch
        %796 = sbr.rel (%p794) target = $region100
      $region99: #{frustum_point_dan_full_forward.3} parent=11 // pred_region
        _
      $region100: #{frustum_point_dan_full_forward.3} parent=11 // pred_fallthru
        _
      // Predicated region
      $region101: #{frustum_point_dan_full_forward.3} parent=11 // pred_check
        %p797 = pneg %p601
      $region102: #{frustum_point_dan_full_forward.3} parent=11 // pred_check_branch
        %799 = sbr.rel (%p797) target = $region104
      $region103: #{frustum_point_dan_full_forward.3} parent=11 // pred_region
        _
      $region104: #{frustum_point_dan_full_forward.3} parent=11 // pred_fallthru
        _
      // Predicated region
      $region105: #{frustum_point_dan_full_forward.3} parent=11 // pred_check
        %p800 = pneg %p622
      $region106: #{frustum_point_dan_full_forward.3} parent=11 // pred_check_branch
        %802 = sbr.rel (%p800) target = $region108
      $region107: #{frustum_point_dan_full_forward.3} parent=11 // pred_region
        _
      $region108: #{frustum_point_dan_full_forward.3} parent=11 // pred_fallthru
        _
      // Predicated region
      $region109: #{frustum_point_dan_full_forward.3} parent=11 // pred_check
        %p803 = pneg %p643
      $region110: #{frustum_point_dan_full_forward.3} parent=11 // pred_check_branch
        %805 = sbr.rel (%p803) target = $region112
      $region111: #{frustum_point_dan_full_forward.3} parent=11 // pred_region
        _
      $region112: #{frustum_point_dan_full_forward.3} parent=11 // pred_fallthru
        _
      // Predicated region
      $region113: #{frustum_point_dan_full_forward.3} parent=11 // pred_check
        %p806 = pneg %p664
      $region114: #{frustum_point_dan_full_forward.3} parent=11 // pred_check_branch
        %808 = sbr.rel (%p806) target = $region116
      $region115: #{frustum_point_dan_full_forward.3} parent=11 // pred_region
        _
      $region116: #{frustum_point_dan_full_forward.3} parent=11 // pred_fallthru
        _
    $region12: #{frustum_point_dan_full_forward.3} parent=5 // pred_fallthru
      _
    %p809 = scmp.lt.s32.totalorder %s66, 2
    // Predicated region
    $region117: #{frustum_point_dan_full_forward.3} parent=5 // pred_check
      %p810 = pneg %p809
    $region118: #{frustum_point_dan_full_forward.3} parent=5 // pred_check_branch
      %812 = sbr.rel (%p810) target = $region120
    $region119: #{frustum_point_dan_full_forward.3} parent=5 // pred_region
      // Predicated region
      $region121: #{frustum_point_dan_full_forward.3} parent=119 // pred_check
        %p813 = pneg %p86
      $region122: #{frustum_point_dan_full_forward.3} parent=119 // pred_check_branch
        %815 = sbr.rel (%p813) target = $region124
      $region123: #{frustum_point_dan_full_forward.3} parent=119 // pred_region
        %p816 = scmp.lt.s32.totalorder %s66, 1
        %s817 = scalar_select %p816, %s66, 1
        %s818 = smul.addr %s817, 8
        %s819 = smul.addr %s818, 8
        %s820 = scalar_lea.vmem %s1, %s819
      $region124: #{frustum_point_dan_full_forward.3} parent=119 // pred_fallthru
        _
      // Predicated region
      $region125: #{frustum_point_dan_full_forward.3} parent=119 // pred_check
        %p821 = pneg %p112
      $region126: #{frustum_point_dan_full_forward.3} parent=119 // pred_check_branch
        %823 = sbr.rel (%p821) target = $region128
      $region127: #{frustum_point_dan_full_forward.3} parent=119 // pred_region
        %p824 = scmp.lt.s32.totalorder %s66, 1
        %s825 = scalar_select %p824, %s66, 1
        %s826 = scalar_lea.vmem %s3, %s825
      $region128: #{frustum_point_dan_full_forward.3} parent=119 // pred_fallthru
        _
    $region120: #{frustum_point_dan_full_forward.3} parent=5 // pred_fallthru
      _
    %p827 = scmp.le.s32.totalorder 1, %s66
    %p828 = scmp.lt.s32.totalorder %s66, 3
    %p829 = pnand %p827, %p828
    %p830 = pneg %p829
    // Predicated region
    $region129: #{frustum_point_dan_full_forward.3} parent=5 // pred_check
      _
    $region130: #{frustum_point_dan_full_forward.3} parent=5 // pred_check_branch
      %832 = sbr.rel (%p829) target = $region132
    $region131: #{frustum_point_dan_full_forward.3} parent=5 // pred_region
      %s833 = ssub.s32 %s66, 1
      %p834 = scmp.lt.s32.totalorder %s71, 1
      %s835 = scalar_select %p834, %s71, 1
      %s836 = smul.addr %s835, 8
      %s837 = smul.addr %s836, 8
      %s838 = scalar_lea.vmem %s1, %s837
      %p839 = pneg %p92
      %p840 = pneg %p89
      %p841 = scmp.lt.s32.totalorder %s71, 1
      %s842 = scalar_select %p841, %s71, 1
      %s843 = scalar_lea.vmem %s3, %s842
      %p844 = pneg %p118
      %p845 = pneg %p115
      %p846 = pneg %p139
      %p847 = pneg %p136
      %p848 = pneg %p160
      %p849 = pneg %p157
      %p850 = pneg %p181
      %p851 = pneg %p178
      %p852 = pneg %p202
      %p853 = pneg %p199
      %p854 = pneg %p223
      %p855 = pneg %p220
      %p856 = pneg %p244
      %p857 = pneg %p241
      %p858 = pneg %p265
      %p859 = pneg %p262
      %p860 = pneg %p286
      %p861 = pneg %p283
      %p862 = pneg %p307
      %p863 = pneg %p304
      %p864 = pneg %p328
      %p865 = pneg %p325
      %p866 = pneg %p349
      %p867 = pneg %p346
      %p868 = pneg %p370
      %p869 = pneg %p367
      %p870 = pneg %p391
      %p871 = pneg %p388
      %p872 = pneg %p412
      %p873 = pneg %p409
      %p874 = pneg %p433
      %p875 = pneg %p430
      %p876 = pneg %p454
      %p877 = pneg %p451
      %p878 = pneg %p475
      %p879 = pneg %p472
      %p880 = pneg %p496
      %p881 = pneg %p493
      %p882 = pneg %p517
      %p883 = pneg %p514
      %p884 = pneg %p538
      %p885 = pneg %p535
      %p886 = pneg %p559
      %p887 = pneg %p556
      %p888 = pneg %p580
      %p889 = pneg %p577
      %p890 = pneg %p601
      %p891 = pneg %p598
      %p892 = pneg %p622
      %p893 = pneg %p619
      %p894 = pneg %p643
      %p895 = pneg %p640
      %p896 = pneg %p664
      %p897 = pneg %p661
      %p898 = pneg %p690
      %p899 = pneg %p687
      %p900 = scmp.lt.s32.totalorder %s71, 1
      %s901 = scalar_select %p900, %s71, 1
      %s902 = scalar_lea.vmem %s57, %s901
      %p903 = pneg %p716
      %p904 = pneg %p713
      %p905 = scmp.lt.s32.totalorder %s71, 1
      %s906 = scalar_select %p905, %s71, 1
      %s907 = scalar_lea.vmem %s59, %s906
      %p908 = scmp.lt.s32.totalorder %s71, 1
      %s909 = scalar_select %p908, %s71, 1
      %s910 = smul.addr %s909, 8
      %s911 = smul.addr %s910, 8
      %s912 = scalar_lea.vmem %s1, %s911
      %p913 = scmp.lt.s32.totalorder %s71, 1
      %s914 = scalar_select %p913, %s71, 1
      %s915 = scalar_lea.vmem %s3, %s914
      %p916 = scmp.lt.s32.totalorder %s71, 1
      %s917 = scalar_select %p916, %s71, 1
      %s918 = scalar_lea.vmem %s57, %s917
      %p919 = scmp.lt.s32.totalorder %s71, 1
      %s920 = scalar_select %p919, %s71, 1
      %s921 = scalar_lea.vmem %s59, %s920
      %v923 = vld [vmem:[%s912] sm:$0xff]
      %v924 = vld [vmem:[%s912 + $0x8] sm:$0xff]
      %v925 = vld [vmem:[%s912 + $0x10] sm:$0xff]
      %v926 = vld [vmem:[%s912 + $0x18] sm:$0xff]
      %v927 = vld [vmem:[%s912 + $0x20] sm:$0xff]
      %v928 = vld [vmem:[%s912 + $0x28] sm:$0xff]
      %v929 = vld [vmem:[%s912 + $0x30] sm:$0xff]
      %v930 = vld [vmem:[%s912 + $0x38] sm:$0xff]
      %v931 = vld [vmem:[%s915] sm:$0x1]
      %v932 = vld [vmem:[%s5] sm:$0x7]
      %v933 = vld [vmem:[%s7] sm:$0x1]
      %v935 = vlaneseq
      %v936 = vshrl.u32 %v935, 7
      %v937 = vsub.s32 0, %v936
      %v938 = vrot.slane %v933, %v937
      %vm940 = vcmask 23552
      %v942 = vsel %vm940, %v923, 0
      %v945 = vsel %vm940, %v924, 0
      %v948 = vsel %vm940, %v925, 0
      %v951 = vsel %vm940, %v926, 0
      %v954 = vsel %vm940, %v927, 0
      %v957 = vsel %vm940, %v928, 0
      %v960 = vsel %vm940, %v929, 0
      %v963 = vsel %vm940, %v930, 0
      %vm965 = vcmask 1042432
      %v967 = vsel %vm965, %v932, 0
      %969 = vmatprep.subr.mxu0 0.0
      %970 = vmatpush1.msra.mxu0 %v967
      %971 = vmatprep.subr.mxu0 0.0
      %972 = vmatpush1.msra.mxu0 0.0
      %973 = vmatprep.subr.mxu0 0.0
      %974 = vmatpush1.msra.mxu0 0.0
      %975 = vmatprep.subr.mxu0 0.0
      %976 = vmatpush1.msra.mxu0 0.0
      %977 = vmatprep.subr.mxu0 0.0
      %978 = vmatpush1.msra.mxu0 0.0
      %979 = vmatprep.subr.mxu0 0.0
      %980 = vmatpush1.msra.mxu0 0.0
      %981 = vmatprep.subr.mxu0 0.0
      %982 = vmatpush1.msra.mxu0 0.0
      %983 = vmatprep.subr.mxu0 0.0
      %984 = vmatpush1.msra.mxu0 0.0
      %985 = vmatprep.subr.mxu0 0.0
      %986 = vmatpush1.msra.mxu0 0.0
      %987 = vmatprep.subr.mxu0 0.0
      %988 = vmatpush1.msra.mxu0 0.0
      %989 = vmatprep.subr.mxu0 0.0
      %990 = vmatpush1.msra.mxu0 0.0
      %991 = vmatprep.subr.mxu0 0.0
      %992 = vmatpush1.msra.mxu0 0.0
      %993 = vmatprep.subr.mxu0 0.0
      %994 = vmatpush1.msra.mxu0 0.0
      %995 = vmatprep.subr.mxu0 0.0
      %996 = vmatpush1.msra.mxu0 0.0
      %997 = vmatprep.subr.mxu0 0.0
      %998 = vmatpush1.msra.mxu0 0.0
      %999 = vmatprep.subr.mxu0 0.0
      %1000 = vmatpush1.msra.mxu0 0.0
      %1001 = vmatprep.subr.mxu0 0.0
      %1002 = vmatpush1.msra.mxu0 0.0
      %1003 = vmatprep.subr.mxu0 0.0
      %1004 = vmatpush1.msra.mxu0 0.0
      %1005 = vmatprep.subr.mxu0 0.0
      %1006 = vmatpush1.msra.mxu0 0.0
      %1007 = vmatprep.subr.mxu0 0.0
      %1008 = vmatpush1.msra.mxu0 0.0
      %1009 = vmatprep.subr.mxu0 0.0
      %1010 = vmatpush1.msra.mxu0 0.0
      %1011 = vmatprep.subr.mxu0 0.0
      %1012 = vmatpush1.msra.mxu0 0.0
      %1013 = vmatprep.subr.mxu0 0.0
      %1014 = vmatpush1.msra.mxu0 0.0
      %1015 = vmatprep.subr.mxu0 0.0
      %1016 = vmatpush1.msra.mxu0 0.0
      %1017 = vmatprep.subr.mxu0 0.0
      %1018 = vmatpush1.msra.mxu0 0.0
      %1019 = vmatprep.subr.mxu0 0.0
      %1020 = vmatpush1.msra.mxu0 0.0
      %1021 = vmatprep.subr.mxu0 0.0
      %1022 = vmatpush1.msra.mxu0 0.0
      %1023 = vmatprep.subr.mxu0 0.0
      %1024 = vmatpush1.msra.mxu0 0.0
      %1025 = vmatprep.subr.mxu0 0.0
      %1026 = vmatpush1.msra.mxu0 0.0
      %1027 = vmatprep.subr.mxu0 0.0
      %1028 = vmatpush1.msra.mxu0 0.0
      %1029 = vmatprep.subr.mxu0 0.0
      %1030 = vmatpush1.msra.mxu0 0.0
      %1031 = vmatprep.subr.mxu0 0.0
      %1032 = vmatpush1.msra.mxu0 0.0
      %1033 = vmatprep.mubr.f32.mxu0 0.0
      %1034 = vmatmul.mubr.f32.gmra.mrb[0].mxu0 %v942
      %v1035 = vpop.f32.mrb[0].mxu0
      %v1036 = vadd.f32 %v938, %v1035
      %v1037 = vpop.f32.mrb[0].mxu0
      %1038 = vmatprep.mubr.f32.mxu0 0.0
      %1039 = vmatmul.mubr.f32.gmra.mrb[0].mxu0 %v945
      %v1040 = vpop.f32.mrb[0].mxu0
      %v1041 = vadd.f32 %v938, %v1040
      %v1042 = vpop.f32.mrb[0].mxu0
      %1043 = vmatprep.mubr.f32.mxu0 0.0
      %1044 = vmatmul.mubr.f32.gmra.mrb[0].mxu0 %v948
      %v1045 = vpop.f32.mrb[0].mxu0
      %v1046 = vadd.f32 %v938, %v1045
      %v1047 = vpop.f32.mrb[0].mxu0
      %1048 = vmatprep.mubr.f32.mxu0 0.0
      %1049 = vmatmul.mubr.f32.gmra.mrb[0].mxu0 %v951
      %v1050 = vpop.f32.mrb[0].mxu0
      %v1051 = vadd.f32 %v938, %v1050
      %v1052 = vpop.f32.mrb[0].mxu0
      %1053 = vmatprep.mubr.f32.mxu0 0.0
      %1054 = vmatmul.mubr.f32.gmra.mrb[0].mxu0 %v954
      %v1055 = vpop.f32.mrb[0].mxu0
      %v1056 = vadd.f32 %v938, %v1055
      %v1057 = vpop.f32.mrb[0].mxu0
      %1058 = vmatprep.mubr.f32.mxu0 0.0
      %1059 = vmatmul.mubr.f32.gmra.mrb[0].mxu0 %v957
      %v1060 = vpop.f32.mrb[0].mxu0
      %v1061 = vadd.f32 %v938, %v1060
      %v1062 = vpop.f32.mrb[0].mxu0
      %1063 = vmatprep.mubr.f32.mxu0 0.0
      %1064 = vmatmul.mubr.f32.gmra.mrb[0].mxu0 %v960
      %v1065 = vpop.f32.mrb[0].mxu0
      %v1066 = vadd.f32 %v938, %v1065
      %v1067 = vpop.f32.mrb[0].mxu0
      %1068 = vmatprep.mubr.f32.mxu0 0.0
      %1069 = vmatmul.mubr.f32.gmra.mrb[0].mxu0 %v963
      %v1070 = vpop.f32.mrb[0].mxu0
      %v1071 = vadd.f32 %v938, %v1070
      %v1072 = vpop.f32.mrb[0].mxu0
      %1073 = vdwg.mxu0
      %v1074 = vmax.f32 %v1036, 0.0
      %v1075 = vmax.f32 %v1041, 0.0
      %v1076 = vmax.f32 %v1046, 0.0
      %v1077 = vmax.f32 %v1051, 0.0
      %v1078 = vmax.f32 %v1056, 0.0
      %v1079 = vmax.f32 %v1061, 0.0
      %v1080 = vmax.f32 %v1066, 0.0
      %v1081 = vmax.f32 %v1071, 0.0
      %v1082 = vpack.c.bf16 %v1075, %v1074
      %v1083 = vpack.c.bf16 %v1077, %v1076
      %v1084 = vpack.c.bf16 %v1079, %v1078
      %v1085 = vpack.c.bf16 %v1081, %v1080
      %v1086 = vld [vmem:[%s9] sm:$0xf]
      %v1087 = vld [vmem:[%s9 + $0x4] sm:$0xf]
      %v1088 = vld [vmem:[%s9 + $0x8] sm:$0xf]
      %v1089 = vld [vmem:[%s9 + $0xc] sm:$0xf]
      %v1090 = vld [vmem:[%s11] sm:$0x1]
      %v1092 = vlaneseq
      %v1093 = vshrl.u32 %v1092, 7
      %v1094 = vsub.s32 0, %v1093
      %v1095 = vrot.slane %v1090, %v1094
      %v1101 = vunpack.c.l.b16 %v1086
      %v1102 = vunpack.c.l.b16 %v1087
      %v1103 = vunpack.c.l.b16 %v1088
      %v1104 = vunpack.c.l.b16 %v1089
      %v1105 = vpack.c.b16 %v1102, %v1101
      %v1106 = vpack.c.b16 %v1104, %v1103
      %vm1109 = vcmask 261120
      %v1111 = vsel %vm1109, %v1082, 0
      %v1114 = vsel %vm1109, %v1083, 0
      %v1117 = vsel %vm1109, %v1084, 0
      %v1120 = vsel %vm1109, %v1085, 0
      %1122 = vmatprep.subr.bf16.mxu0 0
      %1123 = vmatpush1.bf16.msra.mxu0 %v1105
      %1124 = vmatprep.subr.bf16.mxu0 0
      %1125 = vmatpush1.bf16.msra.mxu0 %v1106
      %1126 = vmatprep.subr.bf16.mxu0 0
      %1127 = vmatpush1.bf16.msra.mxu0 0
      %1128 = vmatprep.subr.bf16.mxu0 0
      %1129 = vmatpush1.bf16.msra.mxu0 0
      %1130 = vmatprep.subr.bf16.mxu0 0
      %1131 = vmatpush1.bf16.msra.mxu0 0
      %1132 = vmatprep.subr.bf16.mxu0 0
      %1133 = vmatpush1.bf16.msra.mxu0 0
      %1134 = vmatprep.subr.bf16.mxu0 0
      %1135 = vmatpush1.bf16.msra.mxu0 0
      %1136 = vmatprep.subr.bf16.mxu0 0
      %1137 = vmatpush1.bf16.msra.mxu0 0
      %1138 = vmatprep.subr.bf16.mxu0 0
      %1139 = vmatpush1.bf16.msra.mxu0 0
      %1140 = vmatprep.subr.bf16.mxu0 0
      %1141 = vmatpush1.bf16.msra.mxu0 0
      %1142 = vmatprep.subr.bf16.mxu0 0
      %1143 = vmatpush1.bf16.msra.mxu0 0
      %1144 = vmatprep.subr.bf16.mxu0 0
      %1145 = vmatpush1.bf16.msra.mxu0 0
      %1146 = vmatprep.subr.bf16.mxu0 0
      %1147 = vmatpush1.bf16.msra.mxu0 0
      %1148 = vmatprep.subr.bf16.mxu0 0
      %1149 = vmatpush1.bf16.msra.mxu0 0
      %1150 = vmatprep.subr.bf16.mxu0 0
      %1151 = vmatpush1.bf16.msra.mxu0 0
      %1152 = vmatprep.subr.bf16.mxu0 0
      %1153 = vmatpush1.bf16.msra.mxu0 0
      %1154 = vmatprep.mubr.bf16.mxu0 0
      %1155 = vmatmul.mubr.bf16.gmra.mrb[0].mxu0 %v1111
      %v1156 = vpop.f32.mrb[0].mxu0
      %v1157 = vadd.f32 %v1095, %v1156
      %v1158 = vpop.f32.mrb[0].mxu0
      %v1159 = vpop.f32.mrb[0].mxu0
      %v1160 = vadd.f32 %v1095, %v1159
      %v1161 = vpop.f32.mrb[0].mxu0
      %1162 = vmatprep.mubr.bf16.mxu0 0
      %1163 = vmatmul.mubr.bf16.gmra.mrb[0].mxu0 %v1114
      %v1164 = vpop.f32.mrb[0].mxu0
      %v1165 = vadd.f32 %v1095, %v1164
      %v1166 = vpop.f32.mrb[0].mxu0
      %v1167 = vpop.f32.mrb[0].mxu0
      %v1168 = vadd.f32 %v1095, %v1167
      %v1169 = vpop.f32.mrb[0].mxu0
      %1170 = vmatprep.mubr.bf16.mxu0 0
      %1171 = vmatmul.mubr.bf16.gmra.mrb[0].mxu0 %v1117
      %v1172 = vpop.f32.mrb[0].mxu0
      %v1173 = vadd.f32 %v1095, %v1172
      %v1174 = vpop.f32.mrb[0].mxu0
      %v1175 = vpop.f32.mrb[0].mxu0
      %v1176 = vadd.f32 %v1095, %v1175
      %v1177 = vpop.f32.mrb[0].mxu0
      %1178 = vmatprep.mubr.bf16.mxu0 0
      %1179 = vmatmul.mubr.bf16.gmra.mrb[0].mxu0 %v1120
      %v1180 = vpop.f32.mrb[0].mxu0
      %v1181 = vadd.f32 %v1095, %v1180
      %v1182 = vpop.f32.mrb[0].mxu0
      %v1183 = vpop.f32.mrb[0].mxu0
      %v1184 = vadd.f32 %v1095, %v1183
      %v1185 = vpop.f32.mrb[0].mxu0
      %1186 = vdwg.mxu0
      %v1187 = vmax.f32 %v1157, 0.0
      %v1188 = vmax.f32 %v1160, 0.0
      %v1189 = vmax.f32 %v1165, 0.0
      %v1190 = vmax.f32 %v1168, 0.0
      %v1191 = vmax.f32 %v1173, 0.0
      %v1192 = vmax.f32 %v1176, 0.0
      %v1193 = vmax.f32 %v1181, 0.0
      %v1194 = vmax.f32 %v1184, 0.0
      %v1195 = vpack.c.bf16 %v1188, %v1187
      %v1196 = vpack.c.bf16 %v1190, %v1189
      %v1197 = vpack.c.bf16 %v1192, %v1191
      %v1198 = vpack.c.bf16 %v1194, %v1193
      %v1199 = vld [vmem:[%s13] sm:$0xf]
      %v1200 = vld [vmem:[%s13 + $0x4] sm:$0xf]
      %v1201 = vld [vmem:[%s13 + $0x8] sm:$0xf]
      %v1202 = vld [vmem:[%s13 + $0xc] sm:$0xf]
      %v1203 = vld [vmem:[%s13 + $0x10] sm:$0xf]
      %v1204 = vld [vmem:[%s13 + $0x14] sm:$0xf]
      %v1205 = vld [vmem:[%s13 + $0x18] sm:$0xf]
      %v1206 = vld [vmem:[%s13 + $0x1c] sm:$0xf]
      %v1207 = vld [vmem:[%s15] sm:$0x1]
      %v1209 = vlaneseq
      %v1210 = vshrl.u32 %v1209, 7
      %v1211 = vsub.s32 0, %v1210
      %v1212 = vrot.slane %v1207, %v1211
      %v1222 = vunpack.c.l.b16 %v1199
      %v1223 = vunpack.c.l.b16 %v1200
      %v1224 = vunpack.c.l.b16 %v1201
      %v1225 = vunpack.c.l.b16 %v1202
      %v1226 = vunpack.c.l.b16 %v1203
      %v1227 = vunpack.c.l.b16 %v1204
      %v1228 = vunpack.c.l.b16 %v1205
      %v1229 = vunpack.c.l.b16 %v1206
      %v1230 = vpack.c.b16 %v1223, %v1222
      %v1231 = vpack.c.b16 %v1225, %v1224
      %v1232 = vpack.c.b16 %v1227, %v1226
      %v1233 = vpack.c.b16 %v1229, %v1228
      %vm1238 = vcmask 523264
      %v1240 = vsel %vm1238, %v1195, 0
      %v1243 = vsel %vm1238, %v1196, 0
      %v1246 = vsel %vm1238, %v1197, 0
      %v1249 = vsel %vm1238, %v1198, 0
      %1251 = vmatprep.subr.bf16.mxu0 0
      %1252 = vmatpush1.bf16.msra.mxu0 %v1230
      %1253 = vmatprep.subr.bf16.mxu0 0
      %1254 = vmatpush1.bf16.msra.mxu0 %v1231
      %1255 = vmatprep.subr.bf16.mxu0 0
      %1256 = vmatpush1.bf16.msra.mxu0 %v1232
      %1257 = vmatprep.subr.bf16.mxu0 0
      %1258 = vmatpush1.bf16.msra.mxu0 %v1233
      %1259 = vmatprep.subr.bf16.mxu0 0
      %1260 = vmatpush1.bf16.msra.mxu0 0
      %1261 = vmatprep.subr.bf16.mxu0 0
      %1262 = vmatpush1.bf16.msra.mxu0 0
      %1263 = vmatprep.subr.bf16.mxu0 0
      %1264 = vmatpush1.bf16.msra.mxu0 0
      %1265 = vmatprep.subr.bf16.mxu0 0
      %1266 = vmatpush1.bf16.msra.mxu0 0
      %1267 = vmatprep.subr.bf16.mxu0 0
      %1268 = vmatpush1.bf16.msra.mxu0 0
      %1269 = vmatprep.subr.bf16.mxu0 0
      %1270 = vmatpush1.bf16.msra.mxu0 0
      %1271 = vmatprep.subr.bf16.mxu0 0
      %1272 = vmatpush1.bf16.msra.mxu0 0
      %1273 = vmatprep.subr.bf16.mxu0 0
      %1274 = vmatpush1.bf16.msra.mxu0 0
      %1275 = vmatprep.subr.bf16.mxu0 0
      %1276 = vmatpush1.bf16.msra.mxu0 0
      %1277 = vmatprep.subr.bf16.mxu0 0
      %1278 = vmatpush1.bf16.msra.mxu0 0
      %1279 = vmatprep.subr.bf16.mxu0 0
      %1280 = vmatpush1.bf16.msra.mxu0 0
      %1281 = vmatprep.subr.bf16.mxu0 0
      %1282 = vmatpush1.bf16.msra.mxu0 0
      %1283 = vmatprep.mubr.bf16.mxu0 0
      %1284 = vmatmul.mubr.bf16.gmra.mrb[0].mxu0 %v1240
      %v1285 = vpop.f32.mrb[0].mxu0
      %v1286 = vadd.f32 %v1212, %v1285
      %v1287 = vpop.f32.mrb[0].mxu0
      %v1288 = vpop.f32.mrb[0].mxu0
      %v1289 = vadd.f32 %v1212, %v1288
      %v1290 = vpop.f32.mrb[0].mxu0
      %1291 = vmatprep.mubr.bf16.mxu0 0
      %1292 = vmatmul.mubr.bf16.gmra.mrb[0].mxu0 %v1243
      %v1293 = vpop.f32.mrb[0].mxu0
      %v1294 = vadd.f32 %v1212, %v1293
      %v1295 = vpop.f32.mrb[0].mxu0
      %v1296 = vpop.f32.mrb[0].mxu0
      %v1297 = vadd.f32 %v1212, %v1296
      %v1298 = vpop.f32.mrb[0].mxu0
      %1299 = vmatprep.mubr.bf16.mxu0 0
      %1300 = vmatmul.mubr.bf16.gmra.mrb[0].mxu0 %v1246
      %v1301 = vpop.f32.mrb[0].mxu0
      %v1302 = vadd.f32 %v1212, %v1301
      %v1303 = vpop.f32.mrb[0].mxu0
      %v1304 = vpop.f32.mrb[0].mxu0
      %v1305 = vadd.f32 %v1212, %v1304
      %v1306 = vpop.f32.mrb[0].mxu0
      %1307 = vmatprep.mubr.bf16.mxu0 0
      %1308 = vmatmul.mubr.bf16.gmra.mrb[0].mxu0 %v1249
      %v1309 = vpop.f32.mrb[0].mxu0
      %v1310 = vadd.f32 %v1212, %v1309
      %v1311 = vpop.f32.mrb[0].mxu0
      %v1312 = vpop.f32.mrb[0].mxu0
      %v1313 = vadd.f32 %v1212, %v1312
      %v1314 = vpop.f32.mrb[0].mxu0
      %1315 = vdwg.mxu0
      %v1316 = vmax.f32 %v1286, 0.0
      %v1317 = vmax.f32 %v1289, 0.0
      %v1318 = vmax.f32 %v1294, 0.0
      %v1319 = vmax.f32 %v1297, 0.0
      %v1320 = vmax.f32 %v1302, 0.0
      %v1321 = vmax.f32 %v1305, 0.0
      %v1322 = vmax.f32 %v1310, 0.0
      %v1323 = vmax.f32 %v1313, 0.0
      %v1324 = vmax.f32 %v1316, %v1320
      %v1325 = vmax.f32 %v1317, %v1321
      %v1326 = vmax.f32 %v1318, %v1322
      %v1327 = vmax.f32 %v1319, %v1323
      %v1328 = vmax.f32 %v1324, %v1325
      %v1329 = vmax.f32 %v1326, %v1327
      %v1330 = vmax.f32 %v1328, %v1329
      %v1331 = vrot.slane %v1330, 4
      %v1332 = vmax.f32 %v1330, %v1331
      %v1333 = vrot.slane %v1332, 2
      %v1334 = vmax.f32 %v1332, %v1333
      %v1335 = vrot.slane %v1334, 1
      %v1336 = vmax.f32 %v1334, %v1335
      %v1337 = vpack.c.bf16 %v1336, %v1336
      %v1338 = vld [vmem:[%s17] sm:$0xf]
      %v1339 = vld [vmem:[%s17 + $0x4] sm:$0xf]
      %v1340 = vld [vmem:[%s17 + $0x8] sm:$0xf]
      %v1341 = vld [vmem:[%s17 + $0xc] sm:$0xf]
      %v1342 = vld [vmem:[%s17 + $0x10] sm:$0xf]
      %v1343 = vld [vmem:[%s17 + $0x14] sm:$0xf]
      %v1344 = vld [vmem:[%s17 + $0x18] sm:$0xf]
      %v1345 = vld [vmem:[%s17 + $0x1c] sm:$0xf]
      %v1346 = vld [vmem:[%s17 + $0x20] sm:$0xf]
      %v1347 = vld [vmem:[%s17 + $0x24] sm:$0xf]
      %v1348 = vld [vmem:[%s17 + $0x28] sm:$0xf]
      %v1349 = vld [vmem:[%s17 + $0x2c] sm:$0xf]
      %v1350 = vld [vmem:[%s17 + $0x30] sm:$0xf]
      %v1351 = vld [vmem:[%s17 + $0x34] sm:$0xf]
      %v1352 = vld [vmem:[%s17 + $0x38] sm:$0xf]
      %v1353 = vld [vmem:[%s17 + $0x3c] sm:$0xf]
      %v1354 = vpack.c.bf16 %v931, %v931
      %v1355 = vld [vmem:[%s19] sm:$0x3]
      %v1357 = vsel %vm940, %v1354, 0
      %vm1359 = vcmask 1040384
      %vm1360 = vcmask 1041408
      %v1361 = vsel %vm1359, 4294967295, 65535
      %v1362 = vsel %vm1360, %v1361, 0
      %v1364 = vand.u32 %v1355, %v1362
      %1366 = vmatprep.subr.bf16.mxu0 0
      %1367 = vmatpush1.bf16.msra.mxu0 %v1364
      %1368 = vmatprep.subr.bf16.mxu0 0
      %1369 = vmatpush1.bf16.msra.mxu0 0
      %1370 = vmatprep.subr.bf16.mxu0 0
      %1371 = vmatpush1.bf16.msra.mxu0 0
      %1372 = vmatprep.subr.bf16.mxu0 0
      %1373 = vmatpush1.bf16.msra.mxu0 0
      %1374 = vmatprep.subr.bf16.mxu0 0
      %1375 = vmatpush1.bf16.msra.mxu0 0
      %1376 = vmatprep.subr.bf16.mxu0 0
      %1377 = vmatpush1.bf16.msra.mxu0 0
      %1378 = vmatprep.subr.bf16.mxu0 0
      %1379 = vmatpush1.bf16.msra.mxu0 0
      %1380 = vmatprep.subr.bf16.mxu0 0
      %1381 = vmatpush1.bf16.msra.mxu0 0
      %1382 = vmatprep.subr.bf16.mxu0 0
      %1383 = vmatpush1.bf16.msra.mxu0 0
      %1384 = vmatprep.subr.bf16.mxu0 0
      %1385 = vmatpush1.bf16.msra.mxu0 0
      %1386 = vmatprep.subr.bf16.mxu0 0
      %1387 = vmatpush1.bf16.msra.mxu0 0
      %1388 = vmatprep.subr.bf16.mxu0 0
      %1389 = vmatpush1.bf16.msra.mxu0 0
      %1390 = vmatprep.subr.bf16.mxu0 0
      %1391 = vmatpush1.bf16.msra.mxu0 0
      %1392 = vmatprep.subr.bf16.mxu0 0
      %1393 = vmatpush1.bf16.msra.mxu0 0
      %1394 = vmatprep.subr.bf16.mxu0 0
      %1395 = vmatpush1.bf16.msra.mxu0 0
      %1396 = vmatprep.subr.bf16.mxu0 0
      %1397 = vmatpush1.bf16.msra.mxu0 0
      %1398 = vmatprep.mubr.bf16.mxu0 0
      %1399 = vmatmul.mubr.bf16.gmra.mrb[0].mxu0 %v1357
      %v1400 = vpop.f32.mrb[0].mxu0
      %v1401 = vadd.f32 0.0, %v1400
      %v1402 = vpop.f32.mrb[0].mxu0
      %v1403 = vpop.f32.mrb[0].mxu0
      %v1404 = vpop.f32.mrb[0].mxu0
      %1405 = vdwg.mxu0
      %v1422 = vunpack.c.l.b16 %v1338
      %v1423 = vunpack.c.l.b16 %v1339
      %v1424 = vunpack.c.l.b16 %v1340
      %v1425 = vunpack.c.l.b16 %v1341
      %v1426 = vunpack.c.l.b16 %v1342
      %v1427 = vunpack.c.l.b16 %v1343
      %v1428 = vunpack.c.l.b16 %v1344
      %v1429 = vunpack.c.l.b16 %v1345
      %v1430 = vunpack.c.l.b16 %v1346
      %v1431 = vunpack.c.l.b16 %v1347
      %v1432 = vunpack.c.l.b16 %v1348
      %v1433 = vunpack.c.l.b16 %v1349
      %v1434 = vunpack.c.l.b16 %v1350
      %v1435 = vunpack.c.l.b16 %v1351
      %v1436 = vunpack.c.l.b16 %v1352
      %v1437 = vunpack.c.l.b16 %v1353
      %v1438 = vpack.c.b16 %v1423, %v1422
      %v1439 = vpack.c.b16 %v1425, %v1424
      %v1440 = vpack.c.b16 %v1427, %v1426
      %v1441 = vpack.c.b16 %v1429, %v1428
      %v1442 = vpack.c.b16 %v1431, %v1430
      %v1443 = vpack.c.b16 %v1433, %v1432
      %v1444 = vpack.c.b16 %v1435, %v1434
      %v1445 = vpack.c.b16 %v1437, %v1436
      %1454 = vmatprep.subr.bf16.mxu0 0
      %1455 = vmatpush1.bf16.msra.mxu0 %v1438
      %1456 = vmatprep.subr.bf16.mxu0 0
      %1457 = vmatpush1.bf16.msra.mxu0 %v1439
      %1458 = vmatprep.subr.bf16.mxu0 0
      %1459 = vmatpush1.bf16.msra.mxu0 %v1440
      %1460 = vmatprep.subr.bf16.mxu0 0
      %1461 = vmatpush1.bf16.msra.mxu0 %v1441
      %1462 = vmatprep.subr.bf16.mxu0 0
      %1463 = vmatpush1.bf16.msra.mxu0 %v1442
      %1464 = vmatprep.subr.bf16.mxu0 0
      %1465 = vmatpush1.bf16.msra.mxu0 %v1443
      %1466 = vmatprep.subr.bf16.mxu0 0
      %1467 = vmatpush1.bf16.msra.mxu0 %v1444
      %1468 = vmatprep.subr.bf16.mxu0 0
      %1469 = vmatpush1.bf16.msra.mxu0 %v1445
      %1470 = vmatprep.subr.bf16.mxu0 0
      %1471 = vmatpush1.bf16.msra.mxu0 0
      %1472 = vmatprep.subr.bf16.mxu0 0
      %1473 = vmatpush1.bf16.msra.mxu0 0
      %1474 = vmatprep.subr.bf16.mxu0 0
      %1475 = vmatpush1.bf16.msra.mxu0 0
      %1476 = vmatprep.subr.bf16.mxu0 0
      %1477 = vmatpush1.bf16.msra.mxu0 0
      %1478 = vmatprep.subr.bf16.mxu0 0
      %1479 = vmatpush1.bf16.msra.mxu0 0
      %1480 = vmatprep.subr.bf16.mxu0 0
      %1481 = vmatpush1.bf16.msra.mxu0 0
      %1482 = vmatprep.subr.bf16.mxu0 0
      %1483 = vmatpush1.bf16.msra.mxu0 0
      %1484 = vmatprep.subr.bf16.mxu0 0
      %1485 = vmatpush1.bf16.msra.mxu0 0
      %1486 = vmatprep.mubr.bf16.mxu0 0
      %1487 = vmatmul.mubr.bf16.gmra.mrb[0].mxu0 %v1337
      %v1488 = vpop.f32.mrb[0].mxu0
      %v1489 = vadd.f32 %v1401, %v1488
      %v1490 = vpop.f32.mrb[0].mxu0
      %v1491 = vpop.f32.mrb[0].mxu0
      %v1492 = vpop.f32.mrb[0].mxu0
      %1493 = vdwg.mxu0
      %v1494 = vld [vmem:[%s21] sm:$0x1]
      %v1495 = vadd.f32 %v1489, %v1494
      %v1496 = vmax.f32 %v1495, 0.0
      %v1497 = vpack.c.bf16 %v1496, %v1496
      %v1498 = vld [vmem:[%s23] sm:$0xf]
      %v1499 = vld [vmem:[%s23 + $0x4] sm:$0xf]
      %v1500 = vld [vmem:[%s23 + $0x8] sm:$0xf]
      %v1501 = vld [vmem:[%s23 + $0xc] sm:$0xf]
      %v1502 = vld [vmem:[%s23 + $0x10] sm:$0xf]
      %v1503 = vld [vmem:[%s23 + $0x14] sm:$0xf]
      %v1504 = vld [vmem:[%s23 + $0x18] sm:$0xf]
      %v1505 = vld [vmem:[%s23 + $0x1c] sm:$0xf]
      %v1506 = vld [vmem:[%s25] sm:$0x1]
      %v1515 = vunpack.c.l.b16 %v1498
      %v1516 = vunpack.c.l.b16 %v1499
      %v1517 = vunpack.c.l.b16 %v1500
      %v1518 = vunpack.c.l.b16 %v1501
      %v1519 = vunpack.c.l.b16 %v1502
      %v1520 = vunpack.c.l.b16 %v1503
      %v1521 = vunpack.c.l.b16 %v1504
      %v1522 = vunpack.c.l.b16 %v1505
      %v1523 = vpack.c.b16 %v1516, %v1515
      %v1524 = vpack.c.b16 %v1518, %v1517
      %v1525 = vpack.c.b16 %v1520, %v1519
      %v1526 = vpack.c.b16 %v1522, %v1521
      %v1532 = vsel %vm1238, %v1497, 0
      %1534 = vmatprep.subr.bf16.mxu0 0
      %1535 = vmatpush1.bf16.msra.mxu0 %v1523
      %1536 = vmatprep.subr.bf16.mxu0 0
      %1537 = vmatpush1.bf16.msra.mxu0 %v1524
      %1538 = vmatprep.subr.bf16.mxu0 0
      %1539 = vmatpush1.bf16.msra.mxu0 %v1525
      %1540 = vmatprep.subr.bf16.mxu0 0
      %1541 = vmatpush1.bf16.msra.mxu0 %v1526
      %1542 = vmatprep.subr.bf16.mxu0 0
      %1543 = vmatpush1.bf16.msra.mxu0 0
      %1544 = vmatprep.subr.bf16.mxu0 0
      %1545 = vmatpush1.bf16.msra.mxu0 0
      %1546 = vmatprep.subr.bf16.mxu0 0
      %1547 = vmatpush1.bf16.msra.mxu0 0
      %1548 = vmatprep.subr.bf16.mxu0 0
      %1549 = vmatpush1.bf16.msra.mxu0 0
      %1550 = vmatprep.subr.bf16.mxu0 0
      %1551 = vmatpush1.bf16.msra.mxu0 0
      %1552 = vmatprep.subr.bf16.mxu0 0
      %1553 = vmatpush1.bf16.msra.mxu0 0
      %1554 = vmatprep.subr.bf16.mxu0 0
      %1555 = vmatpush1.bf16.msra.mxu0 0
      %1556 = vmatprep.subr.bf16.mxu0 0
      %1557 = vmatpush1.bf16.msra.mxu0 0
      %1558 = vmatprep.subr.bf16.mxu0 0
      %1559 = vmatpush1.bf16.msra.mxu0 0
      %1560 = vmatprep.subr.bf16.mxu0 0
      %1561 = vmatpush1.bf16.msra.mxu0 0
      %1562 = vmatprep.subr.bf16.mxu0 0
      %1563 = vmatpush1.bf16.msra.mxu0 0
      %1564 = vmatprep.subr.bf16.mxu0 0
      %1565 = vmatpush1.bf16.msra.mxu0 0
      %1566 = vmatprep.mubr.bf16.mxu0 0
      %1567 = vmatmul.mubr.bf16.gmra.mrb[0].mxu0 %v1532
      %v1568 = vpop.f32.mrb[0].mxu0
      %v1569 = vadd.f32 %v1506, %v1568
      %v1570 = vpop.f32.mrb[0].mxu0
      %v1571 = vpop.f32.mrb[0].mxu0
      %v1572 = vpop.f32.mrb[0].mxu0
      %1573 = vdwg.mxu0
      %1575 = vrot.lane.b32.xlu0 %v1569, 125
      %v1576 = vpop.permute.xlu0 %1575
      %v1578 = vadd.f32 %v1569, %v1576
      %v1579 = vmul.f32 %v1578, 0.5
      %v1580 = vlaneseq
      %v1581 = vshrl.u32 %v1580, 7
      %v1582 = vsub.s32 0, %v1581
      %v1583 = vrot.slane %v1579, %v1582
      %v1584 = vsub.f32 %v923, %v1583
      %v1585 = vsub.f32 %v924, %v1583
      %v1586 = vsub.f32 %v925, %v1583
      %v1587 = vsub.f32 %v926, %v1583
      %v1588 = vsub.f32 %v927, %v1583
      %v1589 = vsub.f32 %v928, %v1583
      %v1590 = vsub.f32 %v929, %v1583
      %v1591 = vsub.f32 %v930, %v1583
      %v1592 = vld [vmem:[%s27] sm:$0x7]
      %v1593 = vld [vmem:[%s29] sm:$0x1]
      %v1595 = vlaneseq
      %v1596 = vshrl.u32 %v1595, 7
      %v1597 = vsub.s32 0, %v1596
      %v1598 = vrot.slane %v1593, %v1597
      %v1601 = vsel %vm940, %v1584, 0
      %v1604 = vsel %vm940, %v1585, 0
      %v1607 = vsel %vm940, %v1586, 0
      %v1610 = vsel %vm940, %v1587, 0
      %v1613 = vsel %vm940, %v1588, 0
      %v1616 = vsel %vm940, %v1589, 0
      %v1619 = vsel %vm940, %v1590, 0
      %v1622 = vsel %vm940, %v1591, 0
      %v1625 = vsel %vm965, %v1592, 0
      %1627 = vmatprep.subr.mxu0 0.0
      %1628 = vmatpush1.msra.mxu0 %v1625
      %1629 = vmatprep.subr.mxu0 0.0
      %1630 = vmatpush1.msra.mxu0 0.0
      %1631 = vmatprep.subr.mxu0 0.0
      %1632 = vmatpush1.msra.mxu0 0.0
      %1633 = vmatprep.subr.mxu0 0.0
      %1634 = vmatpush1.msra.mxu0 0.0
      %1635 = vmatprep.subr.mxu0 0.0
      %1636 = vmatpush1.msra.mxu0 0.0
      %1637 = vmatprep.subr.mxu0 0.0
      %1638 = vmatpush1.msra.mxu0 0.0
      %1639 = vmatprep.subr.mxu0 0.0
      %1640 = vmatpush1.msra.mxu0 0.0
      %1641 = vmatprep.subr.mxu0 0.0
      %1642 = vmatpush1.msra.mxu0 0.0
      %1643 = vmatprep.subr.mxu0 0.0
      %1644 = vmatpush1.msra.mxu0 0.0
      %1645 = vmatprep.subr.mxu0 0.0
      %1646 = vmatpush1.msra.mxu0 0.0
      %1647 = vmatprep.subr.mxu0 0.0
      %1648 = vmatpush1.msra.mxu0 0.0
      %1649 = vmatprep.subr.mxu0 0.0
      %1650 = vmatpush1.msra.mxu0 0.0
      %1651 = vmatprep.subr.mxu0 0.0
      %1652 = vmatpush1.msra.mxu0 0.0
      %1653 = vmatprep.subr.mxu0 0.0
      %1654 = vmatpush1.msra.mxu0 0.0
      %1655 = vmatprep.subr.mxu0 0.0
      %1656 = vmatpush1.msra.mxu0 0.0
      %1657 = vmatprep.subr.mxu0 0.0
      %1658 = vmatpush1.msra.mxu0 0.0
      %1659 = vmatprep.subr.mxu0 0.0
      %1660 = vmatpush1.msra.mxu0 0.0
      %1661 = vmatprep.subr.mxu0 0.0
      %1662 = vmatpush1.msra.mxu0 0.0
      %1663 = vmatprep.subr.mxu0 0.0
      %1664 = vmatpush1.msra.mxu0 0.0
      %1665 = vmatprep.subr.mxu0 0.0
      %1666 = vmatpush1.msra.mxu0 0.0
      %1667 = vmatprep.subr.mxu0 0.0
      %1668 = vmatpush1.msra.mxu0 0.0
      %1669 = vmatprep.subr.mxu0 0.0
      %1670 = vmatpush1.msra.mxu0 0.0
      %1671 = vmatprep.subr.mxu0 0.0
      %1672 = vmatpush1.msra.mxu0 0.0
      %1673 = vmatprep.subr.mxu0 0.0
      %1674 = vmatpush1.msra.mxu0 0.0
      %1675 = vmatprep.subr.mxu0 0.0
      %1676 = vmatpush1.msra.mxu0 0.0
      %1677 = vmatprep.subr.mxu0 0.0
      %1678 = vmatpush1.msra.mxu0 0.0
      %1679 = vmatprep.subr.mxu0 0.0
      %1680 = vmatpush1.msra.mxu0 0.0
      %1681 = vmatprep.subr.mxu0 0.0
      %1682 = vmatpush1.msra.mxu0 0.0
      %1683 = vmatprep.subr.mxu0 0.0
      %1684 = vmatpush1.msra.mxu0 0.0
      %1685 = vmatprep.subr.mxu0 0.0
      %1686 = vmatpush1.msra.mxu0 0.0
      %1687 = vmatprep.subr.mxu0 0.0
      %1688 = vmatpush1.msra.mxu0 0.0
      %1689 = vmatprep.subr.mxu0 0.0
      %1690 = vmatpush1.msra.mxu0 0.0
      %1691 = vmatprep.mubr.f32.mxu0 0.0
      %1692 = vmatmul.mubr.f32.gmra.mrb[0].mxu0 %v1601
      %v1693 = vpop.f32.mrb[0].mxu0
      %v1694 = vadd.f32 %v1598, %v1693
      %v1695 = vpop.f32.mrb[0].mxu0
      %1696 = vmatprep.mubr.f32.mxu0 0.0
      %1697 = vmatmul.mubr.f32.gmra.mrb[0].mxu0 %v1604
      %v1698 = vpop.f32.mrb[0].mxu0
      %v1699 = vadd.f32 %v1598, %v1698
      %v1700 = vpop.f32.mrb[0].mxu0
      %1701 = vmatprep.mubr.f32.mxu0 0.0
      %1702 = vmatmul.mubr.f32.gmra.mrb[0].mxu0 %v1607
      %v1703 = vpop.f32.mrb[0].mxu0
      %v1704 = vadd.f32 %v1598, %v1703
      %v1705 = vpop.f32.mrb[0].mxu0
      %1706 = vmatprep.mubr.f32.mxu0 0.0
      %1707 = vmatmul.mubr.f32.gmra.mrb[0].mxu0 %v1610
      %v1708 = vpop.f32.mrb[0].mxu0
      %v1709 = vadd.f32 %v1598, %v1708
      %v1710 = vpop.f32.mrb[0].mxu0
      %1711 = vmatprep.mubr.f32.mxu0 0.0
      %1712 = vmatmul.mubr.f32.gmra.mrb[0].mxu0 %v1613
      %v1713 = vpop.f32.mrb[0].mxu0
      %v1714 = vadd.f32 %v1598, %v1713
      %v1715 = vpop.f32.mrb[0].mxu0
      %1716 = vmatprep.mubr.f32.mxu0 0.0
      %1717 = vmatmul.mubr.f32.gmra.mrb[0].mxu0 %v1616
      %v1718 = vpop.f32.mrb[0].mxu0
      %v1719 = vadd.f32 %v1598, %v1718
      %v1720 = vpop.f32.mrb[0].mxu0
      %1721 = vmatprep.mubr.f32.mxu0 0.0
      %1722 = vmatmul.mubr.f32.gmra.mrb[0].mxu0 %v1619
      %v1723 = vpop.f32.mrb[0].mxu0
      %v1724 = vadd.f32 %v1598, %v1723
      %v1725 = vpop.f32.mrb[0].mxu0
      %1726 = vmatprep.mubr.f32.mxu0 0.0
      %1727 = vmatmul.mubr.f32.gmra.mrb[0].mxu0 %v1622
      %v1728 = vpop.f32.mrb[0].mxu0
      %v1729 = vadd.f32 %v1598, %v1728
      %v1730 = vpop.f32.mrb[0].mxu0
      %1731 = vdwg.mxu0
      %v1732 = vmax.f32 %v1694, 0.0
      %v1733 = vmax.f32 %v1699, 0.0
      %v1734 = vmax.f32 %v1704, 0.0
      %v1735 = vmax.f32 %v1709, 0.0
      %v1736 = vmax.f32 %v1714, 0.0
      %v1737 = vmax.f32 %v1719, 0.0
      %v1738 = vmax.f32 %v1724, 0.0
      %v1739 = vmax.f32 %v1729, 0.0
      %v1740 = vpack.c.bf16 %v1733, %v1732
      %v1741 = vpack.c.bf16 %v1735, %v1734
      %v1742 = vpack.c.bf16 %v1737, %v1736
      %v1743 = vpack.c.bf16 %v1739, %v1738
      %v1744 = vld [vmem:[%s31] sm:$0xf]
      %v1745 = vld [vmem:[%s31 + $0x4] sm:$0xf]
      %v1746 = vld [vmem:[%s31 + $0x8] sm:$0xf]
      %v1747 = vld [vmem:[%s31 + $0xc] sm:$0xf]
      %v1748 = vld [vmem:[%s33] sm:$0x1]
      %v1750 = vlaneseq
      %v1751 = vshrl.u32 %v1750, 7
      %v1752 = vsub.s32 0, %v1751
      %v1753 = vrot.slane %v1748, %v1752
      %v1759 = vunpack.c.l.b16 %v1744
      %v1760 = vunpack.c.l.b16 %v1745
      %v1761 = vunpack.c.l.b16 %v1746
      %v1762 = vunpack.c.l.b16 %v1747
      %v1763 = vpack.c.b16 %v1760, %v1759
      %v1764 = vpack.c.b16 %v1762, %v1761
      %v1768 = vsel %vm1109, %v1740, 0
      %v1771 = vsel %vm1109, %v1741, 0
      %v1774 = vsel %vm1109, %v1742, 0
      %v1777 = vsel %vm1109, %v1743, 0
      %1779 = vmatprep.subr.bf16.mxu0 0
      %1780 = vmatpush1.bf16.msra.mxu0 %v1763
      %1781 = vmatprep.subr.bf16.mxu0 0
      %1782 = vmatpush1.bf16.msra.mxu0 %v1764
      %1783 = vmatprep.subr.bf16.mxu0 0
      %1784 = vmatpush1.bf16.msra.mxu0 0
      %1785 = vmatprep.subr.bf16.mxu0 0
      %1786 = vmatpush1.bf16.msra.mxu0 0
      %1787 = vmatprep.subr.bf16.mxu0 0
      %1788 = vmatpush1.bf16.msra.mxu0 0
      %1789 = vmatprep.subr.bf16.mxu0 0
      %1790 = vmatpush1.bf16.msra.mxu0 0
      %1791 = vmatprep.subr.bf16.mxu0 0
      %1792 = vmatpush1.bf16.msra.mxu0 0
      %1793 = vmatprep.subr.bf16.mxu0 0
      %1794 = vmatpush1.bf16.msra.mxu0 0
      %1795 = vmatprep.subr.bf16.mxu0 0
      %1796 = vmatpush1.bf16.msra.mxu0 0
      %1797 = vmatprep.subr.bf16.mxu0 0
      %1798 = vmatpush1.bf16.msra.mxu0 0
      %1799 = vmatprep.subr.bf16.mxu0 0
      %1800 = vmatpush1.bf16.msra.mxu0 0
      %1801 = vmatprep.subr.bf16.mxu0 0
      %1802 = vmatpush1.bf16.msra.mxu0 0
      %1803 = vmatprep.subr.bf16.mxu0 0
      %1804 = vmatpush1.bf16.msra.mxu0 0
      %1805 = vmatprep.subr.bf16.mxu0 0
      %1806 = vmatpush1.bf16.msra.mxu0 0
      %1807 = vmatprep.subr.bf16.mxu0 0
      %1808 = vmatpush1.bf16.msra.mxu0 0
      %1809 = vmatprep.subr.bf16.mxu0 0
      %1810 = vmatpush1.bf16.msra.mxu0 0
      %1811 = vmatprep.mubr.bf16.mxu0 0
      %1812 = vmatmul.mubr.bf16.gmra.mrb[0].mxu0 %v1768
      %v1813 = vpop.f32.mrb[0].mxu0
      %v1814 = vadd.f32 %v1753, %v1813
      %v1815 = vpop.f32.mrb[0].mxu0
      %v1816 = vpop.f32.mrb[0].mxu0
      %v1817 = vadd.f32 %v1753, %v1816
      %v1818 = vpop.f32.mrb[0].mxu0
      %1819 = vmatprep.mubr.bf16.mxu0 0
      %1820 = vmatmul.mubr.bf16.gmra.mrb[0].mxu0 %v1771
      %v1821 = vpop.f32.mrb[0].mxu0
      %v1822 = vadd.f32 %v1753, %v1821
      %v1823 = vpop.f32.mrb[0].mxu0
      %v1824 = vpop.f32.mrb[0].mxu0
      %v1825 = vadd.f32 %v1753, %v1824
      %v1826 = vpop.f32.mrb[0].mxu0
      %1827 = vmatprep.mubr.bf16.mxu0 0
      %1828 = vmatmul.mubr.bf16.gmra.mrb[0].mxu0 %v1774
      %v1829 = vpop.f32.mrb[0].mxu0
      %v1830 = vadd.f32 %v1753, %v1829
      %v1831 = vpop.f32.mrb[0].mxu0
      %v1832 = vpop.f32.mrb[0].mxu0
      %v1833 = vadd.f32 %v1753, %v1832
      %v1834 = vpop.f32.mrb[0].mxu0
      %1835 = vmatprep.mubr.bf16.mxu0 0
      %1836 = vmatmul.mubr.bf16.gmra.mrb[0].mxu0 %v1777
      %v1837 = vpop.f32.mrb[0].mxu0
      %v1838 = vadd.f32 %v1753, %v1837
      %v1839 = vpop.f32.mrb[0].mxu0
      %v1840 = vpop.f32.mrb[0].mxu0
      %v1841 = vadd.f32 %v1753, %v1840
      %v1842 = vpop.f32.mrb[0].mxu0
      %1843 = vdwg.mxu0
      %v1844 = vmax.f32 %v1814, 0.0
      %v1845 = vmax.f32 %v1817, 0.0
      %v1846 = vmax.f32 %v1822, 0.0
      %v1847 = vmax.f32 %v1825, 0.0
      %v1848 = vmax.f32 %v1830, 0.0
      %v1849 = vmax.f32 %v1833, 0.0
      %v1850 = vmax.f32 %v1838, 0.0
      %v1851 = vmax.f32 %v1841, 0.0
      %v1852 = vpack.c.bf16 %v1845, %v1844
      %v1853 = vpack.c.bf16 %v1847, %v1846
      %v1854 = vpack.c.bf16 %v1849, %v1848
      %v1855 = vpack.c.bf16 %v1851, %v1850
      %v1856 = vld [vmem:[%s35] sm:$0xf]
      %v1857 = vld [vmem:[%s35 + $0x4] sm:$0xf]
      %v1858 = vld [vmem:[%s35 + $0x8] sm:$0xf]
      %v1859 = vld [vmem:[%s35 + $0xc] sm:$0xf]
      %v1860 = vld [vmem:[%s35 + $0x10] sm:$0xf]
      %v1861 = vld [vmem:[%s35 + $0x14] sm:$0xf]
      %v1862 = vld [vmem:[%s35 + $0x18] sm:$0xf]
      %v1863 = vld [vmem:[%s35 + $0x1c] sm:$0xf]
      %v1864 = vld [vmem:[%s37] sm:$0x1]
      %v1866 = vlaneseq
      %v1867 = vshrl.u32 %v1866, 7
      %v1868 = vsub.s32 0, %v1867
      %v1869 = vrot.slane %v1864, %v1868
      %v1879 = vunpack.c.l.b16 %v1856
      %v1880 = vunpack.c.l.b16 %v1857
      %v1881 = vunpack.c.l.b16 %v1858
      %v1882 = vunpack.c.l.b16 %v1859
      %v1883 = vunpack.c.l.b16 %v1860
      %v1884 = vunpack.c.l.b16 %v1861
      %v1885 = vunpack.c.l.b16 %v1862
      %v1886 = vunpack.c.l.b16 %v1863
      %v1887 = vpack.c.b16 %v1880, %v1879
      %v1888 = vpack.c.b16 %v1882, %v1881
      %v1889 = vpack.c.b16 %v1884, %v1883
      %v1890 = vpack.c.b16 %v1886, %v1885
      %v1896 = vsel %vm1238, %v1852, 0
      %v1899 = vsel %vm1238, %v1853, 0
      %v1902 = vsel %vm1238, %v1854, 0
      %v1905 = vsel %vm1238, %v1855, 0
      %1907 = vmatprep.subr.bf16.mxu0 0
      %1908 = vmatpush1.bf16.msra.mxu0 %v1887
      %1909 = vmatprep.subr.bf16.mxu0 0
      %1910 = vmatpush1.bf16.msra.mxu0 %v1888
      %1911 = vmatprep.subr.bf16.mxu0 0
      %1912 = vmatpush1.bf16.msra.mxu0 %v1889
      %1913 = vmatprep.subr.bf16.mxu0 0
      %1914 = vmatpush1.bf16.msra.mxu0 %v1890
      %1915 = vmatprep.subr.bf16.mxu0 0
      %1916 = vmatpush1.bf16.msra.mxu0 0
      %1917 = vmatprep.subr.bf16.mxu0 0
      %1918 = vmatpush1.bf16.msra.mxu0 0
      %1919 = vmatprep.subr.bf16.mxu0 0
      %1920 = vmatpush1.bf16.msra.mxu0 0
      %1921 = vmatprep.subr.bf16.mxu0 0
      %1922 = vmatpush1.bf16.msra.mxu0 0
      %1923 = vmatprep.subr.bf16.mxu0 0
      %1924 = vmatpush1.bf16.msra.mxu0 0
      %1925 = vmatprep.subr.bf16.mxu0 0
      %1926 = vmatpush1.bf16.msra.mxu0 0
      %1927 = vmatprep.subr.bf16.mxu0 0
      %1928 = vmatpush1.bf16.msra.mxu0 0
      %1929 = vmatprep.subr.bf16.mxu0 0
      %1930 = vmatpush1.bf16.msra.mxu0 0
      %1931 = vmatprep.subr.bf16.mxu0 0
      %1932 = vmatpush1.bf16.msra.mxu0 0
      %1933 = vmatprep.subr.bf16.mxu0 0
      %1934 = vmatpush1.bf16.msra.mxu0 0
      %1935 = vmatprep.subr.bf16.mxu0 0
      %1936 = vmatpush1.bf16.msra.mxu0 0
      %1937 = vmatprep.subr.bf16.mxu0 0
      %1938 = vmatpush1.bf16.msra.mxu0 0
      %1939 = vmatprep.mubr.bf16.mxu0 0
      %1940 = vmatmul.mubr.bf16.gmra.mrb[0].mxu0 %v1896
      %v1941 = vpop.f32.mrb[0].mxu0
      %v1942 = vadd.f32 %v1869, %v1941
      %v1943 = vpop.f32.mrb[0].mxu0
      %v1944 = vpop.f32.mrb[0].mxu0
      %v1945 = vadd.f32 %v1869, %v1944
      %v1946 = vpop.f32.mrb[0].mxu0
      %1947 = vmatprep.mubr.bf16.mxu0 0
      %1948 = vmatmul.mubr.bf16.gmra.mrb[0].mxu0 %v1899
      %v1949 = vpop.f32.mrb[0].mxu0
      %v1950 = vadd.f32 %v1869, %v1949
      %v1951 = vpop.f32.mrb[0].mxu0
      %v1952 = vpop.f32.mrb[0].mxu0
      %v1953 = vadd.f32 %v1869, %v1952
      %v1954 = vpop.f32.mrb[0].mxu0
      %1955 = vmatprep.mubr.bf16.mxu0 0
      %1956 = vmatmul.mubr.bf16.gmra.mrb[0].mxu0 %v1902
      %v1957 = vpop.f32.mrb[0].mxu0
      %v1958 = vadd.f32 %v1869, %v1957
      %v1959 = vpop.f32.mrb[0].mxu0
      %v1960 = vpop.f32.mrb[0].mxu0
      %v1961 = vadd.f32 %v1869, %v1960
      %v1962 = vpop.f32.mrb[0].mxu0
      %1963 = vmatprep.mubr.bf16.mxu0 0
      %1964 = vmatmul.mubr.bf16.gmra.mrb[0].mxu0 %v1905
      %v1965 = vpop.f32.mrb[0].mxu0
      %v1966 = vadd.f32 %v1869, %v1965
      %v1967 = vpop.f32.mrb[0].mxu0
      %v1968 = vpop.f32.mrb[0].mxu0
      %v1969 = vadd.f32 %v1869, %v1968
      %v1970 = vpop.f32.mrb[0].mxu0
      %1971 = vdwg.mxu0
      %v1972 = vmax.f32 %v1942, 0.0
      %v1973 = vmax.f32 %v1945, 0.0
      %v1974 = vmax.f32 %v1950, 0.0
      %v1975 = vmax.f32 %v1953, 0.0
      %v1976 = vmax.f32 %v1958, 0.0
      %v1977 = vmax.f32 %v1961, 0.0
      %v1978 = vmax.f32 %v1966, 0.0
      %v1979 = vmax.f32 %v1969, 0.0
      %v1980 = vpack.c.bf16 %v1973, %v1972
      %v1981 = vpack.c.bf16 %v1975, %v1974
      %v1982 = vpack.c.bf16 %v1977, %v1976
      %v1983 = vpack.c.bf16 %v1979, %v1978
      %v1984 = vld [vmem:[%s39] sm:$0xf]
      %v1985 = vld [vmem:[%s39 + $0x4] sm:$0xf]
      %v1986 = vld [vmem:[%s39 + $0x8] sm:$0xf]
      %v1987 = vld [vmem:[%s39 + $0xc] sm:$0xf]
      %v1988 = vld [vmem:[%s39 + $0x10] sm:$0xf]
      %v1989 = vld [vmem:[%s39 + $0x14] sm:$0xf]
      %v1990 = vld [vmem:[%s39 + $0x18] sm:$0xf]
      %v1991 = vld [vmem:[%s39 + $0x1c] sm:$0xf]
      %v1992 = vld [vmem:[%s39 + $0x20] sm:$0xf]
      %v1993 = vld [vmem:[%s39 + $0x24] sm:$0xf]
      %v1994 = vld [vmem:[%s39 + $0x28] sm:$0xf]
      %v1995 = vld [vmem:[%s39 + $0x2c] sm:$0xf]
      %v1996 = vld [vmem:[%s39 + $0x30] sm:$0xf]
      %v1997 = vld [vmem:[%s39 + $0x34] sm:$0xf]
      %v1998 = vld [vmem:[%s39 + $0x38] sm:$0xf]
      %v1999 = vld [vmem:[%s39 + $0x3c] sm:$0xf]
      %v2000 = vld [vmem:[%s41] sm:$0x1]
      %v2002 = vlaneseq
      %v2003 = vshrl.u32 %v2002, 7
      %v2004 = vsub.s32 0, %v2003
      %v2005 = vrot.slane %v2000, %v2004
      %v2023 = vunpack.c.l.b16 %v1984
      %v2024 = vunpack.c.l.b16 %v1985
      %v2025 = vunpack.c.l.b16 %v1986
      %v2026 = vunpack.c.l.b16 %v1987
      %v2027 = vunpack.c.l.b16 %v1988
      %v2028 = vunpack.c.l.b16 %v1989
      %v2029 = vunpack.c.l.b16 %v1990
      %v2030 = vunpack.c.l.b16 %v1991
      %v2031 = vunpack.c.l.b16 %v1992
      %v2032 = vunpack.c.l.b16 %v1993
      %v2033 = vunpack.c.l.b16 %v1994
      %v2034 = vunpack.c.l.b16 %v1995
      %v2035 = vunpack.c.l.b16 %v1996
      %v2036 = vunpack.c.l.b16 %v1997
      %v2037 = vunpack.c.l.b16 %v1998
      %v2038 = vunpack.c.l.b16 %v1999
      %v2039 = vpack.c.b16 %v2024, %v2023
      %v2040 = vpack.c.b16 %v2026, %v2025
      %v2041 = vpack.c.b16 %v2028, %v2027
      %v2042 = vpack.c.b16 %v2030, %v2029
      %v2043 = vpack.c.b16 %v2032, %v2031
      %v2044 = vpack.c.b16 %v2034, %v2033
      %v2045 = vpack.c.b16 %v2036, %v2035
      %v2046 = vpack.c.b16 %v2038, %v2037
      %2055 = vmatprep.subr.bf16.mxu0 0
      %2056 = vmatpush1.bf16.msra.mxu0 %v2039
      %2057 = vmatprep.subr.bf16.mxu0 0
      %2058 = vmatpush1.bf16.msra.mxu0 %v2040
      %2059 = vmatprep.subr.bf16.mxu0 0
      %2060 = vmatpush1.bf16.msra.mxu0 %v2041
      %2061 = vmatprep.subr.bf16.mxu0 0
      %2062 = vmatpush1.bf16.msra.mxu0 %v2042
      %2063 = vmatprep.subr.bf16.mxu0 0
      %2064 = vmatpush1.bf16.msra.mxu0 %v2043
      %2065 = vmatprep.subr.bf16.mxu0 0
      %2066 = vmatpush1.bf16.msra.mxu0 %v2044
      %2067 = vmatprep.subr.bf16.mxu0 0
      %2068 = vmatpush1.bf16.msra.mxu0 %v2045
      %2069 = vmatprep.subr.bf16.mxu0 0
      %2070 = vmatpush1.bf16.msra.mxu0 %v2046
      %2071 = vmatprep.subr.bf16.mxu0 0
      %2072 = vmatpush1.bf16.msra.mxu0 0
      %2073 = vmatprep.subr.bf16.mxu0 0
      %2074 = vmatpush1.bf16.msra.mxu0 0
      %2075 = vmatprep.subr.bf16.mxu0 0
      %2076 = vmatpush1.bf16.msra.mxu0 0
      %2077 = vmatprep.subr.bf16.mxu0 0
      %2078 = vmatpush1.bf16.msra.mxu0 0
      %2079 = vmatprep.subr.bf16.mxu0 0
      %2080 = vmatpush1.bf16.msra.mxu0 0
      %2081 = vmatprep.subr.bf16.mxu0 0
      %2082 = vmatpush1.bf16.msra.mxu0 0
      %2083 = vmatprep.subr.bf16.mxu0 0
      %2084 = vmatpush1.bf16.msra.mxu0 0
      %2085 = vmatprep.subr.bf16.mxu0 0
      %2086 = vmatpush1.bf16.msra.mxu0 0
      %2087 = vmatprep.mubr.bf16.mxu0 0
      %2088 = vmatmul.mubr.bf16.gmra.mrb[0].mxu0 %v1980
      %v2089 = vpop.f32.mrb[0].mxu0
      %v2090 = vadd.f32 %v2005, %v2089
      %v2091 = vpop.f32.mrb[0].mxu0
      %v2092 = vpop.f32.mrb[0].mxu0
      %v2093 = vadd.f32 %v2005, %v2092
      %v2094 = vpop.f32.mrb[0].mxu0
      %2095 = vmatprep.mubr.bf16.mxu0 0
      %2096 = vmatmul.mubr.bf16.gmra.mrb[0].mxu0 %v1981
      %v2097 = vpop.f32.mrb[0].mxu0
      %v2098 = vadd.f32 %v2005, %v2097
      %v2099 = vpop.f32.mrb[0].mxu0
      %v2100 = vpop.f32.mrb[0].mxu0
      %v2101 = vadd.f32 %v2005, %v2100
      %v2102 = vpop.f32.mrb[0].mxu0
      %2103 = vmatprep.mubr.bf16.mxu0 0
      %2104 = vmatmul.mubr.bf16.gmra.mrb[0].mxu0 %v1982
      %v2105 = vpop.f32.mrb[0].mxu0
      %v2106 = vadd.f32 %v2005, %v2105
      %v2107 = vpop.f32.mrb[0].mxu0
      %v2108 = vpop.f32.mrb[0].mxu0
      %v2109 = vadd.f32 %v2005, %v2108
      %v2110 = vpop.f32.mrb[0].mxu0
      %2111 = vmatprep.mubr.bf16.mxu0 0
      %2112 = vmatmul.mubr.bf16.gmra.mrb[0].mxu0 %v1983
      %v2113 = vpop.f32.mrb[0].mxu0
      %v2114 = vadd.f32 %v2005, %v2113
      %v2115 = vpop.f32.mrb[0].mxu0
      %v2116 = vpop.f32.mrb[0].mxu0
      %v2117 = vadd.f32 %v2005, %v2116
      %v2118 = vpop.f32.mrb[0].mxu0
      %2119 = vdwg.mxu0
      %v2120 = vmax.f32 %v2090, 0.0
      %v2121 = vmax.f32 %v2093, 0.0
      %v2122 = vmax.f32 %v2098, 0.0
      %v2123 = vmax.f32 %v2101, 0.0
      %v2124 = vmax.f32 %v2106, 0.0
      %v2125 = vmax.f32 %v2109, 0.0
      %v2126 = vmax.f32 %v2114, 0.0
      %v2127 = vmax.f32 %v2117, 0.0
      %v2128 = vmax.f32 %v2120, %v2124
      %v2129 = vmax.f32 %v2121, %v2125
      %v2130 = vmax.f32 %v2122, %v2126
      %v2131 = vmax.f32 %v2123, %v2127
      %v2132 = vmax.f32 %v2128, %v2129
      %v2133 = vmax.f32 %v2130, %v2131
      %v2134 = vmax.f32 %v2132, %v2133
      %v2135 = vrot.slane %v2134, 4
      %v2136 = vmax.f32 %v2134, %v2135
      %v2137 = vrot.slane %v2136, 2
      %v2138 = vmax.f32 %v2136, %v2137
      %v2139 = vrot.slane %v2138, 1
      %v2140 = vmax.f32 %v2138, %v2139
      %v2141 = vpack.c.bf16 %v2140, %v2140
      %v2142 = vld [vmem:[%s43] sm:$0xf]
      %v2143 = vld [vmem:[%s43 + $0x4] sm:$0xf]
      %v2144 = vld [vmem:[%s43 + $0x8] sm:$0xf]
      %v2145 = vld [vmem:[%s43 + $0xc] sm:$0xf]
      %v2146 = vld [vmem:[%s43 + $0x10] sm:$0xf]
      %v2147 = vld [vmem:[%s43 + $0x14] sm:$0xf]
      %v2148 = vld [vmem:[%s43 + $0x18] sm:$0xf]
      %v2149 = vld [vmem:[%s43 + $0x1c] sm:$0xf]
      %v2150 = vld [vmem:[%s43 + $0x20] sm:$0xf]
      %v2151 = vld [vmem:[%s43 + $0x24] sm:$0xf]
      %v2152 = vld [vmem:[%s43 + $0x28] sm:$0xf]
      %v2153 = vld [vmem:[%s43 + $0x2c] sm:$0xf]
      %v2154 = vld [vmem:[%s43 + $0x30] sm:$0xf]
      %v2155 = vld [vmem:[%s43 + $0x34] sm:$0xf]
      %v2156 = vld [vmem:[%s43 + $0x38] sm:$0xf]
      %v2157 = vld [vmem:[%s43 + $0x3c] sm:$0xf]
      %v2158 = vld [vmem:[%s45] sm:$0x3]
      %v2160 = vand.u32 %v2158, %v1362
      %2162 = vmatprep.subr.bf16.mxu0 0
      %2163 = vmatpush1.bf16.msra.mxu0 %v2160
      %2164 = vmatprep.subr.bf16.mxu0 0
      %2165 = vmatpush1.bf16.msra.mxu0 0
      %2166 = vmatprep.subr.bf16.mxu0 0
      %2167 = vmatpush1.bf16.msra.mxu0 0
      %2168 = vmatprep.subr.bf16.mxu0 0
      %2169 = vmatpush1.bf16.msra.mxu0 0
      %2170 = vmatprep.subr.bf16.mxu0 0
      %2171 = vmatpush1.bf16.msra.mxu0 0
      %2172 = vmatprep.subr.bf16.mxu0 0
      %2173 = vmatpush1.bf16.msra.mxu0 0
      %2174 = vmatprep.subr.bf16.mxu0 0
      %2175 = vmatpush1.bf16.msra.mxu0 0
      %2176 = vmatprep.subr.bf16.mxu0 0
      %2177 = vmatpush1.bf16.msra.mxu0 0
      %2178 = vmatprep.subr.bf16.mxu0 0
      %2179 = vmatpush1.bf16.msra.mxu0 0
      %2180 = vmatprep.subr.bf16.mxu0 0
      %2181 = vmatpush1.bf16.msra.mxu0 0
      %2182 = vmatprep.subr.bf16.mxu0 0
      %2183 = vmatpush1.bf16.msra.mxu0 0
      %2184 = vmatprep.subr.bf16.mxu0 0
      %2185 = vmatpush1.bf16.msra.mxu0 0
      %2186 = vmatprep.subr.bf16.mxu0 0
      %2187 = vmatpush1.bf16.msra.mxu0 0
      %2188 = vmatprep.subr.bf16.mxu0 0
      %2189 = vmatpush1.bf16.msra.mxu0 0
      %2190 = vmatprep.subr.bf16.mxu0 0
      %2191 = vmatpush1.bf16.msra.mxu0 0
      %2192 = vmatprep.subr.bf16.mxu0 0
      %2193 = vmatpush1.bf16.msra.mxu0 0
      %2194 = vmatprep.mubr.bf16.mxu0 0
      %2195 = vmatmul.mubr.bf16.gmra.mrb[0].mxu0 %v1357
      %v2196 = vpop.f32.mrb[0].mxu0
      %v2197 = vadd.f32 0.0, %v2196
      %v2198 = vpop.f32.mrb[0].mxu0
      %v2199 = vpop.f32.mrb[0].mxu0
      %v2200 = vpop.f32.mrb[0].mxu0
      %2201 = vdwg.mxu0
      %v2218 = vunpack.c.l.b16 %v2142
      %v2219 = vunpack.c.l.b16 %v2143
      %v2220 = vunpack.c.l.b16 %v2144
      %v2221 = vunpack.c.l.b16 %v2145
      %v2222 = vunpack.c.l.b16 %v2146
      %v2223 = vunpack.c.l.b16 %v2147
      %v2224 = vunpack.c.l.b16 %v2148
      %v2225 = vunpack.c.l.b16 %v2149
      %v2226 = vunpack.c.l.b16 %v2150
      %v2227 = vunpack.c.l.b16 %v2151
      %v2228 = vunpack.c.l.b16 %v2152
      %v2229 = vunpack.c.l.b16 %v2153
      %v2230 = vunpack.c.l.b16 %v2154
      %v2231 = vunpack.c.l.b16 %v2155
      %v2232 = vunpack.c.l.b16 %v2156
      %v2233 = vunpack.c.l.b16 %v2157
      %v2234 = vpack.c.b16 %v2219, %v2218
      %v2235 = vpack.c.b16 %v2221, %v2220
      %v2236 = vpack.c.b16 %v2223, %v2222
      %v2237 = vpack.c.b16 %v2225, %v2224
      %v2238 = vpack.c.b16 %v2227, %v2226
      %v2239 = vpack.c.b16 %v2229, %v2228
      %v2240 = vpack.c.b16 %v2231, %v2230
      %v2241 = vpack.c.b16 %v2233, %v2232
      %2250 = vmatprep.subr.bf16.mxu0 0
      %2251 = vmatpush1.bf16.msra.mxu0 %v2234
      %2252 = vmatprep.subr.bf16.mxu0 0
      %2253 = vmatpush1.bf16.msra.mxu0 %v2235
      %2254 = vmatprep.subr.bf16.mxu0 0
      %2255 = vmatpush1.bf16.msra.mxu0 %v2236
      %2256 = vmatprep.subr.bf16.mxu0 0
      %2257 = vmatpush1.bf16.msra.mxu0 %v2237
      %2258 = vmatprep.subr.bf16.mxu0 0
      %2259 = vmatpush1.bf16.msra.mxu0 %v2238
      %2260 = vmatprep.subr.bf16.mxu0 0
      %2261 = vmatpush1.bf16.msra.mxu0 %v2239
      %2262 = vmatprep.subr.bf16.mxu0 0
      %2263 = vmatpush1.bf16.msra.mxu0 %v2240
      %2264 = vmatprep.subr.bf16.mxu0 0
      %2265 = vmatpush1.bf16.msra.mxu0 %v2241
      %2266 = vmatprep.subr.bf16.mxu0 0
      %2267 = vmatpush1.bf16.msra.mxu0 0
      %2268 = vmatprep.subr.bf16.mxu0 0
      %2269 = vmatpush1.bf16.msra.mxu0 0
      %2270 = vmatprep.subr.bf16.mxu0 0
      %2271 = vmatpush1.bf16.msra.mxu0 0
      %2272 = vmatprep.subr.bf16.mxu0 0
      %2273 = vmatpush1.bf16.msra.mxu0 0
      %2274 = vmatprep.subr.bf16.mxu0 0
      %2275 = vmatpush1.bf16.msra.mxu0 0
      %2276 = vmatprep.subr.bf16.mxu0 0
      %2277 = vmatpush1.bf16.msra.mxu0 0
      %2278 = vmatprep.subr.bf16.mxu0 0
      %2279 = vmatpush1.bf16.msra.mxu0 0
      %2280 = vmatprep.subr.bf16.mxu0 0
      %2281 = vmatpush1.bf16.msra.mxu0 0
      %2282 = vmatprep.mubr.bf16.mxu0 0
      %2283 = vmatmul.mubr.bf16.gmra.mrb[0].mxu0 %v2141
      %v2284 = vpop.f32.mrb[0].mxu0
      %v2285 = vadd.f32 %v2197, %v2284
      %v2286 = vpop.f32.mrb[0].mxu0
      %v2287 = vpop.f32.mrb[0].mxu0
      %v2288 = vpop.f32.mrb[0].mxu0
      %2289 = vdwg.mxu0
      %v2290 = vld [vmem:[%s47] sm:$0x1]
      %v2291 = vadd.f32 %v2285, %v2290
      %v2292 = vmax.f32 %v2291, 0.0
      %v2293 = vpack.c.bf16 %v2292, %v2292
      %v2294 = vld [vmem:[%s49] sm:$0xf]
      %v2295 = vld [vmem:[%s49 + $0x4] sm:$0xf]
      %v2296 = vld [vmem:[%s49 + $0x8] sm:$0xf]
      %v2297 = vld [vmem:[%s49 + $0xc] sm:$0xf]
      %v2298 = vld [vmem:[%s49 + $0x10] sm:$0xf]
      %v2299 = vld [vmem:[%s49 + $0x14] sm:$0xf]
      %v2300 = vld [vmem:[%s49 + $0x18] sm:$0xf]
      %v2301 = vld [vmem:[%s49 + $0x1c] sm:$0xf]
      %v2302 = vld [vmem:[%s49 + $0x20] sm:$0xf]
      %v2303 = vld [vmem:[%s49 + $0x24] sm:$0xf]
      %v2304 = vld [vmem:[%s49 + $0x28] sm:$0xf]
      %v2305 = vld [vmem:[%s49 + $0x2c] sm:$0xf]
      %v2306 = vld [vmem:[%s49 + $0x30] sm:$0xf]
      %v2307 = vld [vmem:[%s49 + $0x34] sm:$0xf]
      %v2308 = vld [vmem:[%s49 + $0x38] sm:$0xf]
      %v2309 = vld [vmem:[%s49 + $0x3c] sm:$0xf]
      %v2310 = vld [vmem:[%s51] sm:$0x1]
      %v2327 = vunpack.c.l.b16 %v2294
      %v2328 = vunpack.c.l.b16 %v2295
      %v2329 = vunpack.c.l.b16 %v2296
      %v2330 = vunpack.c.l.b16 %v2297
      %v2331 = vunpack.c.l.b16 %v2298
      %v2332 = vunpack.c.l.b16 %v2299
      %v2333 = vunpack.c.l.b16 %v2300
      %v2334 = vunpack.c.l.b16 %v2301
      %v2335 = vunpack.c.l.b16 %v2302
      %v2336 = vunpack.c.l.b16 %v2303
      %v2337 = vunpack.c.l.b16 %v2304
      %v2338 = vunpack.c.l.b16 %v2305
      %v2339 = vunpack.c.l.b16 %v2306
      %v2340 = vunpack.c.l.b16 %v2307
      %v2341 = vunpack.c.l.b16 %v2308
      %v2342 = vunpack.c.l.b16 %v2309
      %v2343 = vpack.c.b16 %v2328, %v2327
      %v2344 = vpack.c.b16 %v2330, %v2329
      %v2345 = vpack.c.b16 %v2332, %v2331
      %v2346 = vpack.c.b16 %v2334, %v2333
      %v2347 = vpack.c.b16 %v2336, %v2335
      %v2348 = vpack.c.b16 %v2338, %v2337
      %v2349 = vpack.c.b16 %v2340, %v2339
      %v2350 = vpack.c.b16 %v2342, %v2341
      %2359 = vmatprep.subr.bf16.mxu0 0
      %2360 = vmatpush1.bf16.msra.mxu0 %v2343
      %2361 = vmatprep.subr.bf16.mxu0 0
      %2362 = vmatpush1.bf16.msra.mxu0 %v2344
      %2363 = vmatprep.subr.bf16.mxu0 0
      %2364 = vmatpush1.bf16.msra.mxu0 %v2345
      %2365 = vmatprep.subr.bf16.mxu0 0
      %2366 = vmatpush1.bf16.msra.mxu0 %v2346
      %2367 = vmatprep.subr.bf16.mxu0 0
      %2368 = vmatpush1.bf16.msra.mxu0 %v2347
      %2369 = vmatprep.subr.bf16.mxu0 0
      %2370 = vmatpush1.bf16.msra.mxu0 %v2348
      %2371 = vmatprep.subr.bf16.mxu0 0
      %2372 = vmatpush1.bf16.msra.mxu0 %v2349
      %2373 = vmatprep.subr.bf16.mxu0 0
      %2374 = vmatpush1.bf16.msra.mxu0 %v2350
      %2375 = vmatprep.subr.bf16.mxu0 0
      %2376 = vmatpush1.bf16.msra.mxu0 0
      %2377 = vmatprep.subr.bf16.mxu0 0
      %2378 = vmatpush1.bf16.msra.mxu0 0
      %2379 = vmatprep.subr.bf16.mxu0 0
      %2380 = vmatpush1.bf16.msra.mxu0 0
      %2381 = vmatprep.subr.bf16.mxu0 0
      %2382 = vmatpush1.bf16.msra.mxu0 0
      %2383 = vmatprep.subr.bf16.mxu0 0
      %2384 = vmatpush1.bf16.msra.mxu0 0
      %2385 = vmatprep.subr.bf16.mxu0 0
      %2386 = vmatpush1.bf16.msra.mxu0 0
      %2387 = vmatprep.subr.bf16.mxu0 0
      %2388 = vmatpush1.bf16.msra.mxu0 0
      %2389 = vmatprep.subr.bf16.mxu0 0
      %2390 = vmatpush1.bf16.msra.mxu0 0
      %2391 = vmatprep.mubr.bf16.mxu0 0
      %2392 = vmatmul.mubr.bf16.gmra.mrb[0].mxu0 %v2293
      %v2393 = vpop.f32.mrb[0].mxu0
      %v2394 = vadd.f32 %v2310, %v2393
      %v2395 = vpop.f32.mrb[0].mxu0
      %v2396 = vpop.f32.mrb[0].mxu0
      %v2397 = vpop.f32.mrb[0].mxu0
      %2398 = vdwg.mxu0
      %v2399 = vmax.f32 %v2394, 0.0
      %v2400 = vpack.c.bf16 %v2399, %v2399
      %v2401 = vld [vmem:[%s53] sm:$0xf]
      %v2402 = vld [vmem:[%s53 + $0x4] sm:$0xf]
      %v2403 = vld [vmem:[%s53 + $0x8] sm:$0xf]
      %v2404 = vld [vmem:[%s53 + $0xc] sm:$0xf]
      %v2405 = vld [vmem:[%s53 + $0x10] sm:$0xf]
      %v2406 = vld [vmem:[%s53 + $0x14] sm:$0xf]
      %v2407 = vld [vmem:[%s53 + $0x18] sm:$0xf]
      %v2408 = vld [vmem:[%s53 + $0x1c] sm:$0xf]
      %v2409 = vld [vmem:[%s55] sm:$0x1]
      %v2418 = vunpack.c.l.b16 %v2401
      %v2419 = vunpack.c.l.b16 %v2402
      %v2420 = vunpack.c.l.b16 %v2403
      %v2421 = vunpack.c.l.b16 %v2404
      %v2422 = vunpack.c.l.b16 %v2405
      %v2423 = vunpack.c.l.b16 %v2406
      %v2424 = vunpack.c.l.b16 %v2407
      %v2425 = vunpack.c.l.b16 %v2408
      %v2426 = vpack.c.b16 %v2419, %v2418
      %v2427 = vpack.c.b16 %v2421, %v2420
      %v2428 = vpack.c.b16 %v2423, %v2422
      %v2429 = vpack.c.b16 %v2425, %v2424
      %v2435 = vsel %vm1238, %v2400, 0
      %2437 = vmatprep.subr.bf16.mxu0 0
      %2438 = vmatpush1.bf16.msra.mxu0 %v2426
      %2439 = vmatprep.subr.bf16.mxu0 0
      %2440 = vmatpush1.bf16.msra.mxu0 %v2427
      %2441 = vmatprep.subr.bf16.mxu0 0
      %2442 = vmatpush1.bf16.msra.mxu0 %v2428
      %2443 = vmatprep.subr.bf16.mxu0 0
      %2444 = vmatpush1.bf16.msra.mxu0 %v2429
      %2445 = vmatprep.subr.bf16.mxu0 0
      %2446 = vmatpush1.bf16.msra.mxu0 0
      %2447 = vmatprep.subr.bf16.mxu0 0
      %2448 = vmatpush1.bf16.msra.mxu0 0
      %2449 = vmatprep.subr.bf16.mxu0 0
      %2450 = vmatpush1.bf16.msra.mxu0 0
      %2451 = vmatprep.subr.bf16.mxu0 0
      %2452 = vmatpush1.bf16.msra.mxu0 0
      %2453 = vmatprep.subr.bf16.mxu0 0
      %2454 = vmatpush1.bf16.msra.mxu0 0
      %2455 = vmatprep.subr.bf16.mxu0 0
      %2456 = vmatpush1.bf16.msra.mxu0 0
      %2457 = vmatprep.subr.bf16.mxu0 0
      %2458 = vmatpush1.bf16.msra.mxu0 0
      %2459 = vmatprep.subr.bf16.mxu0 0
      %2460 = vmatpush1.bf16.msra.mxu0 0
      %2461 = vmatprep.subr.bf16.mxu0 0
      %2462 = vmatpush1.bf16.msra.mxu0 0
      %2463 = vmatprep.subr.bf16.mxu0 0
      %2464 = vmatpush1.bf16.msra.mxu0 0
      %2465 = vmatprep.subr.bf16.mxu0 0
      %2466 = vmatpush1.bf16.msra.mxu0 0
      %2467 = vmatprep.subr.bf16.mxu0 0
      %2468 = vmatpush1.bf16.msra.mxu0 0
      %2469 = vmatprep.mubr.bf16.mxu0 0
      %2470 = vmatmul.mubr.bf16.gmra.mrb[0].mxu0 %v2435
      %v2471 = vpop.f32.mrb[0].mxu0
      %v2472 = vadd.f32 %v2409, %v2471
      %v2473 = vpop.f32.mrb[0].mxu0
      %v2474 = vpop.f32.mrb[0].mxu0
      %v2475 = vpop.f32.mrb[0].mxu0
      %2476 = vdwg.mxu0
      %vm2477 = vcmask 40960
      %2478 = vst.msk [vmem:[%s918] sm:$0x1] %vm2477, %v1569
      %vm2479 = vcmask 368640
      %2480 = vst.msk [vmem:[%s921] sm:$0x1] %vm2479, %v2472
      %p2481 = scmp.lt.s32.totalorder %s71, 1
      %s2482 = scalar_select %p2481, %s71, 1
      %s2483 = scalar_lea.vmem %s57, %s2482
      %p2484 = scmp.lt.s32.totalorder %s71, 1
      %s2485 = scalar_select %p2484, %s71, 1
      %s2486 = scalar_lea.vmem %s59, %s2485
      // Predicated region
      $region133: #{frustum_point_dan_full_forward.3} parent=131 // pred_check
        %p2487 = pneg %p687
      $region134: #{frustum_point_dan_full_forward.3} parent=131 // pred_check_branch
        %2489 = sbr.rel (%p2487) target = $region136
      $region135: #{frustum_point_dan_full_forward.3} parent=131 // pred_region
        _
      $region136: #{frustum_point_dan_full_forward.3} parent=131 // pred_fallthru
        _
      // Predicated region
      $region137: #{frustum_point_dan_full_forward.3} parent=131 // pred_check
        %p2490 = pneg %p713
      $region138: #{frustum_point_dan_full_forward.3} parent=131 // pred_check_branch
        %2492 = sbr.rel (%p2490) target = $region140
      $region139: #{frustum_point_dan_full_forward.3} parent=131 // pred_region
        _
      $region140: #{frustum_point_dan_full_forward.3} parent=131 // pred_fallthru
        _
    $region132: #{frustum_point_dan_full_forward.3} parent=5 // pred_fallthru
      _
    %p2493 = scmp.le.s32.totalorder 2, %s66
    // Predicated region
    $region141: #{frustum_point_dan_full_forward.3} parent=5 // pred_check
      %p2494 = pneg %p2493
    $region142: #{frustum_point_dan_full_forward.3} parent=5 // pred_check_branch
      %2496 = sbr.rel (%p2494) target = $region144
    $region143: #{frustum_point_dan_full_forward.3} parent=5 // pred_region
      %s2497 = ssub.s32 %s66, 2
      // Predicated region
      $region145: #{frustum_point_dan_full_forward.3} parent=143 // pred_check
        %p2498 = pneg %p693
      $region146: #{frustum_point_dan_full_forward.3} parent=143 // pred_check_branch
        %2500 = sbr.rel (%p2498) target = $region148
      $region147: #{frustum_point_dan_full_forward.3} parent=143 // pred_region
        %p2501 = scmp.lt.s32.totalorder %s72, 1
        %s2502 = scalar_select %p2501, %s72, 1
        %s2503 = scalar_lea.vmem %s57, %s2502
      $region148: #{frustum_point_dan_full_forward.3} parent=143 // pred_fallthru
        _
      // Predicated region
      $region149: #{frustum_point_dan_full_forward.3} parent=143 // pred_check
        %p2504 = pneg %p719
      $region150: #{frustum_point_dan_full_forward.3} parent=143 // pred_check_branch
        %2506 = sbr.rel (%p2504) target = $region152
      $region151: #{frustum_point_dan_full_forward.3} parent=143 // pred_region
        %p2507 = scmp.lt.s32.totalorder %s72, 1
        %s2508 = scalar_select %p2507, %s72, 1
        %s2509 = scalar_lea.vmem %s59, %s2508
      $region152: #{frustum_point_dan_full_forward.3} parent=143 // pred_fallthru
        _
    $region144: #{frustum_point_dan_full_forward.3} parent=5 // pred_fallthru
      _
  $region6: #{frustum_point_dan_full_forward.3} parent=0 // loop_footer
    %s70 = sadd.s32 1, %s66
  $region7: #{frustum_point_dan_full_forward.3} parent=0 // loop_footer_branch
    %65 = sbr.rel target = $region3
  $region8: #{frustum_point_dan_full_forward.3} parent=0 // loop_exit
    _

</llo_original>
